<compile_context>
chip_gen: v6e
topology: v6e:2x2x1
jax: 0.10.0
libtpu: 0.0.40
codegen_flags: <defaults>
</compile_context>

<pallas_src>
import functools

import jax
import jax.numpy as jnp
from jax.experimental import pallas as pl
from jax.experimental.pallas import tpu as pltpu


def _conv3x3_im2col(x, pad_ref, col_ref, w_ref, *, N, Hp, Wp, C):
    """3x3 'SAME' conv (pad 1, no bias) as a single im2col MXU matmul.

    x:       (N, Hp, Wp, C) float32 value (NHWC)
    pad_ref: (N, Hp+2, Wp+2, C) float32 VMEM scratch
    col_ref: (N, Hp, Wp, 9*C) float32 VMEM scratch (im2col LHS)
    w_ref:   (9*C, Cout) bfloat16 ref (HWIO weights reshaped in the wrapper)
    returns: (N*Hp*Wp, Cout) float32
    """
    f32 = jnp.float32
    # Zero only the one-pixel halo; the interior is written exactly once.
    pad_ref[:, 0:1, :, :] = jnp.zeros((N, 1, Wp + 2, C), f32)
    pad_ref[:, Hp + 1:Hp + 2, :, :] = jnp.zeros((N, 1, Wp + 2, C), f32)
    pad_ref[:, 1:Hp + 1, 0:1, :] = jnp.zeros((N, Hp, 1, C), f32)
    pad_ref[:, 1:Hp + 1, Wp + 1:Wp + 2, :] = jnp.zeros((N, Hp, 1, C), f32)
    pad_ref[:, 1:Hp + 1, 1:Wp + 1, :] = x

    # im2col: pack the 9 shifted taps along the channel axis in (kh, kw, c)
    # order, matching the (3,3,C,Cout) -> (9*C, Cout) weight reshape.
    for kh in range(3):
        for kw in range(3):
            t = kh * 3 + kw
            col_ref[:, :, :, t * C:(t + 1) * C] = \
                pad_ref[:, kh:kh + Hp, kw:kw + Wp, :]

    lhs = col_ref[...].reshape(N * Hp * Wp, 9 * C).astype(jnp.bfloat16)
    # One MXU matmul per conv (contraction depth 9*C), fp32 accumulation.
    return jnp.dot(lhs, w_ref[...], preferred_element_type=jnp.float32)


def _bn_relu(acc, g, b, *, m, eps=1e-5):
    """Training-mode BatchNorm (biased batch variance) + ReLU in one pass."""
    inv_m = 1.0 / float(m)
    mean = jnp.sum(acc, axis=0, keepdims=True) * inv_m
    ex2 = jnp.sum(acc * acc, axis=0, keepdims=True) * inv_m
    var = ex2 - mean * mean
    scale = g * jax.lax.rsqrt(var + eps)
    shift = b - mean * scale
    return jnp.maximum(acc * scale + shift, 0.0)


def down_kernel(x_ref, w1_ref, g1_ref, b1_ref, w2_ref, g2_ref, b2_ref,
                out_ref, pad1_ref, col1_ref, pad2_ref, col2_ref,
                *, N, Hp, Wp, Cin, Cmid, Cout):
    M = N * Hp * Wp

    # ---- MaxPool2d(2): the 2x2 window was space-to-depth packed onto the
    # lane axis by the wrapper, so pooling is three elementwise maxes. ----
    x4 = x_ref[...]                                           # (M, 4*Cin) f32
    pooled = jnp.maximum(
        jnp.maximum(x4[:, 0 * Cin:1 * Cin], x4[:, 1 * Cin:2 * Cin]),
        jnp.maximum(x4[:, 2 * Cin:3 * Cin], x4[:, 3 * Cin:4 * Cin]))
    pooled = pooled.reshape(N, Hp, Wp, Cin)

    # ---- Conv1 -> BN1 -> ReLU ----
    acc1 = _conv3x3_im2col(pooled, pad1_ref, col1_ref, w1_ref,
                           N=N, Hp=Hp, Wp=Wp, C=Cin)
    h = _bn_relu(acc1, g1_ref[...], b1_ref[...], m=M)         # (M, Cmid) f32

    # ---- Conv2 -> BN2 -> ReLU ----
    acc2 = _conv3x3_im2col(h.reshape(N, Hp, Wp, Cmid), pad2_ref, col2_ref,
                           w2_ref, N=N, Hp=Hp, Wp=Wp, C=Cmid)
    y = _bn_relu(acc2, g2_ref[...], b2_ref[...], m=M)         # (M, Cout) f32

    # ---- Lane-dense store: (Cout, M) puts the long spatial axis on lanes. ----
    out_ref[...] = y.T


def down_pallas(x_nchw, w1, g1, b1, w2, g2, b2):
    """x_nchw: (N, Cin, H, W) f32.  w1: (3,3,Cin,Cmid), w2: (3,3,Cmid,Cout) HWIO."""
    N, Cin, H, W = x_nchw.shape
    assert H % 2 == 0 and W % 2 == 0, "MaxPool2d(2) path assumes even H, W"
    Hp, Wp = H // 2, W // 2
    Cmid, Cout = w1.shape[-1], w2.shape[-1]
    M = N * Hp * Wp

    # Glue (XLA side): NCHW -> NHWC, space-to-depth the 2x2 pool window into
    # the channel/lane axis -> (M, 4*Cin).
    x_nhwc = jnp.transpose(x_nchw, (0, 2, 3, 1)).astype(jnp.float32)
    x_s2d = (x_nhwc.reshape(N, Hp, 2, Wp, 2, Cin)
             .transpose(0, 1, 3, 2, 4, 5)
             .reshape(M, 4 * Cin))

    # im2col weights: HWIO (3,3,Ci,Co) -> (9*Ci, Co), pre-cast to bf16 (MXU-native).
    w1_2d = w1.reshape(9 * Cin, Cmid).astype(jnp.bfloat16)
    w2_2d = w2.reshape(9 * Cmid, Cout).astype(jnp.bfloat16)
    g1r = g1.reshape(1, Cmid).astype(jnp.float32)
    b1r = b1.reshape(1, Cmid).astype(jnp.float32)
    g2r = g2.reshape(1, Cout).astype(jnp.float32)
    b2r = b2.reshape(1, Cout).astype(jnp.float32)

    kernel = functools.partial(down_kernel, N=N, Hp=Hp, Wp=Wp,
                               Cin=Cin, Cmid=Cmid, Cout=Cout)

    # NOTE: grid=(1,) is fine for these toy shapes.  For real UNet sizes the
    # grid should be tiled over spatial row blocks (1-row halo) and BN-safe
    # output-channel blocks (marked "parallel" for megacore / v7x), with bf16
    # scratches, to stay inside v7x's 64 MiB VMEM and enable pipelining.
    out_t = pl.pallas_call(
        kernel,
        out_shape=jax.ShapeDtypeStruct((Cout, M), jnp.float32),
        grid=(1,),
        in_specs=[
            pl.BlockSpec((M, 4 * Cin), lambda i: (0, 0)),
            pl.BlockSpec((9 * Cin, Cmid), lambda i: (0, 0)),
            pl.BlockSpec((1, Cmid), lambda i: (0, 0)),
            pl.BlockSpec((1, Cmid), lambda i: (0, 0)),
            pl.BlockSpec((9 * Cmid, Cout), lambda i: (0, 0)),
            pl.BlockSpec((1, Cout), lambda i: (0, 0)),
            pl.BlockSpec((1, Cout), lambda i: (0, 0)),
        ],
        out_specs=pl.BlockSpec((Cout, M), lambda i: (0, 0)),
        scratch_shapes=[
            pltpu.VMEM((N, Hp + 2, Wp + 2, Cin), jnp.float32),   # padded pool
            pltpu.VMEM((N, Hp, Wp, 9 * Cin), jnp.float32),       # im2col conv1
            pltpu.VMEM((N, Hp + 2, Wp + 2, Cmid), jnp.float32),  # padded conv1 out
            pltpu.VMEM((N, Hp, Wp, 9 * Cmid), jnp.float32),      # im2col conv2
        ],
        compiler_params=pltpu.CompilerParams(
            dimension_semantics=("arbitrary",),
            vmem_limit_bytes=32 * 1024 * 1024),
    )(x_s2d, w1_2d, g1r, b1r, w2_2d, g2r, b2r)

    # (Cout, N*Hp*Wp) -> NCHW.
    return out_t.reshape(Cout, N, Hp, Wp).transpose(1, 0, 2, 3)


def ref_down(x, w1, g1, b1, w2, g2, b2):
    """Pure-JAX fp32 reference (NCHW) mirroring PyTorch Down.forward semantics."""
    N, C, H, W = x.shape
    xp = jnp.max(x.reshape(N, C, H // 2, 2, W // 2, 2), axis=(3, 5))

    def conv_bn_relu(z, w, g, b):
        y = jax.lax.conv_general_dilated(
            z, w, window_strides=(1, 1), padding="SAME",
            dimension_numbers=("NCHW", "HWIO", "NCHW"))
        mean = jnp.mean(y, axis=(0, 2, 3), keepdims=True)
        var = jnp.mean((y - mean) ** 2, axis=(0, 2, 3), keepdims=True)
        y = (y - mean) * jax.lax.rsqrt(var + 1e-5)
        y = y * g.reshape(1, -1, 1, 1) + b.reshape(1, -1, 1, 1)
        return jnp.maximum(y, 0.0)

    return conv_bn_relu(conv_bn_relu(xp, w1, g1, b1), w2, g2, b2)


if __name__ == "__main__":
    # Down(in_channels=4, out_channels=8) on a (2, 4, 16, 16) input;
    # DoubleConv uses mid_channels = out_channels = 8.
    N, Cin, H, W = 2, 4, 16, 16
    Cmid = Cout = 8

    key = jax.random.PRNGKey(0)
    kx, kw1, kw2, kg1, kb1, kg2, kb2 = jax.random.split(key, 7)

    x = jax.random.normal(kx, (N, Cin, H, W), dtype=jnp.float32)
    # Synthetic deterministic weights, stored directly in HWIO (3,3,in,out).
    w1 = jax.random.normal(kw1, (3, 3, Cin, Cmid), dtype=jnp.float32) * 0.2
    w2 = jax.random.normal(kw2, (3, 3, Cmid, Cout), dtype=jnp.float32) * 0.2
    g1 = 1.0 + 0.1 * jax.random.normal(kg1, (Cmid,), dtype=jnp.float32)
    b1 = 0.1 * jax.random.normal(kb1, (Cmid,), dtype=jnp.float32)
    g2 = 1.0 + 0.1 * jax.random.normal(kg2, (Cout,), dtype=jnp.float32)
    b2 = 0.1 * jax.random.normal(kb2, (Cout,), dtype=jnp.float32)

    out = jax.block_until_ready(down_pallas(x, w1, g1, b1, w2, g2, b2))
    ref = jax.block_until_ready(ref_down(x, w1, g1, b1, w2, g2, b2))

    assert out.shape == (N, Cout, H // 2, W // 2), out.shape
    # bf16 MXU operands (fp32 accumulation) vs pure-fp32 reference -> looser tol.
    max_err = float(jnp.max(jnp.abs(out - ref)))
    assert jnp.allclose(out, ref, rtol=5e-2, atol=5e-2), max_err

    print("KERNEL_OK")
</pallas_src>

<mosaic_0001>
module attributes {stable_mosaic.version = 11 : i64} {
  func.func @down_kernel(%arg0: i32, %arg1: memref<128x16xf32, #tpu.memory_space<vmem>>, %arg2: memref<36x8xbf16, #tpu.memory_space<vmem>>, %arg3: memref<1x8xf32, #tpu.memory_space<vmem>>, %arg4: memref<1x8xf32, #tpu.memory_space<vmem>>, %arg5: memref<72x8xbf16, #tpu.memory_space<vmem>>, %arg6: memref<1x8xf32, #tpu.memory_space<vmem>>, %arg7: memref<1x8xf32, #tpu.memory_space<vmem>>, %arg8: memref<8x128xf32, #tpu.memory_space<vmem>>, %arg9: memref<2x10x10x4xf32, #tpu.memory_space<vmem>>, %arg10: memref<2x8x8x36xf32, #tpu.memory_space<vmem>>, %arg11: memref<2x10x10x8xf32, #tpu.memory_space<vmem>>, %arg12: memref<2x8x8x72xf32, #tpu.memory_space<vmem>>) attributes {dimension_semantics = [#tpu.dimension_semantics<arbitrary>], iteration_bounds = array<i64: 1>, scalar_prefetch = 0 : i64, scratch_operands = 4 : i64, tpu.core_type = #tpu.core_type<tc>, window_params = [{pipeline_mode = #tpu.pipeline_mode<synchronous>, transform_indices = @transform_0, window_bounds = array<i64: 128, 16>}, {pipeline_mode = #tpu.pipeline_mode<synchronous>, transform_indices = @transform_1, window_bounds = array<i64: 36, 8>}, {pipeline_mode = #tpu.pipeline_mode<synchronous>, transform_indices = @transform_2, window_bounds = array<i64: 1, 8>}, {pipeline_mode = #tpu.pipeline_mode<synchronous>, transform_indices = @transform_3, window_bounds = array<i64: 1, 8>}, {pipeline_mode = #tpu.pipeline_mode<synchronous>, transform_indices = @transform_4, window_bounds = array<i64: 72, 8>}, {pipeline_mode = #tpu.pipeline_mode<synchronous>, transform_indices = @transform_5, window_bounds = array<i64: 1, 8>}, {pipeline_mode = #tpu.pipeline_mode<synchronous>, transform_indices = @transform_6, window_bounds = array<i64: 1, 8>}, {pipeline_mode = #tpu.pipeline_mode<synchronous>, transform_indices = @transform_7, window_bounds = array<i64: 8, 128>}]} {
    %c0 = arith.constant 0 : index
    %c0_0 = arith.constant 0 : index
    %0 = vector.load %arg1[%c0, %c0_0] : memref<128x16xf32, #tpu.memory_space<vmem>>, vector<128x16xf32>
    %1 = vector.extract_strided_slice %0 {offsets = [0, 0], sizes = [128, 4], strides = [1, 1]} : vector<128x16xf32> to vector<128x4xf32>
    %2 = vector.extract_strided_slice %0 {offsets = [0, 4], sizes = [128, 4], strides = [1, 1]} : vector<128x16xf32> to vector<128x4xf32>
    %3 = arith.maximumf %1, %2 : vector<128x4xf32>
    %4 = vector.extract_strided_slice %0 {offsets = [0, 8], sizes = [128, 4], strides = [1, 1]} : vector<128x16xf32> to vector<128x4xf32>
    %5 = vector.extract_strided_slice %0 {offsets = [0, 12], sizes = [128, 4], strides = [1, 1]} : vector<128x16xf32> to vector<128x4xf32>
    %6 = arith.maximumf %4, %5 : vector<128x4xf32>
    %7 = arith.maximumf %3, %6 : vector<128x4xf32>
    %8 = vector.shape_cast %7 : vector<128x4xf32> to vector<2x8x8x4xf32>
    %cst = arith.constant 0.000000e+00 : f32
    %9 = vector.broadcast %cst : f32 to vector<2x1x10x4xf32>
    %c0_1 = arith.constant 0 : index
    %c0_2 = arith.constant 0 : index
    %c0_3 = arith.constant 0 : index
    %c0_4 = arith.constant 0 : index
    %10 = vector.load %arg9[%c0_1, %c0_2, %c0_3, %c0_4] : memref<2x10x10x4xf32, #tpu.memory_space<vmem>>, vector<2x1x10x4xf32>
    tpu.vector_store %arg9[%c0_1, %c0_2, %c0_3, %c0_4], %9 {strides = array<i32>} : memref<2x10x10x4xf32, #tpu.memory_space<vmem>>, vector<2x1x10x4xf32>,
    %cst_5 = arith.constant 0.000000e+00 : f32
    %11 = vector.broadcast %cst_5 : f32 to vector<2x1x10x4xf32>
    %c0_6 = arith.constant 0 : index
    %c9 = arith.constant 9 : index
    %c0_7 = arith.constant 0 : index
    %c0_8 = arith.constant 0 : index
    %12 = vector.load %arg9[%c0_6, %c9, %c0_7, %c0_8] : memref<2x10x10x4xf32, #tpu.memory_space<vmem>>, vector<2x1x10x4xf32>
    tpu.vector_store %arg9[%c0_6, %c9, %c0_7, %c0_8], %11 {strides = array<i32>} : memref<2x10x10x4xf32, #tpu.memory_space<vmem>>, vector<2x1x10x4xf32>,
    %cst_9 = arith.constant 0.000000e+00 : f32
    %13 = vector.broadcast %cst_9 : f32 to vector<2x8x1x4xf32>
    %c0_10 = arith.constant 0 : index
    %c1 = arith.constant 1 : index
    %c0_11 = arith.constant 0 : index
    %c0_12 = arith.constant 0 : index
    %14 = vector.load %arg9[%c0_10, %c1, %c0_11, %c0_12] : memref<2x10x10x4xf32, #tpu.memory_space<vmem>>, vector<2x8x1x4xf32>
    tpu.vector_store %arg9[%c0_10, %c1, %c0_11, %c0_12], %13 {strides = array<i32>} : memref<2x10x10x4xf32, #tpu.memory_space<vmem>>, vector<2x8x1x4xf32>,
    %cst_13 = arith.constant 0.000000e+00 : f32
    %15 = vector.broadcast %cst_13 : f32 to vector<2x8x1x4xf32>
    %c0_14 = arith.constant 0 : index
    %c1_15 = arith.constant 1 : index
    %c9_16 = arith.constant 9 : index
    %c0_17 = arith.constant 0 : index
    %16 = vector.load %arg9[%c0_14, %c1_15, %c9_16, %c0_17] : memref<2x10x10x4xf32, #tpu.memory_space<vmem>>, vector<2x8x1x4xf32>
    tpu.vector_store %arg9[%c0_14, %c1_15, %c9_16, %c0_17], %15 {strides = array<i32>} : memref<2x10x10x4xf32, #tpu.memory_space<vmem>>, vector<2x8x1x4xf32>,
    %c0_18 = arith.constant 0 : index
    %c1_19 = arith.constant 1 : index
    %c1_20 = arith.constant 1 : index
    %c0_21 = arith.constant 0 : index
    %17 = vector.load %arg9[%c0_18, %c1_19, %c1_20, %c0_21] : memref<2x10x10x4xf32, #tpu.memory_space<vmem>>, vector<2x8x8x4xf32>
    tpu.vector_store %arg9[%c0_18, %c1_19, %c1_20, %c0_21], %8 {strides = array<i32>} : memref<2x10x10x4xf32, #tpu.memory_space<vmem>>, vector<2x8x8x4xf32>,
    %c0_22 = arith.constant 0 : index
    %c0_23 = arith.constant 0 : index
    %c0_24 = arith.constant 0 : index
    %c0_25 = arith.constant 0 : index
    %18 = vector.load %arg9[%c0_22, %c0_23, %c0_24, %c0_25] : memref<2x10x10x4xf32, #tpu.memory_space<vmem>>, vector<2x8x8x4xf32>
    %c0_26 = arith.constant 0 : index
    %c0_27 = arith.constant 0 : index
    %c0_28 = arith.constant 0 : index
    %c0_29 = arith.constant 0 : index
    %19 = vector.load %arg10[%c0_26, %c0_27, %c0_28, %c0_29] : memref<2x8x8x36xf32, #tpu.memory_space<vmem>>, vector<2x8x8x4xf32>
    tpu.vector_store %arg10[%c0_26, %c0_27, %c0_28, %c0_29], %18 {strides = array<i32>} : memref<2x8x8x36xf32, #tpu.memory_space<vmem>>, vector<2x8x8x4xf32>,
    %c0_30 = arith.constant 0 : index
    %c0_31 = arith.constant 0 : index
    %c1_32 = arith.constant 1 : index
    %c0_33 = arith.constant 0 : index
    %20 = vector.load %arg9[%c0_30, %c0_31, %c1_32, %c0_33] : memref<2x10x10x4xf32, #tpu.memory_space<vmem>>, vector<2x8x8x4xf32>
    %c0_34 = arith.constant 0 : index
    %c0_35 = arith.constant 0 : index
    %c0_36 = arith.constant 0 : index
    %c4 = arith.constant 4 : index
    %21 = vector.load %arg10[%c0_34, %c0_35, %c0_36, %c4] : memref<2x8x8x36xf32, #tpu.memory_space<vmem>>, vector<2x8x8x4xf32>
    tpu.vector_store %arg10[%c0_34, %c0_35, %c0_36, %c4], %20 {strides = array<i32>} : memref<2x8x8x36xf32, #tpu.memory_space<vmem>>, vector<2x8x8x4xf32>,
    %c0_37 = arith.constant 0 : index
    %c0_38 = arith.constant 0 : index
    %c2 = arith.constant 2 : index
    %c0_39 = arith.constant 0 : index
    %22 = vector.load %arg9[%c0_37, %c0_38, %c2, %c0_39] : memref<2x10x10x4xf32, #tpu.memory_space<vmem>>, vector<2x8x8x4xf32>
    %c0_40 = arith.constant 0 : index
    %c0_41 = arith.constant 0 : index
    %c0_42 = arith.constant 0 : index
    %c8 = arith.constant 8 : index
    %23 = vector.load %arg10[%c0_40, %c0_41, %c0_42, %c8] : memref<2x8x8x36xf32, #tpu.memory_space<vmem>>, vector<2x8x8x4xf32>
    tpu.vector_store %arg10[%c0_40, %c0_41, %c0_42, %c8], %22 {strides = array<i32>} : memref<2x8x8x36xf32, #tpu.memory_space<vmem>>, vector<2x8x8x4xf32>,
    %c0_43 = arith.constant 0 : index
    %c1_44 = arith.constant 1 : index
    %c0_45 = arith.constant 0 : index
    %c0_46 = arith.constant 0 : index
    %24 = vector.load %arg9[%c0_43, %c1_44, %c0_45, %c0_46] : memref<2x10x10x4xf32, #tpu.memory_space<vmem>>, vector<2x8x8x4xf32>
    %c0_47 = arith.constant 0 : index
    %c0_48 = arith.constant 0 : index
    %c0_49 = arith.constant 0 : index
    %c12 = arith.constant 12 : index
    %25 = vector.load %arg10[%c0_47, %c0_48, %c0_49, %c12] : memref<2x8x8x36xf32, #tpu.memory_space<vmem>>, vector<2x8x8x4xf32>
    tpu.vector_store %arg10[%c0_47, %c0_48, %c0_49, %c12], %24 {strides = array<i32>} : memref<2x8x8x36xf32, #tpu.memory_space<vmem>>, vector<2x8x8x4xf32>,
    %c0_50 = arith.constant 0 : index
    %c1_51 = arith.constant 1 : index
    %c1_52 = arith.constant 1 : index
    %c0_53 = arith.constant 0 : index
    %26 = vector.load %arg9[%c0_50, %c1_51, %c1_52, %c0_53] : memref<2x10x10x4xf32, #tpu.memory_space<vmem>>, vector<2x8x8x4xf32>
    %c0_54 = arith.constant 0 : index
    %c0_55 = arith.constant 0 : index
    %c0_56 = arith.constant 0 : index
    %c16 = arith.constant 16 : index
    %27 = vector.load %arg10[%c0_54, %c0_55, %c0_56, %c16] : memref<2x8x8x36xf32, #tpu.memory_space<vmem>>, vector<2x8x8x4xf32>
    tpu.vector_store %arg10[%c0_54, %c0_55, %c0_56, %c16], %26 {strides = array<i32>} : memref<2x8x8x36xf32, #tpu.memory_space<vmem>>, vector<2x8x8x4xf32>,
    %c0_57 = arith.constant 0 : index
    %c1_58 = arith.constant 1 : index
    %c2_59 = arith.constant 2 : index
    %c0_60 = arith.constant 0 : index
    %28 = vector.load %arg9[%c0_57, %c1_58, %c2_59, %c0_60] : memref<2x10x10x4xf32, #tpu.memory_space<vmem>>, vector<2x8x8x4xf32>
    %c0_61 = arith.constant 0 : index
    %c0_62 = arith.constant 0 : index
    %c0_63 = arith.constant 0 : index
    %c20 = arith.constant 20 : index
    %29 = vector.load %arg10[%c0_61, %c0_62, %c0_63, %c20] : memref<2x8x8x36xf32, #tpu.memory_space<vmem>>, vector<2x8x8x4xf32>
    tpu.vector_store %arg10[%c0_61, %c0_62, %c0_63, %c20], %28 {strides = array<i32>} : memref<2x8x8x36xf32, #tpu.memory_space<vmem>>, vector<2x8x8x4xf32>,
    %c0_64 = arith.constant 0 : index
    %c2_65 = arith.constant 2 : index
    %c0_66 = arith.constant 0 : index
    %c0_67 = arith.constant 0 : index
    %30 = vector.load %arg9[%c0_64, %c2_65, %c0_66, %c0_67] : memref<2x10x10x4xf32, #tpu.memory_space<vmem>>, vector<2x8x8x4xf32>
    %c0_68 = arith.constant 0 : index
    %c0_69 = arith.constant 0 : index
    %c0_70 = arith.constant 0 : index
    %c24 = arith.constant 24 : index
    %31 = vector.load %arg10[%c0_68, %c0_69, %c0_70, %c24] : memref<2x8x8x36xf32, #tpu.memory_space<vmem>>, vector<2x8x8x4xf32>
    tpu.vector_store %arg10[%c0_68, %c0_69, %c0_70, %c24], %30 {strides = array<i32>} : memref<2x8x8x36xf32, #tpu.memory_space<vmem>>, vector<2x8x8x4xf32>,
    %c0_71 = arith.constant 0 : index
    %c2_72 = arith.constant 2 : index
    %c1_73 = arith.constant 1 : index
    %c0_74 = arith.constant 0 : index
    %32 = vector.load %arg9[%c0_71, %c2_72, %c1_73, %c0_74] : memref<2x10x10x4xf32, #tpu.memory_space<vmem>>, vector<2x8x8x4xf32>
    %c0_75 = arith.constant 0 : index
    %c0_76 = arith.constant 0 : index
    %c0_77 = arith.constant 0 : index
    %c28 = arith.constant 28 : index
    %33 = vector.load %arg10[%c0_75, %c0_76, %c0_77, %c28] : memref<2x8x8x36xf32, #tpu.memory_space<vmem>>, vector<2x8x8x4xf32>
    tpu.vector_store %arg10[%c0_75, %c0_76, %c0_77, %c28], %32 {strides = array<i32>} : memref<2x8x8x36xf32, #tpu.memory_space<vmem>>, vector<2x8x8x4xf32>,
    %c0_78 = arith.constant 0 : index
    %c2_79 = arith.constant 2 : index
    %c2_80 = arith.constant 2 : index
    %c0_81 = arith.constant 0 : index
    %34 = vector.load %arg9[%c0_78, %c2_79, %c2_80, %c0_81] : memref<2x10x10x4xf32, #tpu.memory_space<vmem>>, vector<2x8x8x4xf32>
    %c0_82 = arith.constant 0 : index
    %c0_83 = arith.constant 0 : index
    %c0_84 = arith.constant 0 : index
    %c32 = arith.constant 32 : index
    %35 = vector.load %arg10[%c0_82, %c0_83, %c0_84, %c32] : memref<2x8x8x36xf32, #tpu.memory_space<vmem>>, vector<2x8x8x4xf32>
    tpu.vector_store %arg10[%c0_82, %c0_83, %c0_84, %c32], %34 {strides = array<i32>} : memref<2x8x8x36xf32, #tpu.memory_space<vmem>>, vector<2x8x8x4xf32>,
    %c0_85 = arith.constant 0 : index
    %c0_86 = arith.constant 0 : index
    %c0_87 = arith.constant 0 : index
    %c0_88 = arith.constant 0 : index
    %36 = vector.load %arg10[%c0_85, %c0_86, %c0_87, %c0_88] : memref<2x8x8x36xf32, #tpu.memory_space<vmem>>, vector<2x8x8x36xf32>
    %37 = vector.shape_cast %36 : vector<2x8x8x36xf32> to vector<128x36xf32>
    %38 = arith.truncf %37 : vector<128x36xf32> to vector<128x36xbf16>
    %c0_89 = arith.constant 0 : index
    %c0_90 = arith.constant 0 : index
    %39 = vector.load %arg2[%c0_89, %c0_90] : memref<36x8xbf16, #tpu.memory_space<vmem>>, vector<36x8xbf16>
    %cst_91 = arith.constant dense<0.000000e+00> : vector<128x8xf32>
    %40 = tpu.matmul %38, %39, %cst_91 {dimension_numbers = #tpu.dot_dimension_numbers<[1], [0], [0], [1], [0, 0, 1, 1], [], []>} : vector<128x36xbf16>, vector<36x8xbf16>, vector<128x8xf32> -> vector<128x8xf32>
    %c0_92 = arith.constant 0 : index
    %c0_93 = arith.constant 0 : index
    %41 = vector.load %arg3[%c0_92, %c0_93] : memref<1x8xf32, #tpu.memory_space<vmem>>, vector<1x8xf32>
    %c0_94 = arith.constant 0 : index
    %c0_95 = arith.constant 0 : index
    %42 = vector.load %arg4[%c0_94, %c0_95] : memref<1x8xf32, #tpu.memory_space<vmem>>, vector<1x8xf32>
    %cst_96 = arith.constant dense<0.000000e+00> : vector<8xf32>
    %43 = vector.multi_reduction <add>, %40, %cst_96 [0] : vector<128x8xf32> to vector<8xf32>
    %44 = vector.shape_cast %43 : vector<8xf32> to vector<1x8xf32>
    %cst_97 = arith.constant 7.812500e-03 : f32
    %45 = vector.broadcast %cst_97 : f32 to vector<1x8xf32>
    %46 = arith.mulf %44, %45 : vector<1x8xf32>
    %47 = arith.mulf %40, %40 : vector<128x8xf32>
    %cst_98 = arith.constant dense<0.000000e+00> : vector<8xf32>
    %48 = vector.multi_reduction <add>, %47, %cst_98 [0] : vector<128x8xf32> to vector<8xf32>
    %49 = vector.shape_cast %48 : vector<8xf32> to vector<1x8xf32>
    %cst_99 = arith.constant 7.812500e-03 : f32
    %50 = vector.broadcast %cst_99 : f32 to vector<1x8xf32>
    %51 = arith.mulf %49, %50 : vector<1x8xf32>
    %52 = arith.mulf %46, %46 : vector<1x8xf32>
    %53 = arith.subf %51, %52 : vector<1x8xf32>
    %cst_100 = arith.constant 9.99999974E-6 : f32
    %54 = vector.broadcast %cst_100 : f32 to vector<1x8xf32>
    %55 = arith.addf %53, %54 : vector<1x8xf32>
    %56 = math.rsqrt %55 : vector<1x8xf32>
    %57 = arith.mulf %41, %56 : vector<1x8xf32>
    %58 = arith.mulf %46, %57 : vector<1x8xf32>
    %59 = arith.subf %42, %58 : vector<1x8xf32>
    %60 = vector.broadcast %57 : vector<1x8xf32> to vector<128x8xf32>
    %61 = arith.mulf %40, %60 : vector<128x8xf32>
    %62 = vector.broadcast %59 : vector<1x8xf32> to vector<128x8xf32>
    %63 = arith.addf %61, %62 : vector<128x8xf32>
    %cst_101 = arith.constant 0.000000e+00 : f32
    %64 = vector.broadcast %cst_101 : f32 to vector<128x8xf32>
    %65 = arith.maximumf %63, %64 : vector<128x8xf32>
    %66 = vector.shape_cast %65 : vector<128x8xf32> to vector<2x8x8x8xf32>
    %cst_102 = arith.constant 0.000000e+00 : f32
    %67 = vector.broadcast %cst_102 : f32 to vector<2x1x10x8xf32>
    %c0_103 = arith.constant 0 : index
    %c0_104 = arith.constant 0 : index
    %c0_105 = arith.constant 0 : index
    %c0_106 = arith.constant 0 : index
    %68 = vector.load %arg11[%c0_103, %c0_104, %c0_105, %c0_106] : memref<2x10x10x8xf32, #tpu.memory_space<vmem>>, vector<2x1x10x8xf32>
    tpu.vector_store %arg11[%c0_103, %c0_104, %c0_105, %c0_106], %67 {strides = array<i32>} : memref<2x10x10x8xf32, #tpu.memory_space<vmem>>, vector<2x1x10x8xf32>,
    %cst_107 = arith.constant 0.000000e+00 : f32
    %69 = vector.broadcast %cst_107 : f32 to vector<2x1x10x8xf32>
    %c0_108 = arith.constant 0 : index
    %c9_109 = arith.constant 9 : index
    %c0_110 = arith.constant 0 : index
    %c0_111 = arith.constant 0 : index
    %70 = vector.load %arg11[%c0_108, %c9_109, %c0_110, %c0_111] : memref<2x10x10x8xf32, #tpu.memory_space<vmem>>, vector<2x1x10x8xf32>
    tpu.vector_store %arg11[%c0_108, %c9_109, %c0_110, %c0_111], %69 {strides = array<i32>} : memref<2x10x10x8xf32, #tpu.memory_space<vmem>>, vector<2x1x10x8xf32>,
    %cst_112 = arith.constant 0.000000e+00 : f32
    %71 = vector.broadcast %cst_112 : f32 to vector<2x8x1x8xf32>
    %c0_113 = arith.constant 0 : index
    %c1_114 = arith.constant 1 : index
    %c0_115 = arith.constant 0 : index
    %c0_116 = arith.constant 0 : index
    %72 = vector.load %arg11[%c0_113, %c1_114, %c0_115, %c0_116] : memref<2x10x10x8xf32, #tpu.memory_space<vmem>>, vector<2x8x1x8xf32>
    tpu.vector_store %arg11[%c0_113, %c1_114, %c0_115, %c0_116], %71 {strides = array<i32>} : memref<2x10x10x8xf32, #tpu.memory_space<vmem>>, vector<2x8x1x8xf32>,
    %cst_117 = arith.constant 0.000000e+00 : f32
    %73 = vector.broadcast %cst_117 : f32 to vector<2x8x1x8xf32>
    %c0_118 = arith.constant 0 : index
    %c1_119 = arith.constant 1 : index
    %c9_120 = arith.constant 9 : index
    %c0_121 = arith.constant 0 : index
    %74 = vector.load %arg11[%c0_118, %c1_119, %c9_120, %c0_121] : memref<2x10x10x8xf32, #tpu.memory_space<vmem>>, vector<2x8x1x8xf32>
    tpu.vector_store %arg11[%c0_118, %c1_119, %c9_120, %c0_121], %73 {strides = array<i32>} : memref<2x10x10x8xf32, #tpu.memory_space<vmem>>, vector<2x8x1x8xf32>,
    %c0_122 = arith.constant 0 : index
    %c1_123 = arith.constant 1 : index
    %c1_124 = arith.constant 1 : index
    %c0_125 = arith.constant 0 : index
    %75 = vector.load %arg11[%c0_122, %c1_123, %c1_124, %c0_125] : memref<2x10x10x8xf32, #tpu.memory_space<vmem>>, vector<2x8x8x8xf32>
    tpu.vector_store %arg11[%c0_122, %c1_123, %c1_124, %c0_125], %66 {strides = array<i32>} : memref<2x10x10x8xf32, #tpu.memory_space<vmem>>, vector<2x8x8x8xf32>,
    %c0_126 = arith.constant 0 : index
    %c0_127 = arith.constant 0 : index
    %c0_128 = arith.constant 0 : index
    %c0_129 = arith.constant 0 : index
    %76 = vector.load %arg11[%c0_126, %c0_127, %c0_128, %c0_129] : memref<2x10x10x8xf32, #tpu.memory_space<vmem>>, vector<2x8x8x8xf32>
    %c0_130 = arith.constant 0 : index
    %c0_131 = arith.constant 0 : index
    %c0_132 = arith.constant 0 : index
    %c0_133 = arith.constant 0 : index
    %77 = vector.load %arg12[%c0_130, %c0_131, %c0_132, %c0_133] : memref<2x8x8x72xf32, #tpu.memory_space<vmem>>, vector<2x8x8x8xf32>
    tpu.vector_store %arg12[%c0_130, %c0_131, %c0_132, %c0_133], %76 {strides = array<i32>} : memref<2x8x8x72xf32, #tpu.memory_space<vmem>>, vector<2x8x8x8xf32>,
    %c0_134 = arith.constant 0 : index
    %c0_135 = arith.constant 0 : index
    %c1_136 = arith.constant 1 : index
    %c0_137 = arith.constant 0 : index
    %78 = vector.load %arg11[%c0_134, %c0_135, %c1_136, %c0_137] : memref<2x10x10x8xf32, #tpu.memory_space<vmem>>, vector<2x8x8x8xf32>
    %c0_138 = arith.constant 0 : index
    %c0_139 = arith.constant 0 : index
    %c0_140 = arith.constant 0 : index
    %c8_141 = arith.constant 8 : index
    %79 = vector.load %arg12[%c0_138, %c0_139, %c0_140, %c8_141] : memref<2x8x8x72xf32, #tpu.memory_space<vmem>>, vector<2x8x8x8xf32>
    tpu.vector_store %arg12[%c0_138, %c0_139, %c0_140, %c8_141], %78 {strides = array<i32>} : memref<2x8x8x72xf32, #tpu.memory_space<vmem>>, vector<2x8x8x8xf32>,
    %c0_142 = arith.constant 0 : index
    %c0_143 = arith.constant 0 : index
    %c2_144 = arith.constant 2 : index
    %c0_145 = arith.constant 0 : index
    %80 = vector.load %arg11[%c0_142, %c0_143, %c2_144, %c0_145] : memref<2x10x10x8xf32, #tpu.memory_space<vmem>>, vector<2x8x8x8xf32>
    %c0_146 = arith.constant 0 : index
    %c0_147 = arith.constant 0 : index
    %c0_148 = arith.constant 0 : index
    %c16_149 = arith.constant 16 : index
    %81 = vector.load %arg12[%c0_146, %c0_147, %c0_148, %c16_149] : memref<2x8x8x72xf32, #tpu.memory_space<vmem>>, vector<2x8x8x8xf32>
    tpu.vector_store %arg12[%c0_146, %c0_147, %c0_148, %c16_149], %80 {strides = array<i32>} : memref<2x8x8x72xf32, #tpu.memory_space<vmem>>, vector<2x8x8x8xf32>,
    %c0_150 = arith.constant 0 : index
    %c1_151 = arith.constant 1 : index
    %c0_152 = arith.constant 0 : index
    %c0_153 = arith.constant 0 : index
    %82 = vector.load %arg11[%c0_150, %c1_151, %c0_152, %c0_153] : memref<2x10x10x8xf32, #tpu.memory_space<vmem>>, vector<2x8x8x8xf32>
    %c0_154 = arith.constant 0 : index
    %c0_155 = arith.constant 0 : index
    %c0_156 = arith.constant 0 : index
    %c24_157 = arith.constant 24 : index
    %83 = vector.load %arg12[%c0_154, %c0_155, %c0_156, %c24_157] : memref<2x8x8x72xf32, #tpu.memory_space<vmem>>, vector<2x8x8x8xf32>
    tpu.vector_store %arg12[%c0_154, %c0_155, %c0_156, %c24_157], %82 {strides = array<i32>} : memref<2x8x8x72xf32, #tpu.memory_space<vmem>>, vector<2x8x8x8xf32>,
    %c0_158 = arith.constant 0 : index
    %c1_159 = arith.constant 1 : index
    %c1_160 = arith.constant 1 : index
    %c0_161 = arith.constant 0 : index
    %84 = vector.load %arg11[%c0_158, %c1_159, %c1_160, %c0_161] : memref<2x10x10x8xf32, #tpu.memory_space<vmem>>, vector<2x8x8x8xf32>
    %c0_162 = arith.constant 0 : index
    %c0_163 = arith.constant 0 : index
    %c0_164 = arith.constant 0 : index
    %c32_165 = arith.constant 32 : index
    %85 = vector.load %arg12[%c0_162, %c0_163, %c0_164, %c32_165] : memref<2x8x8x72xf32, #tpu.memory_space<vmem>>, vector<2x8x8x8xf32>
    tpu.vector_store %arg12[%c0_162, %c0_163, %c0_164, %c32_165], %84 {strides = array<i32>} : memref<2x8x8x72xf32, #tpu.memory_space<vmem>>, vector<2x8x8x8xf32>,
    %c0_166 = arith.constant 0 : index
    %c1_167 = arith.constant 1 : index
    %c2_168 = arith.constant 2 : index
    %c0_169 = arith.constant 0 : index
    %86 = vector.load %arg11[%c0_166, %c1_167, %c2_168, %c0_169] : memref<2x10x10x8xf32, #tpu.memory_space<vmem>>, vector<2x8x8x8xf32>
    %c0_170 = arith.constant 0 : index
    %c0_171 = arith.constant 0 : index
    %c0_172 = arith.constant 0 : index
    %c40 = arith.constant 40 : index
    %87 = vector.load %arg12[%c0_170, %c0_171, %c0_172, %c40] : memref<2x8x8x72xf32, #tpu.memory_space<vmem>>, vector<2x8x8x8xf32>
    tpu.vector_store %arg12[%c0_170, %c0_171, %c0_172, %c40], %86 {strides = array<i32>} : memref<2x8x8x72xf32, #tpu.memory_space<vmem>>, vector<2x8x8x8xf32>,
    %c0_173 = arith.constant 0 : index
    %c2_174 = arith.constant 2 : index
    %c0_175 = arith.constant 0 : index
    %c0_176 = arith.constant 0 : index
    %88 = vector.load %arg11[%c0_173, %c2_174, %c0_175, %c0_176] : memref<2x10x10x8xf32, #tpu.memory_space<vmem>>, vector<2x8x8x8xf32>
    %c0_177 = arith.constant 0 : index
    %c0_178 = arith.constant 0 : index
    %c0_179 = arith.constant 0 : index
    %c48 = arith.constant 48 : index
    %89 = vector.load %arg12[%c0_177, %c0_178, %c0_179, %c48] : memref<2x8x8x72xf32, #tpu.memory_space<vmem>>, vector<2x8x8x8xf32>
    tpu.vector_store %arg12[%c0_177, %c0_178, %c0_179, %c48], %88 {strides = array<i32>} : memref<2x8x8x72xf32, #tpu.memory_space<vmem>>, vector<2x8x8x8xf32>,
    %c0_180 = arith.constant 0 : index
    %c2_181 = arith.constant 2 : index
    %c1_182 = arith.constant 1 : index
    %c0_183 = arith.constant 0 : index
    %90 = vector.load %arg11[%c0_180, %c2_181, %c1_182, %c0_183] : memref<2x10x10x8xf32, #tpu.memory_space<vmem>>, vector<2x8x8x8xf32>
    %c0_184 = arith.constant 0 : index
    %c0_185 = arith.constant 0 : index
    %c0_186 = arith.constant 0 : index
    %c56 = arith.constant 56 : index
    %91 = vector.load %arg12[%c0_184, %c0_185, %c0_186, %c56] : memref<2x8x8x72xf32, #tpu.memory_space<vmem>>, vector<2x8x8x8xf32>
    tpu.vector_store %arg12[%c0_184, %c0_185, %c0_186, %c56], %90 {strides = array<i32>} : memref<2x8x8x72xf32, #tpu.memory_space<vmem>>, vector<2x8x8x8xf32>,
    %c0_187 = arith.constant 0 : index
    %c2_188 = arith.constant 2 : index
    %c2_189 = arith.constant 2 : index
    %c0_190 = arith.constant 0 : index
    %92 = vector.load %arg11[%c0_187, %c2_188, %c2_189, %c0_190] : memref<2x10x10x8xf32, #tpu.memory_space<vmem>>, vector<2x8x8x8xf32>
    %c0_191 = arith.constant 0 : index
    %c0_192 = arith.constant 0 : index
    %c0_193 = arith.constant 0 : index
    %c64 = arith.constant 64 : index
    %93 = vector.load %arg12[%c0_191, %c0_192, %c0_193, %c64] : memref<2x8x8x72xf32, #tpu.memory_space<vmem>>, vector<2x8x8x8xf32>
    tpu.vector_store %arg12[%c0_191, %c0_192, %c0_193, %c64], %92 {strides = array<i32>} : memref<2x8x8x72xf32, #tpu.memory_space<vmem>>, vector<2x8x8x8xf32>,
    %c0_194 = arith.constant 0 : index
    %c0_195 = arith.constant 0 : index
    %c0_196 = arith.constant 0 : index
    %c0_197 = arith.constant 0 : index
    %94 = vector.load %arg12[%c0_194, %c0_195, %c0_196, %c0_197] : memref<2x8x8x72xf32, #tpu.memory_space<vmem>>, vector<2x8x8x72xf32>
    %95 = vector.shape_cast %94 : vector<2x8x8x72xf32> to vector<128x72xf32>
    %96 = arith.truncf %95 : vector<128x72xf32> to vector<128x72xbf16>
    %c0_198 = arith.constant 0 : index
    %c0_199 = arith.constant 0 : index
    %97 = vector.load %arg5[%c0_198, %c0_199] : memref<72x8xbf16, #tpu.memory_space<vmem>>, vector<72x8xbf16>
    %cst_200 = arith.constant dense<0.000000e+00> : vector<128x8xf32>
    %98 = tpu.matmul %96, %97, %cst_200 {dimension_numbers = #tpu.dot_dimension_numbers<[1], [0], [0], [1], [0, 0, 1, 1], [], []>} : vector<128x72xbf16>, vector<72x8xbf16>, vector<128x8xf32> -> vector<128x8xf32>
    %c0_201 = arith.constant 0 : index
    %c0_202 = arith.constant 0 : index
    %99 = vector.load %arg6[%c0_201, %c0_202] : memref<1x8xf32, #tpu.memory_space<vmem>>, vector<1x8xf32>
    %c0_203 = arith.constant 0 : index
    %c0_204 = arith.constant 0 : index
    %100 = vector.load %arg7[%c0_203, %c0_204] : memref<1x8xf32, #tpu.memory_space<vmem>>, vector<1x8xf32>
    %cst_205 = arith.constant dense<0.000000e+00> : vector<8xf32>
    %101 = vector.multi_reduction <add>, %98, %cst_205 [0] : vector<128x8xf32> to vector<8xf32>
    %102 = vector.shape_cast %101 : vector<8xf32> to vector<1x8xf32>
    %cst_206 = arith.constant 7.812500e-03 : f32
    %103 = vector.broadcast %cst_206 : f32 to vector<1x8xf32>
    %104 = arith.mulf %102, %103 : vector<1x8xf32>
    %105 = arith.mulf %98, %98 : vector<128x8xf32>
    %cst_207 = arith.constant dense<0.000000e+00> : vector<8xf32>
    %106 = vector.multi_reduction <add>, %105, %cst_207 [0] : vector<128x8xf32> to vector<8xf32>
    %107 = vector.shape_cast %106 : vector<8xf32> to vector<1x8xf32>
    %cst_208 = arith.constant 7.812500e-03 : f32
    %108 = vector.broadcast %cst_208 : f32 to vector<1x8xf32>
    %109 = arith.mulf %107, %108 : vector<1x8xf32>
    %110 = arith.mulf %104, %104 : vector<1x8xf32>
    %111 = arith.subf %109, %110 : vector<1x8xf32>
    %cst_209 = arith.constant 9.99999974E-6 : f32
    %112 = vector.broadcast %cst_209 : f32 to vector<1x8xf32>
    %113 = arith.addf %111, %112 : vector<1x8xf32>
    %114 = math.rsqrt %113 : vector<1x8xf32>
    %115 = arith.mulf %99, %114 : vector<1x8xf32>
    %116 = arith.mulf %104, %115 : vector<1x8xf32>
    %117 = arith.subf %100, %116 : vector<1x8xf32>
    %118 = vector.broadcast %115 : vector<1x8xf32> to vector<128x8xf32>
    %119 = arith.mulf %98, %118 : vector<128x8xf32>
    %120 = vector.broadcast %117 : vector<1x8xf32> to vector<128x8xf32>
    %121 = arith.addf %119, %120 : vector<128x8xf32>
    %cst_210 = arith.constant 0.000000e+00 : f32
    %122 = vector.broadcast %cst_210 : f32 to vector<128x8xf32>
    %123 = arith.maximumf %121, %122 : vector<128x8xf32>
    %124 = tpu.transpose %123, [1, 0] : vector<128x8xf32> -> vector<8x128xf32>
    %c0_211 = arith.constant 0 : index
    %c0_212 = arith.constant 0 : index
    %125 = vector.load %arg8[%c0_211, %c0_212] : memref<8x128xf32, #tpu.memory_space<vmem>>, vector<8x128xf32>
    tpu.vector_store %arg8[%c0_211, %c0_212], %124 {strides = array<i32>} : memref<8x128xf32, #tpu.memory_space<vmem>>, vector<8x128xf32>,
    return
  }
  func.func @transform_0(%arg0: i32) -> (i32, i32) {
    %c0_i32 = arith.constant 0 : i32
    %c0_i32_0 = arith.constant 0 : i32
    %c0_i32_1 = arith.constant 0 : i32
    return %c0_i32, %c0_i32_0 : i32, i32
  }
  func.func @transform_1(%arg0: i32) -> (i32, i32) {
    %c0_i32 = arith.constant 0 : i32
    %c0_i32_0 = arith.constant 0 : i32
    %c0_i32_1 = arith.constant 0 : i32
    return %c0_i32, %c0_i32_0 : i32, i32
  }
  func.func @transform_2(%arg0: i32) -> (i32, i32) {
    %c0_i32 = arith.constant 0 : i32
    %c0_i32_0 = arith.constant 0 : i32
    %c0_i32_1 = arith.constant 0 : i32
    return %c0_i32, %c0_i32_0 : i32, i32
  }
  func.func @transform_3(%arg0: i32) -> (i32, i32) {
    %c0_i32 = arith.constant 0 : i32
    %c0_i32_0 = arith.constant 0 : i32
    %c0_i32_1 = arith.constant 0 : i32
    return %c0_i32, %c0_i32_0 : i32, i32
  }
  func.func @transform_4(%arg0: i32) -> (i32, i32) {
    %c0_i32 = arith.constant 0 : i32
    %c0_i32_0 = arith.constant 0 : i32
    %c0_i32_1 = arith.constant 0 : i32
    return %c0_i32, %c0_i32_0 : i32, i32
  }
  func.func @transform_5(%arg0: i32) -> (i32, i32) {
    %c0_i32 = arith.constant 0 : i32
    %c0_i32_0 = arith.constant 0 : i32
    %c0_i32_1 = arith.constant 0 : i32
    return %c0_i32, %c0_i32_0 : i32, i32
  }
  func.func @transform_6(%arg0: i32) -> (i32, i32) {
    %c0_i32 = arith.constant 0 : i32
    %c0_i32_0 = arith.constant 0 : i32
    %c0_i32_1 = arith.constant 0 : i32
    return %c0_i32, %c0_i32_0 : i32, i32
  }
  func.func @transform_7(%arg0: i32) -> (i32, i32) {
    %c0_i32 = arith.constant 0 : i32
    %c0_i32_0 = arith.constant 0 : i32
    %c0_i32_1 = arith.constant 0 : i32
    return %c0_i32, %c0_i32_0 : i32, i32
  }
}

</mosaic_0001>

<llo_original>
// kernel: tpu_custom_call.1
$region0: #{tpu_custom_call.1}
  #allocation0 [shape = 'u32[]', space=smem, size = 0x4, offset = 0x4, fixed_abs, tag = 'smem constant byte address 0x4 - core index']
  #allocation1 [shape = 'u32[144,128]{1,0:T(1,128)}', space=vmem, size = 0x12000, scoped, tag = 'internal scratch']
  #allocation2 [shape = 'f32[2,10,10,4]{3,2,1,0:T(8,128)}', space=vmem, size = 0x28000, scoped, tag = 'scratch operand']
  #allocation3 [shape = 'f32[2,8,8,36]{3,2,1,0:T(8,128)}', space=vmem, size = 0x10000, scoped, tag = 'scratch operand']
  #allocation4 [shape = 'f32[2,10,10,8]{3,2,1,0:T(8,128)}', space=vmem, size = 0x28000, scoped, tag = 'scratch operand']
  #allocation5 [shape = 'f32[2,8,8,72]{3,2,1,0:T(8,128)}', space=vmem, size = 0x10000, scoped, tag = 'scratch operand']
  %s0 = inlined_call_operand.vmem [shape: f32[128,16], index: 0, kind: input, shape index: {}]
  %s1 = inlined_call_operand.vmem [shape: bf16[36,8], index: 1, kind: input, shape index: {}]
  %s2 = inlined_call_operand.vmem [shape: f32[1,8], index: 2, kind: input, shape index: {}]
  %s3 = inlined_call_operand.vmem [shape: f32[1,8], index: 3, kind: input, shape index: {}]
  %s4 = inlined_call_operand.vmem [shape: bf16[72,8], index: 4, kind: input, shape index: {}]
  %s5 = inlined_call_operand.vmem [shape: f32[1,8], index: 5, kind: input, shape index: {}]
  %s6 = inlined_call_operand.vmem [shape: f32[1,8], index: 6, kind: input, shape index: {}]
  %s7 = inlined_call_operand.hbm [shape: f32[8,128], index: 7, kind: output, shape index: {}]
  %s8 = sld [smem:[#allocation0]]
  $region38: #{tpu_custom_call.1} parent=0
    _
  %s10 = ssub.s32 1, %s8
  %s11 = scalar_select 0, %s10, %s8
  $region1: #{tpu_custom_call.1} parent=0
    #allocation6 [shape = 'u8[4096]{0}', space=vmem, size = 0x1000, scoped, tag = 'output window, operand 0, single buffered']
    #allocation7 [shape = 's32[1]{0}', space=sflag, size = 0x4, scoped, tag = 'scoped memory for tpu_custom_call.1']
    %12 = vsyncpa [#allocation7], 0
    // Predicated region
    $region2: #{tpu_custom_call.1} parent=1 // pred_check
      _
    $region3: #{tpu_custom_call.1} parent=1 // pred_check_branch
      %14 = sbr.rel (0) target = $region5
    $region4: #{tpu_custom_call.1} parent=1 // pred_region
      _
    $region5: #{tpu_custom_call.1} parent=1 // pred_fallthru
      _
    // Predicated region
    $region6: #{tpu_custom_call.1} parent=1 // pred_check
      _
    $region7: #{tpu_custom_call.1} parent=1 // pred_check_branch
      %16 = sbr.rel (0) target = $region9
    $region8: #{tpu_custom_call.1} parent=1 // pred_region
      _
    $region9: #{tpu_custom_call.1} parent=1 // pred_fallthru
      _
    // Predicated region
    $region10: #{tpu_custom_call.1} parent=1 // pred_check
      _
    $region11: #{tpu_custom_call.1} parent=1 // pred_check_branch
      %18 = sbr.rel (0) target = $region13
    $region12: #{tpu_custom_call.1} parent=1 // pred_region
      _
    $region13: #{tpu_custom_call.1} parent=1 // pred_fallthru
      _
    // Predicated region
    $region14: #{tpu_custom_call.1} parent=1 // pred_check
      _
    $region15: #{tpu_custom_call.1} parent=1 // pred_check_branch
      %20 = sbr.rel (0) target = $region17
    $region16: #{tpu_custom_call.1} parent=1 // pred_region
      _
    $region17: #{tpu_custom_call.1} parent=1 // pred_fallthru
      _
    // Predicated region
    $region18: #{tpu_custom_call.1} parent=1 // pred_check
      _
    $region19: #{tpu_custom_call.1} parent=1 // pred_check_branch
      %22 = sbr.rel (0) target = $region21
    $region20: #{tpu_custom_call.1} parent=1 // pred_region
      _
    $region21: #{tpu_custom_call.1} parent=1 // pred_fallthru
      _
    // Predicated region
    $region22: #{tpu_custom_call.1} parent=1 // pred_check
      _
    $region23: #{tpu_custom_call.1} parent=1 // pred_check_branch
      %24 = sbr.rel (0) target = $region25
    $region24: #{tpu_custom_call.1} parent=1 // pred_region
      _
    $region25: #{tpu_custom_call.1} parent=1 // pred_fallthru
      _
    // Predicated region
    $region26: #{tpu_custom_call.1} parent=1 // pred_check
      _
    $region27: #{tpu_custom_call.1} parent=1 // pred_check_branch
      %26 = sbr.rel (0) target = $region29
    $region28: #{tpu_custom_call.1} parent=1 // pred_region
      _
    $region29: #{tpu_custom_call.1} parent=1 // pred_fallthru
      _
    %v28 = vld [vmem:[%s0] sm:$0xff]
    %v29 = vld [vmem:[%s0 + $0x8] sm:$0xff]
    %v30 = vld [vmem:[%s0 + $0x10] sm:$0xff]
    %v31 = vld [vmem:[%s0 + $0x18] sm:$0xff]
    %v32 = vld [vmem:[%s0 + $0x20] sm:$0xff]
    %v33 = vld [vmem:[%s0 + $0x28] sm:$0xff]
    %v34 = vld [vmem:[%s0 + $0x30] sm:$0xff]
    %v35 = vld [vmem:[%s0 + $0x38] sm:$0xff]
    %v36 = vld [vmem:[%s0 + $0x40] sm:$0xff]
    %v37 = vld [vmem:[%s0 + $0x48] sm:$0xff]
    %v38 = vld [vmem:[%s0 + $0x50] sm:$0xff]
    %v39 = vld [vmem:[%s0 + $0x58] sm:$0xff]
    %v40 = vld [vmem:[%s0 + $0x60] sm:$0xff]
    %v41 = vld [vmem:[%s0 + $0x68] sm:$0xff]
    %v42 = vld [vmem:[%s0 + $0x70] sm:$0xff]
    %v43 = vld [vmem:[%s0 + $0x78] sm:$0xff]
    %60 = vrot.lane.b32.xlu0 %v28, 124
    %v61 = vpop.permute.xlu0 %60
    %62 = vrot.lane.b32.xlu0 %v29, 124
    %v63 = vpop.permute.xlu0 %62
    %64 = vrot.lane.b32.xlu0 %v30, 124
    %v65 = vpop.permute.xlu0 %64
    %66 = vrot.lane.b32.xlu0 %v31, 124
    %v67 = vpop.permute.xlu0 %66
    %68 = vrot.lane.b32.xlu0 %v32, 124
    %v69 = vpop.permute.xlu0 %68
    %70 = vrot.lane.b32.xlu0 %v33, 124
    %v71 = vpop.permute.xlu0 %70
    %72 = vrot.lane.b32.xlu0 %v34, 124
    %v73 = vpop.permute.xlu0 %72
    %74 = vrot.lane.b32.xlu0 %v35, 124
    %v75 = vpop.permute.xlu0 %74
    %76 = vrot.lane.b32.xlu0 %v36, 124
    %v77 = vpop.permute.xlu0 %76
    %78 = vrot.lane.b32.xlu0 %v37, 124
    %v79 = vpop.permute.xlu0 %78
    %80 = vrot.lane.b32.xlu0 %v38, 124
    %v81 = vpop.permute.xlu0 %80
    %82 = vrot.lane.b32.xlu0 %v39, 124
    %v83 = vpop.permute.xlu0 %82
    %84 = vrot.lane.b32.xlu0 %v40, 124
    %v85 = vpop.permute.xlu0 %84
    %86 = vrot.lane.b32.xlu0 %v41, 124
    %v87 = vpop.permute.xlu0 %86
    %88 = vrot.lane.b32.xlu0 %v42, 124
    %v89 = vpop.permute.xlu0 %88
    %90 = vrot.lane.b32.xlu0 %v43, 124
    %v91 = vpop.permute.xlu0 %90
    %v108 = vmax.f32 %v28, %v61
    %v109 = vmax.f32 %v29, %v63
    %v110 = vmax.f32 %v30, %v65
    %v111 = vmax.f32 %v31, %v67
    %v112 = vmax.f32 %v32, %v69
    %v113 = vmax.f32 %v33, %v71
    %v114 = vmax.f32 %v34, %v73
    %v115 = vmax.f32 %v35, %v75
    %v116 = vmax.f32 %v36, %v77
    %v117 = vmax.f32 %v37, %v79
    %v118 = vmax.f32 %v38, %v81
    %v119 = vmax.f32 %v39, %v83
    %v120 = vmax.f32 %v40, %v85
    %v121 = vmax.f32 %v41, %v87
    %v122 = vmax.f32 %v42, %v89
    %v123 = vmax.f32 %v43, %v91
    %140 = vrot.lane.b32.xlu0 %v108, 120
    %v141 = vpop.permute.xlu0 %140
    %142 = vrot.lane.b32.xlu0 %v109, 120
    %v143 = vpop.permute.xlu0 %142
    %144 = vrot.lane.b32.xlu0 %v110, 120
    %v145 = vpop.permute.xlu0 %144
    %146 = vrot.lane.b32.xlu0 %v111, 120
    %v147 = vpop.permute.xlu0 %146
    %148 = vrot.lane.b32.xlu0 %v112, 120
    %v149 = vpop.permute.xlu0 %148
    %150 = vrot.lane.b32.xlu0 %v113, 120
    %v151 = vpop.permute.xlu0 %150
    %152 = vrot.lane.b32.xlu0 %v114, 120
    %v153 = vpop.permute.xlu0 %152
    %154 = vrot.lane.b32.xlu0 %v115, 120
    %v155 = vpop.permute.xlu0 %154
    %156 = vrot.lane.b32.xlu0 %v116, 120
    %v157 = vpop.permute.xlu0 %156
    %158 = vrot.lane.b32.xlu0 %v117, 120
    %v159 = vpop.permute.xlu0 %158
    %160 = vrot.lane.b32.xlu0 %v118, 120
    %v161 = vpop.permute.xlu0 %160
    %162 = vrot.lane.b32.xlu0 %v119, 120
    %v163 = vpop.permute.xlu0 %162
    %164 = vrot.lane.b32.xlu0 %v120, 120
    %v165 = vpop.permute.xlu0 %164
    %166 = vrot.lane.b32.xlu0 %v121, 120
    %v167 = vpop.permute.xlu0 %166
    %168 = vrot.lane.b32.xlu0 %v122, 120
    %v169 = vpop.permute.xlu0 %168
    %170 = vrot.lane.b32.xlu0 %v123, 120
    %v171 = vpop.permute.xlu0 %170
    %v188 = vmax.f32 %v108, %v141
    %v189 = vmax.f32 %v109, %v143
    %v190 = vmax.f32 %v110, %v145
    %v191 = vmax.f32 %v111, %v147
    %v192 = vmax.f32 %v112, %v149
    %v193 = vmax.f32 %v113, %v151
    %v194 = vmax.f32 %v114, %v153
    %v195 = vmax.f32 %v115, %v155
    %v196 = vmax.f32 %v116, %v157
    %v197 = vmax.f32 %v117, %v159
    %v198 = vmax.f32 %v118, %v161
    %v199 = vmax.f32 %v119, %v163
    %v200 = vmax.f32 %v120, %v165
    %v201 = vmax.f32 %v121, %v167
    %v202 = vmax.f32 %v122, %v169
    %v203 = vmax.f32 %v123, %v171
    %vm204 = vcmask 31744
    %205 = vst.msk [vmem:[#allocation2] sm:$0xff] %vm204, 0.0
    %vm206 = vcmask 25600
    %207 = vst.msk [vmem:[#allocation2 + $0x8] sm:$0x3] %vm206, 0.0
    %208 = vst.msk [vmem:[#allocation2 + $0xa0] sm:$0xff] %vm204, 0.0
    %209 = vst.msk [vmem:[#allocation2 + $0xa8] sm:$0x3] %vm206, 0.0
    %s210 = scalar_lea.vmem [#allocation2], 144
    %211 = vst.msk [vmem:[%s210] sm:$0xff] %vm204, 0.0
    %212 = vst.msk [vmem:[%s210 + $0x8] sm:$0x3] %vm206, 0.0
    %213 = vst.msk [vmem:[%s210 + $0xa0] sm:$0xff] %vm204, 0.0
    %214 = vst.msk [vmem:[%s210 + $0xa8] sm:$0x3] %vm206, 0.0
    %s215 = scalar_lea.vmem [#allocation2], 16
    %vm216 = vcmask 24576
    %217 = vst.msk [vmem:[%s215] sm:$0x1] %vm216, 0.0
    %218 = vst.msk [vmem:[%s215 + $0x10] sm:$0x1] %vm216, 0.0
    %219 = vst.msk [vmem:[%s215 + $0x20] sm:$0x1] %vm216, 0.0
    %220 = vst.msk [vmem:[%s215 + $0x30] sm:$0x1] %vm216, 0.0
    %221 = vst.msk [vmem:[%s215 + $0x40] sm:$0x1] %vm216, 0.0
    %222 = vst.msk [vmem:[%s215 + $0x50] sm:$0x1] %vm216, 0.0
    %223 = vst.msk [vmem:[%s215 + $0x60] sm:$0x1] %vm216, 0.0
    %224 = vst.msk [vmem:[%s215 + $0x70] sm:$0x1] %vm216, 0.0
    %225 = vst.msk [vmem:[%s215 + $0xa0] sm:$0x1] %vm216, 0.0
    %226 = vst.msk [vmem:[%s215 + $0xb0] sm:$0x1] %vm216, 0.0
    %227 = vst.msk [vmem:[%s215 + $0xc0] sm:$0x1] %vm216, 0.0
    %228 = vst.msk [vmem:[%s215 + $0xd0] sm:$0x1] %vm216, 0.0
    %229 = vst.msk [vmem:[%s215 + $0xe0] sm:$0x1] %vm216, 0.0
    %230 = vst.msk [vmem:[%s215 + $0xf0] sm:$0x1] %vm216, 0.0
    %231 = vst.msk [vmem:[%s215 + $0x100] sm:$0x1] %vm216, 0.0
    %232 = vst.msk [vmem:[%s215 + $0x110] sm:$0x1] %vm216, 0.0
    %233 = vst.msk [vmem:[%s215 + $0x9] sm:$0x1] %vm216, 0.0
    %234 = vst.msk [vmem:[%s215 + $0x19] sm:$0x1] %vm216, 0.0
    %235 = vst.msk [vmem:[%s215 + $0x29] sm:$0x1] %vm216, 0.0
    %236 = vst.msk [vmem:[%s215 + $0x39] sm:$0x1] %vm216, 0.0
    %237 = vst.msk [vmem:[%s215 + $0x49] sm:$0x1] %vm216, 0.0
    %238 = vst.msk [vmem:[%s215 + $0x59] sm:$0x1] %vm216, 0.0
    %239 = vst.msk [vmem:[%s215 + $0x69] sm:$0x1] %vm216, 0.0
    %240 = vst.msk [vmem:[%s215 + $0x79] sm:$0x1] %vm216, 0.0
    %241 = vst.msk [vmem:[%s215 + $0xa9] sm:$0x1] %vm216, 0.0
    %242 = vst.msk [vmem:[%s215 + $0xb9] sm:$0x1] %vm216, 0.0
    %243 = vst.msk [vmem:[%s215 + $0xc9] sm:$0x1] %vm216, 0.0
    %244 = vst.msk [vmem:[%s215 + $0xd9] sm:$0x1] %vm216, 0.0
    %245 = vst.msk [vmem:[%s215 + $0xe9] sm:$0x1] %vm216, 0.0
    %246 = vst.msk [vmem:[%s215 + $0xf9] sm:$0x1] %vm216, 0.0
    %247 = vst.msk [vmem:[%s215 + $0x109] sm:$0x1] %vm216, 0.0
    %248 = vst.msk [vmem:[%s215 + $0x119] sm:$0x1] %vm216, 0.0
    %249 = vst.msk [vmem:[%s215 + $0x1] sm:$0xff] %vm204, %v188
    %250 = vst.msk [vmem:[%s215 + $0x11] sm:$0xff] %vm204, %v189
    %251 = vst.msk [vmem:[%s215 + $0x21] sm:$0xff] %vm204, %v190
    %252 = vst.msk [vmem:[%s215 + $0x31] sm:$0xff] %vm204, %v191
    %253 = vst.msk [vmem:[%s215 + $0x41] sm:$0xff] %vm204, %v192
    %254 = vst.msk [vmem:[%s215 + $0x51] sm:$0xff] %vm204, %v193
    %255 = vst.msk [vmem:[%s215 + $0x61] sm:$0xff] %vm204, %v194
    %256 = vst.msk [vmem:[%s215 + $0x71] sm:$0xff] %vm204, %v195
    %257 = vst.msk [vmem:[%s215 + $0xa1] sm:$0xff] %vm204, %v196
    %258 = vst.msk [vmem:[%s215 + $0xb1] sm:$0xff] %vm204, %v197
    %259 = vst.msk [vmem:[%s215 + $0xc1] sm:$0xff] %vm204, %v198
    %260 = vst.msk [vmem:[%s215 + $0xd1] sm:$0xff] %vm204, %v199
    %261 = vst.msk [vmem:[%s215 + $0xe1] sm:$0xff] %vm204, %v200
    %262 = vst.msk [vmem:[%s215 + $0xf1] sm:$0xff] %vm204, %v201
    %263 = vst.msk [vmem:[%s215 + $0x101] sm:$0xff] %vm204, %v202
    %264 = vst.msk [vmem:[%s215 + $0x111] sm:$0xff] %vm204, %v203
    %v265 = vld [vmem:[#allocation2] sm:$0xff]
    %v266 = vld [vmem:[#allocation2 + $0x10] sm:$0xff]
    %v267 = vld [vmem:[#allocation2 + $0x20] sm:$0xff]
    %v268 = vld [vmem:[#allocation2 + $0x30] sm:$0xff]
    %v269 = vld [vmem:[#allocation2 + $0x40] sm:$0xff]
    %v270 = vld [vmem:[#allocation2 + $0x50] sm:$0xff]
    %v271 = vld [vmem:[#allocation2 + $0x60] sm:$0xff]
    %v272 = vld [vmem:[#allocation2 + $0x70] sm:$0xff]
    %v273 = vld [vmem:[#allocation2 + $0xa0] sm:$0xff]
    %v274 = vld [vmem:[#allocation2 + $0xb0] sm:$0xff]
    %v275 = vld [vmem:[#allocation2 + $0xc0] sm:$0xff]
    %v276 = vld [vmem:[#allocation2 + $0xd0] sm:$0xff]
    %v277 = vld [vmem:[#allocation2 + $0xe0] sm:$0xff]
    %v278 = vld [vmem:[#allocation2 + $0xf0] sm:$0xff]
    %v279 = vld [vmem:[#allocation2 + $0x100] sm:$0xff]
    %v280 = vld [vmem:[#allocation2 + $0x110] sm:$0xff]
    %281 = vst.msk [vmem:[#allocation3] sm:$0xff] %vm204, %v265
    %282 = vst.msk [vmem:[#allocation3 + $0x8] sm:$0xff] %vm204, %v266
    %283 = vst.msk [vmem:[#allocation3 + $0x10] sm:$0xff] %vm204, %v267
    %284 = vst.msk [vmem:[#allocation3 + $0x18] sm:$0xff] %vm204, %v268
    %285 = vst.msk [vmem:[#allocation3 + $0x20] sm:$0xff] %vm204, %v269
    %286 = vst.msk [vmem:[#allocation3 + $0x28] sm:$0xff] %vm204, %v270
    %287 = vst.msk [vmem:[#allocation3 + $0x30] sm:$0xff] %vm204, %v271
    %288 = vst.msk [vmem:[#allocation3 + $0x38] sm:$0xff] %vm204, %v272
    %289 = vst.msk [vmem:[#allocation3 + $0x40] sm:$0xff] %vm204, %v273
    %290 = vst.msk [vmem:[#allocation3 + $0x48] sm:$0xff] %vm204, %v274
    %291 = vst.msk [vmem:[#allocation3 + $0x50] sm:$0xff] %vm204, %v275
    %292 = vst.msk [vmem:[#allocation3 + $0x58] sm:$0xff] %vm204, %v276
    %293 = vst.msk [vmem:[#allocation3 + $0x60] sm:$0xff] %vm204, %v277
    %294 = vst.msk [vmem:[#allocation3 + $0x68] sm:$0xff] %vm204, %v278
    %295 = vst.msk [vmem:[#allocation3 + $0x70] sm:$0xff] %vm204, %v279
    %296 = vst.msk [vmem:[#allocation3 + $0x78] sm:$0xff] %vm204, %v280
    %v297 = vld [vmem:[#allocation2 + $0x1] sm:$0xff]
    %v298 = vld [vmem:[#allocation2 + $0x11] sm:$0xff]
    %v299 = vld [vmem:[#allocation2 + $0x21] sm:$0xff]
    %v300 = vld [vmem:[#allocation2 + $0x31] sm:$0xff]
    %v301 = vld [vmem:[#allocation2 + $0x41] sm:$0xff]
    %v302 = vld [vmem:[#allocation2 + $0x51] sm:$0xff]
    %v303 = vld [vmem:[#allocation2 + $0x61] sm:$0xff]
    %v304 = vld [vmem:[#allocation2 + $0x71] sm:$0xff]
    %v305 = vld [vmem:[#allocation2 + $0xa1] sm:$0xff]
    %v306 = vld [vmem:[#allocation2 + $0xb1] sm:$0xff]
    %v307 = vld [vmem:[#allocation2 + $0xc1] sm:$0xff]
    %v308 = vld [vmem:[#allocation2 + $0xd1] sm:$0xff]
    %v309 = vld [vmem:[#allocation2 + $0xe1] sm:$0xff]
    %v310 = vld [vmem:[#allocation2 + $0xf1] sm:$0xff]
    %v311 = vld [vmem:[#allocation2 + $0x101] sm:$0xff]
    %v312 = vld [vmem:[#allocation2 + $0x111] sm:$0xff]
    %329 = vrot.lane.b32.xlu0 %v297, 4
    %v330 = vpop.permute.xlu0 %329
    %331 = vrot.lane.b32.xlu0 %v298, 4
    %v332 = vpop.permute.xlu0 %331
    %333 = vrot.lane.b32.xlu0 %v299, 4
    %v334 = vpop.permute.xlu0 %333
    %335 = vrot.lane.b32.xlu0 %v300, 4
    %v336 = vpop.permute.xlu0 %335
    %337 = vrot.lane.b32.xlu0 %v301, 4
    %v338 = vpop.permute.xlu0 %337
    %339 = vrot.lane.b32.xlu0 %v302, 4
    %v340 = vpop.permute.xlu0 %339
    %341 = vrot.lane.b32.xlu0 %v303, 4
    %v342 = vpop.permute.xlu0 %341
    %343 = vrot.lane.b32.xlu0 %v304, 4
    %v344 = vpop.permute.xlu0 %343
    %345 = vrot.lane.b32.xlu0 %v305, 4
    %v346 = vpop.permute.xlu0 %345
    %347 = vrot.lane.b32.xlu0 %v306, 4
    %v348 = vpop.permute.xlu0 %347
    %349 = vrot.lane.b32.xlu0 %v307, 4
    %v350 = vpop.permute.xlu0 %349
    %351 = vrot.lane.b32.xlu0 %v308, 4
    %v352 = vpop.permute.xlu0 %351
    %353 = vrot.lane.b32.xlu0 %v309, 4
    %v354 = vpop.permute.xlu0 %353
    %355 = vrot.lane.b32.xlu0 %v310, 4
    %v356 = vpop.permute.xlu0 %355
    %357 = vrot.lane.b32.xlu0 %v311, 4
    %v358 = vpop.permute.xlu0 %357
    %359 = vrot.lane.b32.xlu0 %v312, 4
    %v360 = vpop.permute.xlu0 %359
    %vm377 = vcmask 64544
    %378 = vst.msk [vmem:[#allocation3] sm:$0xff] %vm377, %v330
    %379 = vst.msk [vmem:[#allocation3 + $0x8] sm:$0xff] %vm377, %v332
    %380 = vst.msk [vmem:[#allocation3 + $0x10] sm:$0xff] %vm377, %v334
    %381 = vst.msk [vmem:[#allocation3 + $0x18] sm:$0xff] %vm377, %v336
    %382 = vst.msk [vmem:[#allocation3 + $0x20] sm:$0xff] %vm377, %v338
    %383 = vst.msk [vmem:[#allocation3 + $0x28] sm:$0xff] %vm377, %v340
    %384 = vst.msk [vmem:[#allocation3 + $0x30] sm:$0xff] %vm377, %v342
    %385 = vst.msk [vmem:[#allocation3 + $0x38] sm:$0xff] %vm377, %v344
    %386 = vst.msk [vmem:[#allocation3 + $0x40] sm:$0xff] %vm377, %v346
    %387 = vst.msk [vmem:[#allocation3 + $0x48] sm:$0xff] %vm377, %v348
    %388 = vst.msk [vmem:[#allocation3 + $0x50] sm:$0xff] %vm377, %v350
    %389 = vst.msk [vmem:[#allocation3 + $0x58] sm:$0xff] %vm377, %v352
    %390 = vst.msk [vmem:[#allocation3 + $0x60] sm:$0xff] %vm377, %v354
    %391 = vst.msk [vmem:[#allocation3 + $0x68] sm:$0xff] %vm377, %v356
    %392 = vst.msk [vmem:[#allocation3 + $0x70] sm:$0xff] %vm377, %v358
    %393 = vst.msk [vmem:[#allocation3 + $0x78] sm:$0xff] %vm377, %v360
    %v394 = vld [vmem:[#allocation2 + $0x2] sm:$0xff]
    %v395 = vld [vmem:[#allocation2 + $0x12] sm:$0xff]
    %v396 = vld [vmem:[#allocation2 + $0x22] sm:$0xff]
    %v397 = vld [vmem:[#allocation2 + $0x32] sm:$0xff]
    %v398 = vld [vmem:[#allocation2 + $0x42] sm:$0xff]
    %v399 = vld [vmem:[#allocation2 + $0x52] sm:$0xff]
    %v400 = vld [vmem:[#allocation2 + $0x62] sm:$0xff]
    %v401 = vld [vmem:[#allocation2 + $0x72] sm:$0xff]
    %v402 = vld [vmem:[#allocation2 + $0xa2] sm:$0xff]
    %v403 = vld [vmem:[#allocation2 + $0xb2] sm:$0xff]
    %v404 = vld [vmem:[#allocation2 + $0xc2] sm:$0xff]
    %v405 = vld [vmem:[#allocation2 + $0xd2] sm:$0xff]
    %v406 = vld [vmem:[#allocation2 + $0xe2] sm:$0xff]
    %v407 = vld [vmem:[#allocation2 + $0xf2] sm:$0xff]
    %v408 = vld [vmem:[#allocation2 + $0x102] sm:$0xff]
    %v409 = vld [vmem:[#allocation2 + $0x112] sm:$0xff]
    %426 = vrot.lane.b32.xlu0 %v394, 8
    %v427 = vpop.permute.xlu0 %426
    %428 = vrot.lane.b32.xlu0 %v395, 8
    %v429 = vpop.permute.xlu0 %428
    %430 = vrot.lane.b32.xlu0 %v396, 8
    %v431 = vpop.permute.xlu0 %430
    %432 = vrot.lane.b32.xlu0 %v397, 8
    %v433 = vpop.permute.xlu0 %432
    %434 = vrot.lane.b32.xlu0 %v398, 8
    %v435 = vpop.permute.xlu0 %434
    %436 = vrot.lane.b32.xlu0 %v399, 8
    %v437 = vpop.permute.xlu0 %436
    %438 = vrot.lane.b32.xlu0 %v400, 8
    %v439 = vpop.permute.xlu0 %438
    %440 = vrot.lane.b32.xlu0 %v401, 8
    %v441 = vpop.permute.xlu0 %440
    %442 = vrot.lane.b32.xlu0 %v402, 8
    %v443 = vpop.permute.xlu0 %442
    %444 = vrot.lane.b32.xlu0 %v403, 8
    %v445 = vpop.permute.xlu0 %444
    %446 = vrot.lane.b32.xlu0 %v404, 8
    %v447 = vpop.permute.xlu0 %446
    %448 = vrot.lane.b32.xlu0 %v405, 8
    %v449 = vpop.permute.xlu0 %448
    %450 = vrot.lane.b32.xlu0 %v406, 8
    %v451 = vpop.permute.xlu0 %450
    %452 = vrot.lane.b32.xlu0 %v407, 8
    %v453 = vpop.permute.xlu0 %452
    %454 = vrot.lane.b32.xlu0 %v408, 8
    %v455 = vpop.permute.xlu0 %454
    %456 = vrot.lane.b32.xlu0 %v409, 8
    %v457 = vpop.permute.xlu0 %456
    %vm474 = vcmask 97344
    %475 = vst.msk [vmem:[#allocation3] sm:$0xff] %vm474, %v427
    %476 = vst.msk [vmem:[#allocation3 + $0x8] sm:$0xff] %vm474, %v429
    %477 = vst.msk [vmem:[#allocation3 + $0x10] sm:$0xff] %vm474, %v431
    %478 = vst.msk [vmem:[#allocation3 + $0x18] sm:$0xff] %vm474, %v433
    %479 = vst.msk [vmem:[#allocation3 + $0x20] sm:$0xff] %vm474, %v435
    %480 = vst.msk [vmem:[#allocation3 + $0x28] sm:$0xff] %vm474, %v437
    %481 = vst.msk [vmem:[#allocation3 + $0x30] sm:$0xff] %vm474, %v439
    %482 = vst.msk [vmem:[#allocation3 + $0x38] sm:$0xff] %vm474, %v441
    %483 = vst.msk [vmem:[#allocation3 + $0x40] sm:$0xff] %vm474, %v443
    %484 = vst.msk [vmem:[#allocation3 + $0x48] sm:$0xff] %vm474, %v445
    %485 = vst.msk [vmem:[#allocation3 + $0x50] sm:$0xff] %vm474, %v447
    %486 = vst.msk [vmem:[#allocation3 + $0x58] sm:$0xff] %vm474, %v449
    %487 = vst.msk [vmem:[#allocation3 + $0x60] sm:$0xff] %vm474, %v451
    %488 = vst.msk [vmem:[#allocation3 + $0x68] sm:$0xff] %vm474, %v453
    %489 = vst.msk [vmem:[#allocation3 + $0x70] sm:$0xff] %vm474, %v455
    %490 = vst.msk [vmem:[#allocation3 + $0x78] sm:$0xff] %vm474, %v457
    %v491 = vld [vmem:[%s215] sm:$0xff]
    %v492 = vld [vmem:[%s215 + $0x10] sm:$0xff]
    %v493 = vld [vmem:[%s215 + $0x20] sm:$0xff]
    %v494 = vld [vmem:[%s215 + $0x30] sm:$0xff]
    %v495 = vld [vmem:[%s215 + $0x40] sm:$0xff]
    %v496 = vld [vmem:[%s215 + $0x50] sm:$0xff]
    %v497 = vld [vmem:[%s215 + $0x60] sm:$0xff]
    %v498 = vld [vmem:[%s215 + $0x70] sm:$0xff]
    %v499 = vld [vmem:[%s215 + $0xa0] sm:$0xff]
    %v500 = vld [vmem:[%s215 + $0xb0] sm:$0xff]
    %v501 = vld [vmem:[%s215 + $0xc0] sm:$0xff]
    %v502 = vld [vmem:[%s215 + $0xd0] sm:$0xff]
    %v503 = vld [vmem:[%s215 + $0xe0] sm:$0xff]
    %v504 = vld [vmem:[%s215 + $0xf0] sm:$0xff]
    %v505 = vld [vmem:[%s215 + $0x100] sm:$0xff]
    %v506 = vld [vmem:[%s215 + $0x110] sm:$0xff]
    %523 = vrot.lane.b32.xlu0 %v491, 12
    %v524 = vpop.permute.xlu0 %523
    %525 = vrot.lane.b32.xlu0 %v492, 12
    %v526 = vpop.permute.xlu0 %525
    %527 = vrot.lane.b32.xlu0 %v493, 12
    %v528 = vpop.permute.xlu0 %527
    %529 = vrot.lane.b32.xlu0 %v494, 12
    %v530 = vpop.permute.xlu0 %529
    %531 = vrot.lane.b32.xlu0 %v495, 12
    %v532 = vpop.permute.xlu0 %531
    %533 = vrot.lane.b32.xlu0 %v496, 12
    %v534 = vpop.permute.xlu0 %533
    %535 = vrot.lane.b32.xlu0 %v497, 12
    %v536 = vpop.permute.xlu0 %535
    %537 = vrot.lane.b32.xlu0 %v498, 12
    %v538 = vpop.permute.xlu0 %537
    %539 = vrot.lane.b32.xlu0 %v499, 12
    %v540 = vpop.permute.xlu0 %539
    %541 = vrot.lane.b32.xlu0 %v500, 12
    %v542 = vpop.permute.xlu0 %541
    %543 = vrot.lane.b32.xlu0 %v501, 12
    %v544 = vpop.permute.xlu0 %543
    %545 = vrot.lane.b32.xlu0 %v502, 12
    %v546 = vpop.permute.xlu0 %545
    %547 = vrot.lane.b32.xlu0 %v503, 12
    %v548 = vpop.permute.xlu0 %547
    %549 = vrot.lane.b32.xlu0 %v504, 12
    %v550 = vpop.permute.xlu0 %549
    %551 = vrot.lane.b32.xlu0 %v505, 12
    %v552 = vpop.permute.xlu0 %551
    %553 = vrot.lane.b32.xlu0 %v506, 12
    %v554 = vpop.permute.xlu0 %553
    %vm571 = vcmask 130144
    %572 = vst.msk [vmem:[#allocation3] sm:$0xff] %vm571, %v524
    %573 = vst.msk [vmem:[#allocation3 + $0x8] sm:$0xff] %vm571, %v526
    %574 = vst.msk [vmem:[#allocation3 + $0x10] sm:$0xff] %vm571, %v528
    %575 = vst.msk [vmem:[#allocation3 + $0x18] sm:$0xff] %vm571, %v530
    %576 = vst.msk [vmem:[#allocation3 + $0x20] sm:$0xff] %vm571, %v532
    %577 = vst.msk [vmem:[#allocation3 + $0x28] sm:$0xff] %vm571, %v534
    %578 = vst.msk [vmem:[#allocation3 + $0x30] sm:$0xff] %vm571, %v536
    %579 = vst.msk [vmem:[#allocation3 + $0x38] sm:$0xff] %vm571, %v538
    %580 = vst.msk [vmem:[#allocation3 + $0x40] sm:$0xff] %vm571, %v540
    %581 = vst.msk [vmem:[#allocation3 + $0x48] sm:$0xff] %vm571, %v542
    %582 = vst.msk [vmem:[#allocation3 + $0x50] sm:$0xff] %vm571, %v544
    %583 = vst.msk [vmem:[#allocation3 + $0x58] sm:$0xff] %vm571, %v546
    %584 = vst.msk [vmem:[#allocation3 + $0x60] sm:$0xff] %vm571, %v548
    %585 = vst.msk [vmem:[#allocation3 + $0x68] sm:$0xff] %vm571, %v550
    %586 = vst.msk [vmem:[#allocation3 + $0x70] sm:$0xff] %vm571, %v552
    %587 = vst.msk [vmem:[#allocation3 + $0x78] sm:$0xff] %vm571, %v554
    %v588 = vld [vmem:[%s215 + $0x1] sm:$0xff]
    %v589 = vld [vmem:[%s215 + $0x11] sm:$0xff]
    %v590 = vld [vmem:[%s215 + $0x21] sm:$0xff]
    %v591 = vld [vmem:[%s215 + $0x31] sm:$0xff]
    %v592 = vld [vmem:[%s215 + $0x41] sm:$0xff]
    %v593 = vld [vmem:[%s215 + $0x51] sm:$0xff]
    %v594 = vld [vmem:[%s215 + $0x61] sm:$0xff]
    %v595 = vld [vmem:[%s215 + $0x71] sm:$0xff]
    %v596 = vld [vmem:[%s215 + $0xa1] sm:$0xff]
    %v597 = vld [vmem:[%s215 + $0xb1] sm:$0xff]
    %v598 = vld [vmem:[%s215 + $0xc1] sm:$0xff]
    %v599 = vld [vmem:[%s215 + $0xd1] sm:$0xff]
    %v600 = vld [vmem:[%s215 + $0xe1] sm:$0xff]
    %v601 = vld [vmem:[%s215 + $0xf1] sm:$0xff]
    %v602 = vld [vmem:[%s215 + $0x101] sm:$0xff]
    %v603 = vld [vmem:[%s215 + $0x111] sm:$0xff]
    %620 = vrot.lane.b32.xlu0 %v588, 16
    %v621 = vpop.permute.xlu0 %620
    %622 = vrot.lane.b32.xlu0 %v589, 16
    %v623 = vpop.permute.xlu0 %622
    %624 = vrot.lane.b32.xlu0 %v590, 16
    %v625 = vpop.permute.xlu0 %624
    %626 = vrot.lane.b32.xlu0 %v591, 16
    %v627 = vpop.permute.xlu0 %626
    %628 = vrot.lane.b32.xlu0 %v592, 16
    %v629 = vpop.permute.xlu0 %628
    %630 = vrot.lane.b32.xlu0 %v593, 16
    %v631 = vpop.permute.xlu0 %630
    %632 = vrot.lane.b32.xlu0 %v594, 16
    %v633 = vpop.permute.xlu0 %632
    %634 = vrot.lane.b32.xlu0 %v595, 16
    %v635 = vpop.permute.xlu0 %634
    %636 = vrot.lane.b32.xlu0 %v596, 16
    %v637 = vpop.permute.xlu0 %636
    %638 = vrot.lane.b32.xlu0 %v597, 16
    %v639 = vpop.permute.xlu0 %638
    %640 = vrot.lane.b32.xlu0 %v598, 16
    %v641 = vpop.permute.xlu0 %640
    %642 = vrot.lane.b32.xlu0 %v599, 16
    %v643 = vpop.permute.xlu0 %642
    %644 = vrot.lane.b32.xlu0 %v600, 16
    %v645 = vpop.permute.xlu0 %644
    %646 = vrot.lane.b32.xlu0 %v601, 16
    %v647 = vpop.permute.xlu0 %646
    %648 = vrot.lane.b32.xlu0 %v602, 16
    %v649 = vpop.permute.xlu0 %648
    %650 = vrot.lane.b32.xlu0 %v603, 16
    %v651 = vpop.permute.xlu0 %650
    %vm668 = vcmask 162944
    %669 = vst.msk [vmem:[#allocation3] sm:$0xff] %vm668, %v621
    %670 = vst.msk [vmem:[#allocation3 + $0x8] sm:$0xff] %vm668, %v623
    %671 = vst.msk [vmem:[#allocation3 + $0x10] sm:$0xff] %vm668, %v625
    %672 = vst.msk [vmem:[#allocation3 + $0x18] sm:$0xff] %vm668, %v627
    %673 = vst.msk [vmem:[#allocation3 + $0x20] sm:$0xff] %vm668, %v629
    %674 = vst.msk [vmem:[#allocation3 + $0x28] sm:$0xff] %vm668, %v631
    %675 = vst.msk [vmem:[#allocation3 + $0x30] sm:$0xff] %vm668, %v633
    %676 = vst.msk [vmem:[#allocation3 + $0x38] sm:$0xff] %vm668, %v635
    %677 = vst.msk [vmem:[#allocation3 + $0x40] sm:$0xff] %vm668, %v637
    %678 = vst.msk [vmem:[#allocation3 + $0x48] sm:$0xff] %vm668, %v639
    %679 = vst.msk [vmem:[#allocation3 + $0x50] sm:$0xff] %vm668, %v641
    %680 = vst.msk [vmem:[#allocation3 + $0x58] sm:$0xff] %vm668, %v643
    %681 = vst.msk [vmem:[#allocation3 + $0x60] sm:$0xff] %vm668, %v645
    %682 = vst.msk [vmem:[#allocation3 + $0x68] sm:$0xff] %vm668, %v647
    %683 = vst.msk [vmem:[#allocation3 + $0x70] sm:$0xff] %vm668, %v649
    %684 = vst.msk [vmem:[#allocation3 + $0x78] sm:$0xff] %vm668, %v651
    %v685 = vld [vmem:[%s215 + $0x2] sm:$0xff]
    %v686 = vld [vmem:[%s215 + $0x12] sm:$0xff]
    %v687 = vld [vmem:[%s215 + $0x22] sm:$0xff]
    %v688 = vld [vmem:[%s215 + $0x32] sm:$0xff]
    %v689 = vld [vmem:[%s215 + $0x42] sm:$0xff]
    %v690 = vld [vmem:[%s215 + $0x52] sm:$0xff]
    %v691 = vld [vmem:[%s215 + $0x62] sm:$0xff]
    %v692 = vld [vmem:[%s215 + $0x72] sm:$0xff]
    %v693 = vld [vmem:[%s215 + $0xa2] sm:$0xff]
    %v694 = vld [vmem:[%s215 + $0xb2] sm:$0xff]
    %v695 = vld [vmem:[%s215 + $0xc2] sm:$0xff]
    %v696 = vld [vmem:[%s215 + $0xd2] sm:$0xff]
    %v697 = vld [vmem:[%s215 + $0xe2] sm:$0xff]
    %v698 = vld [vmem:[%s215 + $0xf2] sm:$0xff]
    %v699 = vld [vmem:[%s215 + $0x102] sm:$0xff]
    %v700 = vld [vmem:[%s215 + $0x112] sm:$0xff]
    %717 = vrot.lane.b32.xlu0 %v685, 20
    %v718 = vpop.permute.xlu0 %717
    %719 = vrot.lane.b32.xlu0 %v686, 20
    %v720 = vpop.permute.xlu0 %719
    %721 = vrot.lane.b32.xlu0 %v687, 20
    %v722 = vpop.permute.xlu0 %721
    %723 = vrot.lane.b32.xlu0 %v688, 20
    %v724 = vpop.permute.xlu0 %723
    %725 = vrot.lane.b32.xlu0 %v689, 20
    %v726 = vpop.permute.xlu0 %725
    %727 = vrot.lane.b32.xlu0 %v690, 20
    %v728 = vpop.permute.xlu0 %727
    %729 = vrot.lane.b32.xlu0 %v691, 20
    %v730 = vpop.permute.xlu0 %729
    %731 = vrot.lane.b32.xlu0 %v692, 20
    %v732 = vpop.permute.xlu0 %731
    %733 = vrot.lane.b32.xlu0 %v693, 20
    %v734 = vpop.permute.xlu0 %733
    %735 = vrot.lane.b32.xlu0 %v694, 20
    %v736 = vpop.permute.xlu0 %735
    %737 = vrot.lane.b32.xlu0 %v695, 20
    %v738 = vpop.permute.xlu0 %737
    %739 = vrot.lane.b32.xlu0 %v696, 20
    %v740 = vpop.permute.xlu0 %739
    %741 = vrot.lane.b32.xlu0 %v697, 20
    %v742 = vpop.permute.xlu0 %741
    %743 = vrot.lane.b32.xlu0 %v698, 20
    %v744 = vpop.permute.xlu0 %743
    %745 = vrot.lane.b32.xlu0 %v699, 20
    %v746 = vpop.permute.xlu0 %745
    %747 = vrot.lane.b32.xlu0 %v700, 20
    %v748 = vpop.permute.xlu0 %747
    %vm765 = vcmask 195744
    %766 = vst.msk [vmem:[#allocation3] sm:$0xff] %vm765, %v718
    %767 = vst.msk [vmem:[#allocation3 + $0x8] sm:$0xff] %vm765, %v720
    %768 = vst.msk [vmem:[#allocation3 + $0x10] sm:$0xff] %vm765, %v722
    %769 = vst.msk [vmem:[#allocation3 + $0x18] sm:$0xff] %vm765, %v724
    %770 = vst.msk [vmem:[#allocation3 + $0x20] sm:$0xff] %vm765, %v726
    %771 = vst.msk [vmem:[#allocation3 + $0x28] sm:$0xff] %vm765, %v728
    %772 = vst.msk [vmem:[#allocation3 + $0x30] sm:$0xff] %vm765, %v730
    %773 = vst.msk [vmem:[#allocation3 + $0x38] sm:$0xff] %vm765, %v732
    %774 = vst.msk [vmem:[#allocation3 + $0x40] sm:$0xff] %vm765, %v734
    %775 = vst.msk [vmem:[#allocation3 + $0x48] sm:$0xff] %vm765, %v736
    %776 = vst.msk [vmem:[#allocation3 + $0x50] sm:$0xff] %vm765, %v738
    %777 = vst.msk [vmem:[#allocation3 + $0x58] sm:$0xff] %vm765, %v740
    %778 = vst.msk [vmem:[#allocation3 + $0x60] sm:$0xff] %vm765, %v742
    %779 = vst.msk [vmem:[#allocation3 + $0x68] sm:$0xff] %vm765, %v744
    %780 = vst.msk [vmem:[#allocation3 + $0x70] sm:$0xff] %vm765, %v746
    %781 = vst.msk [vmem:[#allocation3 + $0x78] sm:$0xff] %vm765, %v748
    %s782 = scalar_lea.vmem [#allocation2], 32
    %v783 = vld [vmem:[%s782] sm:$0xff]
    %v784 = vld [vmem:[%s782 + $0x10] sm:$0xff]
    %v785 = vld [vmem:[%s782 + $0x20] sm:$0xff]
    %v786 = vld [vmem:[%s782 + $0x30] sm:$0xff]
    %v787 = vld [vmem:[%s782 + $0x40] sm:$0xff]
    %v788 = vld [vmem:[%s782 + $0x50] sm:$0xff]
    %v789 = vld [vmem:[%s782 + $0x60] sm:$0xff]
    %v790 = vld [vmem:[%s782 + $0x70] sm:$0xff]
    %v791 = vld [vmem:[%s782 + $0xa0] sm:$0xff]
    %v792 = vld [vmem:[%s782 + $0xb0] sm:$0xff]
    %v793 = vld [vmem:[%s782 + $0xc0] sm:$0xff]
    %v794 = vld [vmem:[%s782 + $0xd0] sm:$0xff]
    %v795 = vld [vmem:[%s782 + $0xe0] sm:$0xff]
    %v796 = vld [vmem:[%s782 + $0xf0] sm:$0xff]
    %v797 = vld [vmem:[%s782 + $0x100] sm:$0xff]
    %v798 = vld [vmem:[%s782 + $0x110] sm:$0xff]
    %815 = vrot.lane.b32.xlu0 %v783, 24
    %v816 = vpop.permute.xlu0 %815
    %817 = vrot.lane.b32.xlu0 %v784, 24
    %v818 = vpop.permute.xlu0 %817
    %819 = vrot.lane.b32.xlu0 %v785, 24
    %v820 = vpop.permute.xlu0 %819
    %821 = vrot.lane.b32.xlu0 %v786, 24
    %v822 = vpop.permute.xlu0 %821
    %823 = vrot.lane.b32.xlu0 %v787, 24
    %v824 = vpop.permute.xlu0 %823
    %825 = vrot.lane.b32.xlu0 %v788, 24
    %v826 = vpop.permute.xlu0 %825
    %827 = vrot.lane.b32.xlu0 %v789, 24
    %v828 = vpop.permute.xlu0 %827
    %829 = vrot.lane.b32.xlu0 %v790, 24
    %v830 = vpop.permute.xlu0 %829
    %831 = vrot.lane.b32.xlu0 %v791, 24
    %v832 = vpop.permute.xlu0 %831
    %833 = vrot.lane.b32.xlu0 %v792, 24
    %v834 = vpop.permute.xlu0 %833
    %835 = vrot.lane.b32.xlu0 %v793, 24
    %v836 = vpop.permute.xlu0 %835
    %837 = vrot.lane.b32.xlu0 %v794, 24
    %v838 = vpop.permute.xlu0 %837
    %839 = vrot.lane.b32.xlu0 %v795, 24
    %v840 = vpop.permute.xlu0 %839
    %841 = vrot.lane.b32.xlu0 %v796, 24
    %v842 = vpop.permute.xlu0 %841
    %843 = vrot.lane.b32.xlu0 %v797, 24
    %v844 = vpop.permute.xlu0 %843
    %845 = vrot.lane.b32.xlu0 %v798, 24
    %v846 = vpop.permute.xlu0 %845
    %vm863 = vcmask 228544
    %864 = vst.msk [vmem:[#allocation3] sm:$0xff] %vm863, %v816
    %865 = vst.msk [vmem:[#allocation3 + $0x8] sm:$0xff] %vm863, %v818
    %866 = vst.msk [vmem:[#allocation3 + $0x10] sm:$0xff] %vm863, %v820
    %867 = vst.msk [vmem:[#allocation3 + $0x18] sm:$0xff] %vm863, %v822
    %868 = vst.msk [vmem:[#allocation3 + $0x20] sm:$0xff] %vm863, %v824
    %869 = vst.msk [vmem:[#allocation3 + $0x28] sm:$0xff] %vm863, %v826
    %870 = vst.msk [vmem:[#allocation3 + $0x30] sm:$0xff] %vm863, %v828
    %871 = vst.msk [vmem:[#allocation3 + $0x38] sm:$0xff] %vm863, %v830
    %872 = vst.msk [vmem:[#allocation3 + $0x40] sm:$0xff] %vm863, %v832
    %873 = vst.msk [vmem:[#allocation3 + $0x48] sm:$0xff] %vm863, %v834
    %874 = vst.msk [vmem:[#allocation3 + $0x50] sm:$0xff] %vm863, %v836
    %875 = vst.msk [vmem:[#allocation3 + $0x58] sm:$0xff] %vm863, %v838
    %876 = vst.msk [vmem:[#allocation3 + $0x60] sm:$0xff] %vm863, %v840
    %877 = vst.msk [vmem:[#allocation3 + $0x68] sm:$0xff] %vm863, %v842
    %878 = vst.msk [vmem:[#allocation3 + $0x70] sm:$0xff] %vm863, %v844
    %879 = vst.msk [vmem:[#allocation3 + $0x78] sm:$0xff] %vm863, %v846
    %v880 = vld [vmem:[%s782 + $0x1] sm:$0xff]
    %v881 = vld [vmem:[%s782 + $0x11] sm:$0xff]
    %v882 = vld [vmem:[%s782 + $0x21] sm:$0xff]
    %v883 = vld [vmem:[%s782 + $0x31] sm:$0xff]
    %v884 = vld [vmem:[%s782 + $0x41] sm:$0xff]
    %v885 = vld [vmem:[%s782 + $0x51] sm:$0xff]
    %v886 = vld [vmem:[%s782 + $0x61] sm:$0xff]
    %v887 = vld [vmem:[%s782 + $0x71] sm:$0xff]
    %v888 = vld [vmem:[%s782 + $0xa1] sm:$0xff]
    %v889 = vld [vmem:[%s782 + $0xb1] sm:$0xff]
    %v890 = vld [vmem:[%s782 + $0xc1] sm:$0xff]
    %v891 = vld [vmem:[%s782 + $0xd1] sm:$0xff]
    %v892 = vld [vmem:[%s782 + $0xe1] sm:$0xff]
    %v893 = vld [vmem:[%s782 + $0xf1] sm:$0xff]
    %v894 = vld [vmem:[%s782 + $0x101] sm:$0xff]
    %v895 = vld [vmem:[%s782 + $0x111] sm:$0xff]
    %912 = vrot.lane.b32.xlu0 %v880, 28
    %v913 = vpop.permute.xlu0 %912
    %914 = vrot.lane.b32.xlu0 %v881, 28
    %v915 = vpop.permute.xlu0 %914
    %916 = vrot.lane.b32.xlu0 %v882, 28
    %v917 = vpop.permute.xlu0 %916
    %918 = vrot.lane.b32.xlu0 %v883, 28
    %v919 = vpop.permute.xlu0 %918
    %920 = vrot.lane.b32.xlu0 %v884, 28
    %v921 = vpop.permute.xlu0 %920
    %922 = vrot.lane.b32.xlu0 %v885, 28
    %v923 = vpop.permute.xlu0 %922
    %924 = vrot.lane.b32.xlu0 %v886, 28
    %v925 = vpop.permute.xlu0 %924
    %926 = vrot.lane.b32.xlu0 %v887, 28
    %v927 = vpop.permute.xlu0 %926
    %928 = vrot.lane.b32.xlu0 %v888, 28
    %v929 = vpop.permute.xlu0 %928
    %930 = vrot.lane.b32.xlu0 %v889, 28
    %v931 = vpop.permute.xlu0 %930
    %932 = vrot.lane.b32.xlu0 %v890, 28
    %v933 = vpop.permute.xlu0 %932
    %934 = vrot.lane.b32.xlu0 %v891, 28
    %v935 = vpop.permute.xlu0 %934
    %936 = vrot.lane.b32.xlu0 %v892, 28
    %v937 = vpop.permute.xlu0 %936
    %938 = vrot.lane.b32.xlu0 %v893, 28
    %v939 = vpop.permute.xlu0 %938
    %940 = vrot.lane.b32.xlu0 %v894, 28
    %v941 = vpop.permute.xlu0 %940
    %942 = vrot.lane.b32.xlu0 %v895, 28
    %v943 = vpop.permute.xlu0 %942
    %vm960 = vcmask 261344
    %961 = vst.msk [vmem:[#allocation3] sm:$0xff] %vm960, %v913
    %962 = vst.msk [vmem:[#allocation3 + $0x8] sm:$0xff] %vm960, %v915
    %963 = vst.msk [vmem:[#allocation3 + $0x10] sm:$0xff] %vm960, %v917
    %964 = vst.msk [vmem:[#allocation3 + $0x18] sm:$0xff] %vm960, %v919
    %965 = vst.msk [vmem:[#allocation3 + $0x20] sm:$0xff] %vm960, %v921
    %966 = vst.msk [vmem:[#allocation3 + $0x28] sm:$0xff] %vm960, %v923
    %967 = vst.msk [vmem:[#allocation3 + $0x30] sm:$0xff] %vm960, %v925
    %968 = vst.msk [vmem:[#allocation3 + $0x38] sm:$0xff] %vm960, %v927
    %969 = vst.msk [vmem:[#allocation3 + $0x40] sm:$0xff] %vm960, %v929
    %970 = vst.msk [vmem:[#allocation3 + $0x48] sm:$0xff] %vm960, %v931
    %971 = vst.msk [vmem:[#allocation3 + $0x50] sm:$0xff] %vm960, %v933
    %972 = vst.msk [vmem:[#allocation3 + $0x58] sm:$0xff] %vm960, %v935
    %973 = vst.msk [vmem:[#allocation3 + $0x60] sm:$0xff] %vm960, %v937
    %974 = vst.msk [vmem:[#allocation3 + $0x68] sm:$0xff] %vm960, %v939
    %975 = vst.msk [vmem:[#allocation3 + $0x70] sm:$0xff] %vm960, %v941
    %976 = vst.msk [vmem:[#allocation3 + $0x78] sm:$0xff] %vm960, %v943
    %v977 = vld [vmem:[%s782 + $0x2] sm:$0xff]
    %v978 = vld [vmem:[%s782 + $0x12] sm:$0xff]
    %v979 = vld [vmem:[%s782 + $0x22] sm:$0xff]
    %v980 = vld [vmem:[%s782 + $0x32] sm:$0xff]
    %v981 = vld [vmem:[%s782 + $0x42] sm:$0xff]
    %v982 = vld [vmem:[%s782 + $0x52] sm:$0xff]
    %v983 = vld [vmem:[%s782 + $0x62] sm:$0xff]
    %v984 = vld [vmem:[%s782 + $0x72] sm:$0xff]
    %v985 = vld [vmem:[%s782 + $0xa2] sm:$0xff]
    %v986 = vld [vmem:[%s782 + $0xb2] sm:$0xff]
    %v987 = vld [vmem:[%s782 + $0xc2] sm:$0xff]
    %v988 = vld [vmem:[%s782 + $0xd2] sm:$0xff]
    %v989 = vld [vmem:[%s782 + $0xe2] sm:$0xff]
    %v990 = vld [vmem:[%s782 + $0xf2] sm:$0xff]
    %v991 = vld [vmem:[%s782 + $0x102] sm:$0xff]
    %v992 = vld [vmem:[%s782 + $0x112] sm:$0xff]
    %1009 = vrot.lane.b32.xlu0 %v977, 32
    %v1010 = vpop.permute.xlu0 %1009
    %1011 = vrot.lane.b32.xlu0 %v978, 32
    %v1012 = vpop.permute.xlu0 %1011
    %1013 = vrot.lane.b32.xlu0 %v979, 32
    %v1014 = vpop.permute.xlu0 %1013
    %1015 = vrot.lane.b32.xlu0 %v980, 32
    %v1016 = vpop.permute.xlu0 %1015
    %1017 = vrot.lane.b32.xlu0 %v981, 32
    %v1018 = vpop.permute.xlu0 %1017
    %1019 = vrot.lane.b32.xlu0 %v982, 32
    %v1020 = vpop.permute.xlu0 %1019
    %1021 = vrot.lane.b32.xlu0 %v983, 32
    %v1022 = vpop.permute.xlu0 %1021
    %1023 = vrot.lane.b32.xlu0 %v984, 32
    %v1024 = vpop.permute.xlu0 %1023
    %1025 = vrot.lane.b32.xlu0 %v985, 32
    %v1026 = vpop.permute.xlu0 %1025
    %1027 = vrot.lane.b32.xlu0 %v986, 32
    %v1028 = vpop.permute.xlu0 %1027
    %1029 = vrot.lane.b32.xlu0 %v987, 32
    %v1030 = vpop.permute.xlu0 %1029
    %1031 = vrot.lane.b32.xlu0 %v988, 32
    %v1032 = vpop.permute.xlu0 %1031
    %1033 = vrot.lane.b32.xlu0 %v989, 32
    %v1034 = vpop.permute.xlu0 %1033
    %1035 = vrot.lane.b32.xlu0 %v990, 32
    %v1036 = vpop.permute.xlu0 %1035
    %1037 = vrot.lane.b32.xlu0 %v991, 32
    %v1038 = vpop.permute.xlu0 %1037
    %1039 = vrot.lane.b32.xlu0 %v992, 32
    %v1040 = vpop.permute.xlu0 %1039
    %vm1057 = vcmask 294144
    %1058 = vst.msk [vmem:[#allocation3] sm:$0xff] %vm1057, %v1010
    %1059 = vst.msk [vmem:[#allocation3 + $0x8] sm:$0xff] %vm1057, %v1012
    %1060 = vst.msk [vmem:[#allocation3 + $0x10] sm:$0xff] %vm1057, %v1014
    %1061 = vst.msk [vmem:[#allocation3 + $0x18] sm:$0xff] %vm1057, %v1016
    %1062 = vst.msk [vmem:[#allocation3 + $0x20] sm:$0xff] %vm1057, %v1018
    %1063 = vst.msk [vmem:[#allocation3 + $0x28] sm:$0xff] %vm1057, %v1020
    %1064 = vst.msk [vmem:[#allocation3 + $0x30] sm:$0xff] %vm1057, %v1022
    %1065 = vst.msk [vmem:[#allocation3 + $0x38] sm:$0xff] %vm1057, %v1024
    %1066 = vst.msk [vmem:[#allocation3 + $0x40] sm:$0xff] %vm1057, %v1026
    %1067 = vst.msk [vmem:[#allocation3 + $0x48] sm:$0xff] %vm1057, %v1028
    %1068 = vst.msk [vmem:[#allocation3 + $0x50] sm:$0xff] %vm1057, %v1030
    %1069 = vst.msk [vmem:[#allocation3 + $0x58] sm:$0xff] %vm1057, %v1032
    %1070 = vst.msk [vmem:[#allocation3 + $0x60] sm:$0xff] %vm1057, %v1034
    %1071 = vst.msk [vmem:[#allocation3 + $0x68] sm:$0xff] %vm1057, %v1036
    %1072 = vst.msk [vmem:[#allocation3 + $0x70] sm:$0xff] %vm1057, %v1038
    %1073 = vst.msk [vmem:[#allocation3 + $0x78] sm:$0xff] %vm1057, %v1040
    %v1074 = vld [vmem:[#allocation3] sm:$0xff]
    %v1075 = vld [vmem:[#allocation3 + $0x8] sm:$0xff]
    %v1076 = vld [vmem:[#allocation3 + $0x10] sm:$0xff]
    %v1077 = vld [vmem:[#allocation3 + $0x18] sm:$0xff]
    %v1078 = vld [vmem:[#allocation3 + $0x20] sm:$0xff]
    %v1079 = vld [vmem:[#allocation3 + $0x28] sm:$0xff]
    %v1080 = vld [vmem:[#allocation3 + $0x30] sm:$0xff]
    %v1081 = vld [vmem:[#allocation3 + $0x38] sm:$0xff]
    %v1082 = vld [vmem:[#allocation3 + $0x40] sm:$0xff]
    %v1083 = vld [vmem:[#allocation3 + $0x48] sm:$0xff]
    %v1084 = vld [vmem:[#allocation3 + $0x50] sm:$0xff]
    %v1085 = vld [vmem:[#allocation3 + $0x58] sm:$0xff]
    %v1086 = vld [vmem:[#allocation3 + $0x60] sm:$0xff]
    %v1087 = vld [vmem:[#allocation3 + $0x68] sm:$0xff]
    %v1088 = vld [vmem:[#allocation3 + $0x70] sm:$0xff]
    %v1089 = vld [vmem:[#allocation3 + $0x78] sm:$0xff]
    %v1090 = vpack.c.bf16 %v1075, %v1074
    %v1091 = vpack.c.bf16 %v1077, %v1076
    %v1092 = vpack.c.bf16 %v1079, %v1078
    %v1093 = vpack.c.bf16 %v1081, %v1080
    %v1094 = vpack.c.bf16 %v1083, %v1082
    %v1095 = vpack.c.bf16 %v1085, %v1084
    %v1096 = vpack.c.bf16 %v1087, %v1086
    %v1097 = vpack.c.bf16 %v1089, %v1088
    %v1098 = vld [vmem:[%s1] sm:$0xf]
    %v1099 = vld [vmem:[%s1 + $0x4] sm:$0xf]
    %v1100 = vld [vmem:[%s1 + $0x8] sm:$0xf]
    %v1101 = vld [vmem:[%s1 + $0xc] sm:$0xf]
    %v1102 = vld [vmem:[%s1 + $0x10] sm:$0x3]
    %v1108 = vunpack.c.l.b16 %v1098
    %v1109 = vunpack.c.l.b16 %v1099
    %v1110 = vunpack.c.l.b16 %v1100
    %v1111 = vunpack.c.l.b16 %v1101
    %v1112 = vunpack.c.l.b16 %v1102
    %v1113 = vpack.c.b16 %v1109, %v1108
    %v1114 = vpack.c.b16 %v1111, %v1110
    %v1115 = vpack.c.b16 %v1112, %v1112
    %vm1118 = vcmask 293888
    %v1120 = vsel %vm1118, %v1090, 0
    %v1123 = vsel %vm1118, %v1091, 0
    %v1126 = vsel %vm1118, %v1092, 0
    %v1129 = vsel %vm1118, %v1093, 0
    %v1132 = vsel %vm1118, %v1094, 0
    %v1135 = vsel %vm1118, %v1095, 0
    %v1138 = vsel %vm1118, %v1096, 0
    %v1141 = vsel %vm1118, %v1097, 0
    %vm1143 = vcmask 1041408
    %v1145 = vsel %vm1143, %v1115, 0
    %1147 = vmatprep.subr.bf16.mxu0 0
    %1148 = vmatpush1.bf16.msra.mxu0 0
    %1149 = vmatprep.subr.bf16.mxu0 0
    %1150 = vmatpush1.bf16.msra.mxu0 0
    %1151 = vmatprep.subr.bf16.mxu0 0
    %1152 = vmatpush1.bf16.msra.mxu0 0
    %1153 = vmatprep.subr.bf16.mxu0 0
    %1154 = vmatpush1.bf16.msra.mxu0 0
    %1155 = vmatprep.subr.bf16.mxu0 0
    %1156 = vmatpush1.bf16.msra.mxu0 0
    %1157 = vmatprep.subr.bf16.mxu0 0
    %1158 = vmatpush1.bf16.msra.mxu0 %v1145
    %1159 = vmatprep.subr.bf16.mxu0 0
    %1160 = vmatpush1.bf16.msra.mxu0 %v1114
    %1161 = vmatprep.subr.bf16.mxu0 0
    %1162 = vmatpush1.bf16.msra.mxu0 %v1113
    %1163 = vmatprep.subr.bf16.mxu0 0
    %1164 = vmatpush2.bf16.msra.mxu0 0
    %1165 = vmatprep.subr.bf16.mxu0 0
    %1166 = vmatpush2.bf16.msra.mxu0 0
    %1167 = vmatprep.subr.bf16.mxu0 0
    %1168 = vmatpush2.bf16.msra.mxu0 0
    %1169 = vmatprep.subr.bf16.mxu0 0
    %1170 = vmatpush2.bf16.msra.mxu0 0
    %1171 = vmatprep.subr.bf16.mxu0 0
    %1172 = vmatpush2.bf16.msra.mxu0 0
    %1173 = vmatprep.subr.bf16.mxu0 0
    %1174 = vmatpush2.bf16.msra.mxu0 0
    %1175 = vmatprep.subr.bf16.mxu0 0
    %1176 = vmatpush2.bf16.msra.mxu0 0
    %1177 = vmatprep.subr.bf16.mxu0 0
    %1178 = vmatpush2.bf16.msra.mxu0 0
    %1179 = vmatprep.mubr.bf16.mxu0 0
    %1180 = vmatmul.mubr.bf16.gmra.mxu0 %v1120
    %v1181 = vpop.f32.mrf.mxu0
    %v1182 = vadd.f32 0.0, %v1181
    %v1183 = vpop.f32.mrf.mxu0
    %v1184 = vpop.f32.mrf.mxu0
    %v1185 = vadd.f32 0.0, %v1184
    %v1186 = vpop.f32.mrf.mxu0
    %1187 = vmatprep.mubr.bf16.mxu0 0
    %1188 = vmatmul.mubr.bf16.gmra.mxu0 %v1123
    %v1189 = vpop.f32.mrf.mxu0
    %v1190 = vadd.f32 0.0, %v1189
    %v1191 = vpop.f32.mrf.mxu0
    %v1192 = vpop.f32.mrf.mxu0
    %v1193 = vadd.f32 0.0, %v1192
    %v1194 = vpop.f32.mrf.mxu0
    %1195 = vmatprep.mubr.bf16.mxu0 0
    %1196 = vmatmul.mubr.bf16.gmra.mxu0 %v1126
    %v1197 = vpop.f32.mrf.mxu0
    %v1198 = vadd.f32 0.0, %v1197
    %v1199 = vpop.f32.mrf.mxu0
    %v1200 = vpop.f32.mrf.mxu0
    %v1201 = vadd.f32 0.0, %v1200
    %v1202 = vpop.f32.mrf.mxu0
    %1203 = vmatprep.mubr.bf16.mxu0 0
    %1204 = vmatmul.mubr.bf16.gmra.mxu0 %v1129
    %v1205 = vpop.f32.mrf.mxu0
    %v1206 = vadd.f32 0.0, %v1205
    %v1207 = vpop.f32.mrf.mxu0
    %v1208 = vpop.f32.mrf.mxu0
    %v1209 = vadd.f32 0.0, %v1208
    %v1210 = vpop.f32.mrf.mxu0
    %1211 = vmatprep.mubr.bf16.mxu0 0
    %1212 = vmatmul.mubr.bf16.gmra.mxu0 %v1132
    %v1213 = vpop.f32.mrf.mxu0
    %v1214 = vadd.f32 0.0, %v1213
    %v1215 = vpop.f32.mrf.mxu0
    %v1216 = vpop.f32.mrf.mxu0
    %v1217 = vadd.f32 0.0, %v1216
    %v1218 = vpop.f32.mrf.mxu0
    %1219 = vmatprep.mubr.bf16.mxu0 0
    %1220 = vmatmul.mubr.bf16.gmra.mxu0 %v1135
    %v1221 = vpop.f32.mrf.mxu0
    %v1222 = vadd.f32 0.0, %v1221
    %v1223 = vpop.f32.mrf.mxu0
    %v1224 = vpop.f32.mrf.mxu0
    %v1225 = vadd.f32 0.0, %v1224
    %v1226 = vpop.f32.mrf.mxu0
    %1227 = vmatprep.mubr.bf16.mxu0 0
    %1228 = vmatmul.mubr.bf16.gmra.mxu0 %v1138
    %v1229 = vpop.f32.mrf.mxu0
    %v1230 = vadd.f32 0.0, %v1229
    %v1231 = vpop.f32.mrf.mxu0
    %v1232 = vpop.f32.mrf.mxu0
    %v1233 = vadd.f32 0.0, %v1232
    %v1234 = vpop.f32.mrf.mxu0
    %1235 = vmatprep.mubr.bf16.mxu0 0
    %1236 = vmatmul.mubr.bf16.gmra.mxu0 %v1141
    %v1237 = vpop.f32.mrf.mxu0
    %v1238 = vadd.f32 0.0, %v1237
    %v1239 = vpop.f32.mrf.mxu0
    %v1240 = vpop.f32.mrf.mxu0
    %v1241 = vadd.f32 0.0, %v1240
    %v1242 = vpop.f32.mrf.mxu0
    %1243 = vdwg.mxu0
    %v1244 = vld [vmem:[%s2] sm:$0x1]
    %v1245 = vld [vmem:[%s3] sm:$0x1]
    %vm1246 = vcmask 64512
    %v1247 = vsel %vm1246, %v1182, 0.0
    %v1248 = vsel %vm1246, %v1185, 0.0
    %v1249 = vadd.f32 %v1247, %v1248
    %v1250 = vsel %vm1246, %v1190, 0.0
    %v1251 = vadd.f32 %v1249, %v1250
    %v1252 = vsel %vm1246, %v1193, 0.0
    %v1253 = vadd.f32 %v1251, %v1252
    %v1254 = vsel %vm1246, %v1198, 0.0
    %v1255 = vadd.f32 %v1253, %v1254
    %v1256 = vsel %vm1246, %v1201, 0.0
    %v1257 = vadd.f32 %v1255, %v1256
    %v1258 = vsel %vm1246, %v1206, 0.0
    %v1259 = vadd.f32 %v1257, %v1258
    %v1260 = vsel %vm1246, %v1209, 0.0
    %v1261 = vadd.f32 %v1259, %v1260
    %v1262 = vsel %vm1246, %v1214, 0.0
    %v1263 = vadd.f32 %v1261, %v1262
    %v1264 = vsel %vm1246, %v1217, 0.0
    %v1265 = vadd.f32 %v1263, %v1264
    %v1266 = vsel %vm1246, %v1222, 0.0
    %v1267 = vadd.f32 %v1265, %v1266
    %v1268 = vsel %vm1246, %v1225, 0.0
    %v1269 = vadd.f32 %v1267, %v1268
    %v1270 = vsel %vm1246, %v1230, 0.0
    %v1271 = vadd.f32 %v1269, %v1270
    %v1272 = vsel %vm1246, %v1233, 0.0
    %v1273 = vadd.f32 %v1271, %v1272
    %v1274 = vsel %vm1246, %v1238, 0.0
    %v1275 = vadd.f32 %v1273, %v1274
    %v1276 = vsel %vm1246, %v1241, 0.0
    %v1277 = vadd.f32 %v1275, %v1276
    %v1278 = vrot.slane %v1277, 4
    %v1279 = vadd.f32 %v1277, %v1278
    %v1280 = vrot.slane %v1279, 2
    %v1281 = vadd.f32 %v1279, %v1280
    %v1282 = vrot.slane %v1281, 1
    %v1283 = vadd.f32 %v1281, %v1282
    %v1284 = vmul.f32 %v1283, 0.0078125
    %v1285 = vmul.f32 %v1182, %v1182
    %v1286 = vmul.f32 %v1185, %v1185
    %v1287 = vmul.f32 %v1190, %v1190
    %v1288 = vmul.f32 %v1193, %v1193
    %v1289 = vmul.f32 %v1198, %v1198
    %v1290 = vmul.f32 %v1201, %v1201
    %v1291 = vmul.f32 %v1206, %v1206
    %v1292 = vmul.f32 %v1209, %v1209
    %v1293 = vmul.f32 %v1214, %v1214
    %v1294 = vmul.f32 %v1217, %v1217
    %v1295 = vmul.f32 %v1222, %v1222
    %v1296 = vmul.f32 %v1225, %v1225
    %v1297 = vmul.f32 %v1230, %v1230
    %v1298 = vmul.f32 %v1233, %v1233
    %v1299 = vmul.f32 %v1238, %v1238
    %v1300 = vmul.f32 %v1241, %v1241
    %v1301 = vsel %vm1246, %v1285, 0.0
    %v1302 = vsel %vm1246, %v1286, 0.0
    %v1303 = vadd.f32 %v1301, %v1302
    %v1304 = vsel %vm1246, %v1287, 0.0
    %v1305 = vadd.f32 %v1303, %v1304
    %v1306 = vsel %vm1246, %v1288, 0.0
    %v1307 = vadd.f32 %v1305, %v1306
    %v1308 = vsel %vm1246, %v1289, 0.0
    %v1309 = vadd.f32 %v1307, %v1308
    %v1310 = vsel %vm1246, %v1290, 0.0
    %v1311 = vadd.f32 %v1309, %v1310
    %v1312 = vsel %vm1246, %v1291, 0.0
    %v1313 = vadd.f32 %v1311, %v1312
    %v1314 = vsel %vm1246, %v1292, 0.0
    %v1315 = vadd.f32 %v1313, %v1314
    %v1316 = vsel %vm1246, %v1293, 0.0
    %v1317 = vadd.f32 %v1315, %v1316
    %v1318 = vsel %vm1246, %v1294, 0.0
    %v1319 = vadd.f32 %v1317, %v1318
    %v1320 = vsel %vm1246, %v1295, 0.0
    %v1321 = vadd.f32 %v1319, %v1320
    %v1322 = vsel %vm1246, %v1296, 0.0
    %v1323 = vadd.f32 %v1321, %v1322
    %v1324 = vsel %vm1246, %v1297, 0.0
    %v1325 = vadd.f32 %v1323, %v1324
    %v1326 = vsel %vm1246, %v1298, 0.0
    %v1327 = vadd.f32 %v1325, %v1326
    %v1328 = vsel %vm1246, %v1299, 0.0
    %v1329 = vadd.f32 %v1327, %v1328
    %v1330 = vsel %vm1246, %v1300, 0.0
    %v1331 = vadd.f32 %v1329, %v1330
    %v1332 = vrot.slane %v1331, 4
    %v1333 = vadd.f32 %v1331, %v1332
    %v1334 = vrot.slane %v1333, 2
    %v1335 = vadd.f32 %v1333, %v1334
    %v1336 = vrot.slane %v1335, 1
    %v1337 = vadd.f32 %v1335, %v1336
    %v1338 = vmul.f32 %v1337, 0.0078125
    %v1339 = vmul.f32 %v1284, %v1284
    %v1340 = vsub.f32 %v1338, %v1339
    %v1341 = vadd.f32 %v1340, 1e-05
    %v1342 = vrsqrt.pop %v1341
    %v1343 = vmul.f32 %v1244, %v1342
    %v1344 = vmul.f32 %v1284, %v1343
    %v1345 = vsub.f32 %v1245, %v1344
    %v1347 = vlaneseq
    %v1348 = vshrl.u32 %v1347, 7
    %v1349 = vsub.s32 0, %v1348
    %v1350 = vrot.slane %v1343, %v1349
    %v1352 = vmul.f32 %v1182, %v1350
    %v1353 = vmul.f32 %v1185, %v1350
    %v1354 = vmul.f32 %v1190, %v1350
    %v1355 = vmul.f32 %v1193, %v1350
    %v1356 = vmul.f32 %v1198, %v1350
    %v1357 = vmul.f32 %v1201, %v1350
    %v1358 = vmul.f32 %v1206, %v1350
    %v1359 = vmul.f32 %v1209, %v1350
    %v1360 = vmul.f32 %v1214, %v1350
    %v1361 = vmul.f32 %v1217, %v1350
    %v1362 = vmul.f32 %v1222, %v1350
    %v1363 = vmul.f32 %v1225, %v1350
    %v1364 = vmul.f32 %v1230, %v1350
    %v1365 = vmul.f32 %v1233, %v1350
    %v1366 = vmul.f32 %v1238, %v1350
    %v1367 = vmul.f32 %v1241, %v1350
    %v1369 = vlaneseq
    %v1370 = vshrl.u32 %v1369, 7
    %v1371 = vsub.s32 0, %v1370
    %v1372 = vrot.slane %v1345, %v1371
    %v1374 = vadd.f32 %v1352, %v1372
    %v1375 = vadd.f32 %v1353, %v1372
    %v1376 = vadd.f32 %v1354, %v1372
    %v1377 = vadd.f32 %v1355, %v1372
    %v1378 = vadd.f32 %v1356, %v1372
    %v1379 = vadd.f32 %v1357, %v1372
    %v1380 = vadd.f32 %v1358, %v1372
    %v1381 = vadd.f32 %v1359, %v1372
    %v1382 = vadd.f32 %v1360, %v1372
    %v1383 = vadd.f32 %v1361, %v1372
    %v1384 = vadd.f32 %v1362, %v1372
    %v1385 = vadd.f32 %v1363, %v1372
    %v1386 = vadd.f32 %v1364, %v1372
    %v1387 = vadd.f32 %v1365, %v1372
    %v1388 = vadd.f32 %v1366, %v1372
    %v1389 = vadd.f32 %v1367, %v1372
    %v1390 = vmax.f32 %v1374, 0.0
    %v1391 = vmax.f32 %v1375, 0.0
    %v1392 = vmax.f32 %v1376, 0.0
    %v1393 = vmax.f32 %v1377, 0.0
    %v1394 = vmax.f32 %v1378, 0.0
    %v1395 = vmax.f32 %v1379, 0.0
    %v1396 = vmax.f32 %v1380, 0.0
    %v1397 = vmax.f32 %v1381, 0.0
    %v1398 = vmax.f32 %v1382, 0.0
    %v1399 = vmax.f32 %v1383, 0.0
    %v1400 = vmax.f32 %v1384, 0.0
    %v1401 = vmax.f32 %v1385, 0.0
    %v1402 = vmax.f32 %v1386, 0.0
    %v1403 = vmax.f32 %v1387, 0.0
    %v1404 = vmax.f32 %v1388, 0.0
    %v1405 = vmax.f32 %v1389, 0.0
    %1406 = vst.msk [vmem:[#allocation4] sm:$0xff] %vm1246, 0.0
    %vm1407 = vcmask 58368
    %1408 = vst.msk [vmem:[#allocation4 + $0x8] sm:$0x3] %vm1407, 0.0
    %1409 = vst.msk [vmem:[#allocation4 + $0xa0] sm:$0xff] %vm1246, 0.0
    %1410 = vst.msk [vmem:[#allocation4 + $0xa8] sm:$0x3] %vm1407, 0.0
    %s1411 = scalar_lea.vmem [#allocation4], 144
    %1412 = vst.msk [vmem:[%s1411] sm:$0xff] %vm1246, 0.0
    %1413 = vst.msk [vmem:[%s1411 + $0x8] sm:$0x3] %vm1407, 0.0
    %1414 = vst.msk [vmem:[%s1411 + $0xa0] sm:$0xff] %vm1246, 0.0
    %1415 = vst.msk [vmem:[%s1411 + $0xa8] sm:$0x3] %vm1407, 0.0
    %s1416 = scalar_lea.vmem [#allocation4], 16
    %vm1417 = vcmask 57344
    %1418 = vst.msk [vmem:[%s1416] sm:$0x1] %vm1417, 0.0
    %1419 = vst.msk [vmem:[%s1416 + $0x10] sm:$0x1] %vm1417, 0.0
    %1420 = vst.msk [vmem:[%s1416 + $0x20] sm:$0x1] %vm1417, 0.0
    %1421 = vst.msk [vmem:[%s1416 + $0x30] sm:$0x1] %vm1417, 0.0
    %1422 = vst.msk [vmem:[%s1416 + $0x40] sm:$0x1] %vm1417, 0.0
    %1423 = vst.msk [vmem:[%s1416 + $0x50] sm:$0x1] %vm1417, 0.0
    %1424 = vst.msk [vmem:[%s1416 + $0x60] sm:$0x1] %vm1417, 0.0
    %1425 = vst.msk [vmem:[%s1416 + $0x70] sm:$0x1] %vm1417, 0.0
    %1426 = vst.msk [vmem:[%s1416 + $0xa0] sm:$0x1] %vm1417, 0.0
    %1427 = vst.msk [vmem:[%s1416 + $0xb0] sm:$0x1] %vm1417, 0.0
    %1428 = vst.msk [vmem:[%s1416 + $0xc0] sm:$0x1] %vm1417, 0.0
    %1429 = vst.msk [vmem:[%s1416 + $0xd0] sm:$0x1] %vm1417, 0.0
    %1430 = vst.msk [vmem:[%s1416 + $0xe0] sm:$0x1] %vm1417, 0.0
    %1431 = vst.msk [vmem:[%s1416 + $0xf0] sm:$0x1] %vm1417, 0.0
    %1432 = vst.msk [vmem:[%s1416 + $0x100] sm:$0x1] %vm1417, 0.0
    %1433 = vst.msk [vmem:[%s1416 + $0x110] sm:$0x1] %vm1417, 0.0
    %1434 = vst.msk [vmem:[%s1416 + $0x9] sm:$0x1] %vm1417, 0.0
    %1435 = vst.msk [vmem:[%s1416 + $0x19] sm:$0x1] %vm1417, 0.0
    %1436 = vst.msk [vmem:[%s1416 + $0x29] sm:$0x1] %vm1417, 0.0
    %1437 = vst.msk [vmem:[%s1416 + $0x39] sm:$0x1] %vm1417, 0.0
    %1438 = vst.msk [vmem:[%s1416 + $0x49] sm:$0x1] %vm1417, 0.0
    %1439 = vst.msk [vmem:[%s1416 + $0x59] sm:$0x1] %vm1417, 0.0
    %1440 = vst.msk [vmem:[%s1416 + $0x69] sm:$0x1] %vm1417, 0.0
    %1441 = vst.msk [vmem:[%s1416 + $0x79] sm:$0x1] %vm1417, 0.0
    %1442 = vst.msk [vmem:[%s1416 + $0xa9] sm:$0x1] %vm1417, 0.0
    %1443 = vst.msk [vmem:[%s1416 + $0xb9] sm:$0x1] %vm1417, 0.0
    %1444 = vst.msk [vmem:[%s1416 + $0xc9] sm:$0x1] %vm1417, 0.0
    %1445 = vst.msk [vmem:[%s1416 + $0xd9] sm:$0x1] %vm1417, 0.0
    %1446 = vst.msk [vmem:[%s1416 + $0xe9] sm:$0x1] %vm1417, 0.0
    %1447 = vst.msk [vmem:[%s1416 + $0xf9] sm:$0x1] %vm1417, 0.0
    %1448 = vst.msk [vmem:[%s1416 + $0x109] sm:$0x1] %vm1417, 0.0
    %1449 = vst.msk [vmem:[%s1416 + $0x119] sm:$0x1] %vm1417, 0.0
    %1450 = vst.msk [vmem:[%s1416 + $0x1] sm:$0xff] %vm1246, %v1390
    %1451 = vst.msk [vmem:[%s1416 + $0x11] sm:$0xff] %vm1246, %v1391
    %1452 = vst.msk [vmem:[%s1416 + $0x21] sm:$0xff] %vm1246, %v1392
    %1453 = vst.msk [vmem:[%s1416 + $0x31] sm:$0xff] %vm1246, %v1393
    %1454 = vst.msk [vmem:[%s1416 + $0x41] sm:$0xff] %vm1246, %v1394
    %1455 = vst.msk [vmem:[%s1416 + $0x51] sm:$0xff] %vm1246, %v1395
    %1456 = vst.msk [vmem:[%s1416 + $0x61] sm:$0xff] %vm1246, %v1396
    %1457 = vst.msk [vmem:[%s1416 + $0x71] sm:$0xff] %vm1246, %v1397
    %1458 = vst.msk [vmem:[%s1416 + $0xa1] sm:$0xff] %vm1246, %v1398
    %1459 = vst.msk [vmem:[%s1416 + $0xb1] sm:$0xff] %vm1246, %v1399
    %1460 = vst.msk [vmem:[%s1416 + $0xc1] sm:$0xff] %vm1246, %v1400
    %1461 = vst.msk [vmem:[%s1416 + $0xd1] sm:$0xff] %vm1246, %v1401
    %1462 = vst.msk [vmem:[%s1416 + $0xe1] sm:$0xff] %vm1246, %v1402
    %1463 = vst.msk [vmem:[%s1416 + $0xf1] sm:$0xff] %vm1246, %v1403
    %1464 = vst.msk [vmem:[%s1416 + $0x101] sm:$0xff] %vm1246, %v1404
    %1465 = vst.msk [vmem:[%s1416 + $0x111] sm:$0xff] %vm1246, %v1405
    %v1466 = vld [vmem:[#allocation4] sm:$0xff]
    %v1467 = vld [vmem:[#allocation4 + $0x10] sm:$0xff]
    %v1468 = vld [vmem:[#allocation4 + $0x20] sm:$0xff]
    %v1469 = vld [vmem:[#allocation4 + $0x30] sm:$0xff]
    %v1470 = vld [vmem:[#allocation4 + $0x40] sm:$0xff]
    %v1471 = vld [vmem:[#allocation4 + $0x50] sm:$0xff]
    %v1472 = vld [vmem:[#allocation4 + $0x60] sm:$0xff]
    %v1473 = vld [vmem:[#allocation4 + $0x70] sm:$0xff]
    %v1474 = vld [vmem:[#allocation4 + $0xa0] sm:$0xff]
    %v1475 = vld [vmem:[#allocation4 + $0xb0] sm:$0xff]
    %v1476 = vld [vmem:[#allocation4 + $0xc0] sm:$0xff]
    %v1477 = vld [vmem:[#allocation4 + $0xd0] sm:$0xff]
    %v1478 = vld [vmem:[#allocation4 + $0xe0] sm:$0xff]
    %v1479 = vld [vmem:[#allocation4 + $0xf0] sm:$0xff]
    %v1480 = vld [vmem:[#allocation4 + $0x100] sm:$0xff]
    %v1481 = vld [vmem:[#allocation4 + $0x110] sm:$0xff]
    %1482 = vst.msk [vmem:[#allocation5] sm:$0xff] %vm1246, %v1466
    %1483 = vst.msk [vmem:[#allocation5 + $0x8] sm:$0xff] %vm1246, %v1467
    %1484 = vst.msk [vmem:[#allocation5 + $0x10] sm:$0xff] %vm1246, %v1468
    %1485 = vst.msk [vmem:[#allocation5 + $0x18] sm:$0xff] %vm1246, %v1469
    %1486 = vst.msk [vmem:[#allocation5 + $0x20] sm:$0xff] %vm1246, %v1470
    %1487 = vst.msk [vmem:[#allocation5 + $0x28] sm:$0xff] %vm1246, %v1471
    %1488 = vst.msk [vmem:[#allocation5 + $0x30] sm:$0xff] %vm1246, %v1472
    %1489 = vst.msk [vmem:[#allocation5 + $0x38] sm:$0xff] %vm1246, %v1473
    %1490 = vst.msk [vmem:[#allocation5 + $0x40] sm:$0xff] %vm1246, %v1474
    %1491 = vst.msk [vmem:[#allocation5 + $0x48] sm:$0xff] %vm1246, %v1475
    %1492 = vst.msk [vmem:[#allocation5 + $0x50] sm:$0xff] %vm1246, %v1476
    %1493 = vst.msk [vmem:[#allocation5 + $0x58] sm:$0xff] %vm1246, %v1477
    %1494 = vst.msk [vmem:[#allocation5 + $0x60] sm:$0xff] %vm1246, %v1478
    %1495 = vst.msk [vmem:[#allocation5 + $0x68] sm:$0xff] %vm1246, %v1479
    %1496 = vst.msk [vmem:[#allocation5 + $0x70] sm:$0xff] %vm1246, %v1480
    %1497 = vst.msk [vmem:[#allocation5 + $0x78] sm:$0xff] %vm1246, %v1481
    %v1498 = vld [vmem:[#allocation4 + $0x1] sm:$0xff]
    %v1499 = vld [vmem:[#allocation4 + $0x11] sm:$0xff]
    %v1500 = vld [vmem:[#allocation4 + $0x21] sm:$0xff]
    %v1501 = vld [vmem:[#allocation4 + $0x31] sm:$0xff]
    %v1502 = vld [vmem:[#allocation4 + $0x41] sm:$0xff]
    %v1503 = vld [vmem:[#allocation4 + $0x51] sm:$0xff]
    %v1504 = vld [vmem:[#allocation4 + $0x61] sm:$0xff]
    %v1505 = vld [vmem:[#allocation4 + $0x71] sm:$0xff]
    %v1506 = vld [vmem:[#allocation4 + $0xa1] sm:$0xff]
    %v1507 = vld [vmem:[#allocation4 + $0xb1] sm:$0xff]
    %v1508 = vld [vmem:[#allocation4 + $0xc1] sm:$0xff]
    %v1509 = vld [vmem:[#allocation4 + $0xd1] sm:$0xff]
    %v1510 = vld [vmem:[#allocation4 + $0xe1] sm:$0xff]
    %v1511 = vld [vmem:[#allocation4 + $0xf1] sm:$0xff]
    %v1512 = vld [vmem:[#allocation4 + $0x101] sm:$0xff]
    %v1513 = vld [vmem:[#allocation4 + $0x111] sm:$0xff]
    %1530 = vrot.lane.b32.xlu0 %v1498, 8
    %v1531 = vpop.permute.xlu0 %1530
    %1532 = vrot.lane.b32.xlu0 %v1499, 8
    %v1533 = vpop.permute.xlu0 %1532
    %1534 = vrot.lane.b32.xlu0 %v1500, 8
    %v1535 = vpop.permute.xlu0 %1534
    %1536 = vrot.lane.b32.xlu0 %v1501, 8
    %v1537 = vpop.permute.xlu0 %1536
    %1538 = vrot.lane.b32.xlu0 %v1502, 8
    %v1539 = vpop.permute.xlu0 %1538
    %1540 = vrot.lane.b32.xlu0 %v1503, 8
    %v1541 = vpop.permute.xlu0 %1540
    %1542 = vrot.lane.b32.xlu0 %v1504, 8
    %v1543 = vpop.permute.xlu0 %1542
    %1544 = vrot.lane.b32.xlu0 %v1505, 8
    %v1545 = vpop.permute.xlu0 %1544
    %1546 = vrot.lane.b32.xlu0 %v1506, 8
    %v1547 = vpop.permute.xlu0 %1546
    %1548 = vrot.lane.b32.xlu0 %v1507, 8
    %v1549 = vpop.permute.xlu0 %1548
    %1550 = vrot.lane.b32.xlu0 %v1508, 8
    %v1551 = vpop.permute.xlu0 %1550
    %1552 = vrot.lane.b32.xlu0 %v1509, 8
    %v1553 = vpop.permute.xlu0 %1552
    %1554 = vrot.lane.b32.xlu0 %v1510, 8
    %v1555 = vpop.permute.xlu0 %1554
    %1556 = vrot.lane.b32.xlu0 %v1511, 8
    %v1557 = vpop.permute.xlu0 %1556
    %1558 = vrot.lane.b32.xlu0 %v1512, 8
    %v1559 = vpop.permute.xlu0 %1558
    %1560 = vrot.lane.b32.xlu0 %v1513, 8
    %v1561 = vpop.permute.xlu0 %1560
    %vm1578 = vcmask 130112
    %1579 = vst.msk [vmem:[#allocation5] sm:$0xff] %vm1578, %v1531
    %1580 = vst.msk [vmem:[#allocation5 + $0x8] sm:$0xff] %vm1578, %v1533
    %1581 = vst.msk [vmem:[#allocation5 + $0x10] sm:$0xff] %vm1578, %v1535
    %1582 = vst.msk [vmem:[#allocation5 + $0x18] sm:$0xff] %vm1578, %v1537
    %1583 = vst.msk [vmem:[#allocation5 + $0x20] sm:$0xff] %vm1578, %v1539
    %1584 = vst.msk [vmem:[#allocation5 + $0x28] sm:$0xff] %vm1578, %v1541
    %1585 = vst.msk [vmem:[#allocation5 + $0x30] sm:$0xff] %vm1578, %v1543
    %1586 = vst.msk [vmem:[#allocation5 + $0x38] sm:$0xff] %vm1578, %v1545
    %1587 = vst.msk [vmem:[#allocation5 + $0x40] sm:$0xff] %vm1578, %v1547
    %1588 = vst.msk [vmem:[#allocation5 + $0x48] sm:$0xff] %vm1578, %v1549
    %1589 = vst.msk [vmem:[#allocation5 + $0x50] sm:$0xff] %vm1578, %v1551
    %1590 = vst.msk [vmem:[#allocation5 + $0x58] sm:$0xff] %vm1578, %v1553
    %1591 = vst.msk [vmem:[#allocation5 + $0x60] sm:$0xff] %vm1578, %v1555
    %1592 = vst.msk [vmem:[#allocation5 + $0x68] sm:$0xff] %vm1578, %v1557
    %1593 = vst.msk [vmem:[#allocation5 + $0x70] sm:$0xff] %vm1578, %v1559
    %1594 = vst.msk [vmem:[#allocation5 + $0x78] sm:$0xff] %vm1578, %v1561
    %v1595 = vld [vmem:[#allocation4 + $0x2] sm:$0xff]
    %v1596 = vld [vmem:[#allocation4 + $0x12] sm:$0xff]
    %v1597 = vld [vmem:[#allocation4 + $0x22] sm:$0xff]
    %v1598 = vld [vmem:[#allocation4 + $0x32] sm:$0xff]
    %v1599 = vld [vmem:[#allocation4 + $0x42] sm:$0xff]
    %v1600 = vld [vmem:[#allocation4 + $0x52] sm:$0xff]
    %v1601 = vld [vmem:[#allocation4 + $0x62] sm:$0xff]
    %v1602 = vld [vmem:[#allocation4 + $0x72] sm:$0xff]
    %v1603 = vld [vmem:[#allocation4 + $0xa2] sm:$0xff]
    %v1604 = vld [vmem:[#allocation4 + $0xb2] sm:$0xff]
    %v1605 = vld [vmem:[#allocation4 + $0xc2] sm:$0xff]
    %v1606 = vld [vmem:[#allocation4 + $0xd2] sm:$0xff]
    %v1607 = vld [vmem:[#allocation4 + $0xe2] sm:$0xff]
    %v1608 = vld [vmem:[#allocation4 + $0xf2] sm:$0xff]
    %v1609 = vld [vmem:[#allocation4 + $0x102] sm:$0xff]
    %v1610 = vld [vmem:[#allocation4 + $0x112] sm:$0xff]
    %1627 = vrot.lane.b32.xlu0 %v1595, 16
    %v1628 = vpop.permute.xlu0 %1627
    %1629 = vrot.lane.b32.xlu0 %v1596, 16
    %v1630 = vpop.permute.xlu0 %1629
    %1631 = vrot.lane.b32.xlu0 %v1597, 16
    %v1632 = vpop.permute.xlu0 %1631
    %1633 = vrot.lane.b32.xlu0 %v1598, 16
    %v1634 = vpop.permute.xlu0 %1633
    %1635 = vrot.lane.b32.xlu0 %v1599, 16
    %v1636 = vpop.permute.xlu0 %1635
    %1637 = vrot.lane.b32.xlu0 %v1600, 16
    %v1638 = vpop.permute.xlu0 %1637
    %1639 = vrot.lane.b32.xlu0 %v1601, 16
    %v1640 = vpop.permute.xlu0 %1639
    %1641 = vrot.lane.b32.xlu0 %v1602, 16
    %v1642 = vpop.permute.xlu0 %1641
    %1643 = vrot.lane.b32.xlu0 %v1603, 16
    %v1644 = vpop.permute.xlu0 %1643
    %1645 = vrot.lane.b32.xlu0 %v1604, 16
    %v1646 = vpop.permute.xlu0 %1645
    %1647 = vrot.lane.b32.xlu0 %v1605, 16
    %v1648 = vpop.permute.xlu0 %1647
    %1649 = vrot.lane.b32.xlu0 %v1606, 16
    %v1650 = vpop.permute.xlu0 %1649
    %1651 = vrot.lane.b32.xlu0 %v1607, 16
    %v1652 = vpop.permute.xlu0 %1651
    %1653 = vrot.lane.b32.xlu0 %v1608, 16
    %v1654 = vpop.permute.xlu0 %1653
    %1655 = vrot.lane.b32.xlu0 %v1609, 16
    %v1656 = vpop.permute.xlu0 %1655
    %1657 = vrot.lane.b32.xlu0 %v1610, 16
    %v1658 = vpop.permute.xlu0 %1657
    %vm1675 = vcmask 195712
    %1676 = vst.msk [vmem:[#allocation5] sm:$0xff] %vm1675, %v1628
    %1677 = vst.msk [vmem:[#allocation5 + $0x8] sm:$0xff] %vm1675, %v1630
    %1678 = vst.msk [vmem:[#allocation5 + $0x10] sm:$0xff] %vm1675, %v1632
    %1679 = vst.msk [vmem:[#allocation5 + $0x18] sm:$0xff] %vm1675, %v1634
    %1680 = vst.msk [vmem:[#allocation5 + $0x20] sm:$0xff] %vm1675, %v1636
    %1681 = vst.msk [vmem:[#allocation5 + $0x28] sm:$0xff] %vm1675, %v1638
    %1682 = vst.msk [vmem:[#allocation5 + $0x30] sm:$0xff] %vm1675, %v1640
    %1683 = vst.msk [vmem:[#allocation5 + $0x38] sm:$0xff] %vm1675, %v1642
    %1684 = vst.msk [vmem:[#allocation5 + $0x40] sm:$0xff] %vm1675, %v1644
    %1685 = vst.msk [vmem:[#allocation5 + $0x48] sm:$0xff] %vm1675, %v1646
    %1686 = vst.msk [vmem:[#allocation5 + $0x50] sm:$0xff] %vm1675, %v1648
    %1687 = vst.msk [vmem:[#allocation5 + $0x58] sm:$0xff] %vm1675, %v1650
    %1688 = vst.msk [vmem:[#allocation5 + $0x60] sm:$0xff] %vm1675, %v1652
    %1689 = vst.msk [vmem:[#allocation5 + $0x68] sm:$0xff] %vm1675, %v1654
    %1690 = vst.msk [vmem:[#allocation5 + $0x70] sm:$0xff] %vm1675, %v1656
    %1691 = vst.msk [vmem:[#allocation5 + $0x78] sm:$0xff] %vm1675, %v1658
    %v1692 = vld [vmem:[%s1416] sm:$0xff]
    %v1693 = vld [vmem:[%s1416 + $0x10] sm:$0xff]
    %v1694 = vld [vmem:[%s1416 + $0x20] sm:$0xff]
    %v1695 = vld [vmem:[%s1416 + $0x30] sm:$0xff]
    %v1696 = vld [vmem:[%s1416 + $0x40] sm:$0xff]
    %v1697 = vld [vmem:[%s1416 + $0x50] sm:$0xff]
    %v1698 = vld [vmem:[%s1416 + $0x60] sm:$0xff]
    %v1699 = vld [vmem:[%s1416 + $0x70] sm:$0xff]
    %v1700 = vld [vmem:[%s1416 + $0xa0] sm:$0xff]
    %v1701 = vld [vmem:[%s1416 + $0xb0] sm:$0xff]
    %v1702 = vld [vmem:[%s1416 + $0xc0] sm:$0xff]
    %v1703 = vld [vmem:[%s1416 + $0xd0] sm:$0xff]
    %v1704 = vld [vmem:[%s1416 + $0xe0] sm:$0xff]
    %v1705 = vld [vmem:[%s1416 + $0xf0] sm:$0xff]
    %v1706 = vld [vmem:[%s1416 + $0x100] sm:$0xff]
    %v1707 = vld [vmem:[%s1416 + $0x110] sm:$0xff]
    %1724 = vrot.lane.b32.xlu0 %v1692, 24
    %v1725 = vpop.permute.xlu0 %1724
    %1726 = vrot.lane.b32.xlu0 %v1693, 24
    %v1727 = vpop.permute.xlu0 %1726
    %1728 = vrot.lane.b32.xlu0 %v1694, 24
    %v1729 = vpop.permute.xlu0 %1728
    %1730 = vrot.lane.b32.xlu0 %v1695, 24
    %v1731 = vpop.permute.xlu0 %1730
    %1732 = vrot.lane.b32.xlu0 %v1696, 24
    %v1733 = vpop.permute.xlu0 %1732
    %1734 = vrot.lane.b32.xlu0 %v1697, 24
    %v1735 = vpop.permute.xlu0 %1734
    %1736 = vrot.lane.b32.xlu0 %v1698, 24
    %v1737 = vpop.permute.xlu0 %1736
    %1738 = vrot.lane.b32.xlu0 %v1699, 24
    %v1739 = vpop.permute.xlu0 %1738
    %1740 = vrot.lane.b32.xlu0 %v1700, 24
    %v1741 = vpop.permute.xlu0 %1740
    %1742 = vrot.lane.b32.xlu0 %v1701, 24
    %v1743 = vpop.permute.xlu0 %1742
    %1744 = vrot.lane.b32.xlu0 %v1702, 24
    %v1745 = vpop.permute.xlu0 %1744
    %1746 = vrot.lane.b32.xlu0 %v1703, 24
    %v1747 = vpop.permute.xlu0 %1746
    %1748 = vrot.lane.b32.xlu0 %v1704, 24
    %v1749 = vpop.permute.xlu0 %1748
    %1750 = vrot.lane.b32.xlu0 %v1705, 24
    %v1751 = vpop.permute.xlu0 %1750
    %1752 = vrot.lane.b32.xlu0 %v1706, 24
    %v1753 = vpop.permute.xlu0 %1752
    %1754 = vrot.lane.b32.xlu0 %v1707, 24
    %v1755 = vpop.permute.xlu0 %1754
    %vm1772 = vcmask 261312
    %1773 = vst.msk [vmem:[#allocation5] sm:$0xff] %vm1772, %v1725
    %1774 = vst.msk [vmem:[#allocation5 + $0x8] sm:$0xff] %vm1772, %v1727
    %1775 = vst.msk [vmem:[#allocation5 + $0x10] sm:$0xff] %vm1772, %v1729
    %1776 = vst.msk [vmem:[#allocation5 + $0x18] sm:$0xff] %vm1772, %v1731
    %1777 = vst.msk [vmem:[#allocation5 + $0x20] sm:$0xff] %vm1772, %v1733
    %1778 = vst.msk [vmem:[#allocation5 + $0x28] sm:$0xff] %vm1772, %v1735
    %1779 = vst.msk [vmem:[#allocation5 + $0x30] sm:$0xff] %vm1772, %v1737
    %1780 = vst.msk [vmem:[#allocation5 + $0x38] sm:$0xff] %vm1772, %v1739
    %1781 = vst.msk [vmem:[#allocation5 + $0x40] sm:$0xff] %vm1772, %v1741
    %1782 = vst.msk [vmem:[#allocation5 + $0x48] sm:$0xff] %vm1772, %v1743
    %1783 = vst.msk [vmem:[#allocation5 + $0x50] sm:$0xff] %vm1772, %v1745
    %1784 = vst.msk [vmem:[#allocation5 + $0x58] sm:$0xff] %vm1772, %v1747
    %1785 = vst.msk [vmem:[#allocation5 + $0x60] sm:$0xff] %vm1772, %v1749
    %1786 = vst.msk [vmem:[#allocation5 + $0x68] sm:$0xff] %vm1772, %v1751
    %1787 = vst.msk [vmem:[#allocation5 + $0x70] sm:$0xff] %vm1772, %v1753
    %1788 = vst.msk [vmem:[#allocation5 + $0x78] sm:$0xff] %vm1772, %v1755
    %v1789 = vld [vmem:[%s1416 + $0x1] sm:$0xff]
    %v1790 = vld [vmem:[%s1416 + $0x11] sm:$0xff]
    %v1791 = vld [vmem:[%s1416 + $0x21] sm:$0xff]
    %v1792 = vld [vmem:[%s1416 + $0x31] sm:$0xff]
    %v1793 = vld [vmem:[%s1416 + $0x41] sm:$0xff]
    %v1794 = vld [vmem:[%s1416 + $0x51] sm:$0xff]
    %v1795 = vld [vmem:[%s1416 + $0x61] sm:$0xff]
    %v1796 = vld [vmem:[%s1416 + $0x71] sm:$0xff]
    %v1797 = vld [vmem:[%s1416 + $0xa1] sm:$0xff]
    %v1798 = vld [vmem:[%s1416 + $0xb1] sm:$0xff]
    %v1799 = vld [vmem:[%s1416 + $0xc1] sm:$0xff]
    %v1800 = vld [vmem:[%s1416 + $0xd1] sm:$0xff]
    %v1801 = vld [vmem:[%s1416 + $0xe1] sm:$0xff]
    %v1802 = vld [vmem:[%s1416 + $0xf1] sm:$0xff]
    %v1803 = vld [vmem:[%s1416 + $0x101] sm:$0xff]
    %v1804 = vld [vmem:[%s1416 + $0x111] sm:$0xff]
    %1821 = vrot.lane.b32.xlu0 %v1789, 32
    %v1822 = vpop.permute.xlu0 %1821
    %1823 = vrot.lane.b32.xlu0 %v1790, 32
    %v1824 = vpop.permute.xlu0 %1823
    %1825 = vrot.lane.b32.xlu0 %v1791, 32
    %v1826 = vpop.permute.xlu0 %1825
    %1827 = vrot.lane.b32.xlu0 %v1792, 32
    %v1828 = vpop.permute.xlu0 %1827
    %1829 = vrot.lane.b32.xlu0 %v1793, 32
    %v1830 = vpop.permute.xlu0 %1829
    %1831 = vrot.lane.b32.xlu0 %v1794, 32
    %v1832 = vpop.permute.xlu0 %1831
    %1833 = vrot.lane.b32.xlu0 %v1795, 32
    %v1834 = vpop.permute.xlu0 %1833
    %1835 = vrot.lane.b32.xlu0 %v1796, 32
    %v1836 = vpop.permute.xlu0 %1835
    %1837 = vrot.lane.b32.xlu0 %v1797, 32
    %v1838 = vpop.permute.xlu0 %1837
    %1839 = vrot.lane.b32.xlu0 %v1798, 32
    %v1840 = vpop.permute.xlu0 %1839
    %1841 = vrot.lane.b32.xlu0 %v1799, 32
    %v1842 = vpop.permute.xlu0 %1841
    %1843 = vrot.lane.b32.xlu0 %v1800, 32
    %v1844 = vpop.permute.xlu0 %1843
    %1845 = vrot.lane.b32.xlu0 %v1801, 32
    %v1846 = vpop.permute.xlu0 %1845
    %1847 = vrot.lane.b32.xlu0 %v1802, 32
    %v1848 = vpop.permute.xlu0 %1847
    %1849 = vrot.lane.b32.xlu0 %v1803, 32
    %v1850 = vpop.permute.xlu0 %1849
    %1851 = vrot.lane.b32.xlu0 %v1804, 32
    %v1852 = vpop.permute.xlu0 %1851
    %vm1869 = vcmask 326912
    %1870 = vst.msk [vmem:[#allocation5] sm:$0xff] %vm1869, %v1822
    %1871 = vst.msk [vmem:[#allocation5 + $0x8] sm:$0xff] %vm1869, %v1824
    %1872 = vst.msk [vmem:[#allocation5 + $0x10] sm:$0xff] %vm1869, %v1826
    %1873 = vst.msk [vmem:[#allocation5 + $0x18] sm:$0xff] %vm1869, %v1828
    %1874 = vst.msk [vmem:[#allocation5 + $0x20] sm:$0xff] %vm1869, %v1830
    %1875 = vst.msk [vmem:[#allocation5 + $0x28] sm:$0xff] %vm1869, %v1832
    %1876 = vst.msk [vmem:[#allocation5 + $0x30] sm:$0xff] %vm1869, %v1834
    %1877 = vst.msk [vmem:[#allocation5 + $0x38] sm:$0xff] %vm1869, %v1836
    %1878 = vst.msk [vmem:[#allocation5 + $0x40] sm:$0xff] %vm1869, %v1838
    %1879 = vst.msk [vmem:[#allocation5 + $0x48] sm:$0xff] %vm1869, %v1840
    %1880 = vst.msk [vmem:[#allocation5 + $0x50] sm:$0xff] %vm1869, %v1842
    %1881 = vst.msk [vmem:[#allocation5 + $0x58] sm:$0xff] %vm1869, %v1844
    %1882 = vst.msk [vmem:[#allocation5 + $0x60] sm:$0xff] %vm1869, %v1846
    %1883 = vst.msk [vmem:[#allocation5 + $0x68] sm:$0xff] %vm1869, %v1848
    %1884 = vst.msk [vmem:[#allocation5 + $0x70] sm:$0xff] %vm1869, %v1850
    %1885 = vst.msk [vmem:[#allocation5 + $0x78] sm:$0xff] %vm1869, %v1852
    %v1886 = vld [vmem:[%s1416 + $0x2] sm:$0xff]
    %v1887 = vld [vmem:[%s1416 + $0x12] sm:$0xff]
    %v1888 = vld [vmem:[%s1416 + $0x22] sm:$0xff]
    %v1889 = vld [vmem:[%s1416 + $0x32] sm:$0xff]
    %v1890 = vld [vmem:[%s1416 + $0x42] sm:$0xff]
    %v1891 = vld [vmem:[%s1416 + $0x52] sm:$0xff]
    %v1892 = vld [vmem:[%s1416 + $0x62] sm:$0xff]
    %v1893 = vld [vmem:[%s1416 + $0x72] sm:$0xff]
    %v1894 = vld [vmem:[%s1416 + $0xa2] sm:$0xff]
    %v1895 = vld [vmem:[%s1416 + $0xb2] sm:$0xff]
    %v1896 = vld [vmem:[%s1416 + $0xc2] sm:$0xff]
    %v1897 = vld [vmem:[%s1416 + $0xd2] sm:$0xff]
    %v1898 = vld [vmem:[%s1416 + $0xe2] sm:$0xff]
    %v1899 = vld [vmem:[%s1416 + $0xf2] sm:$0xff]
    %v1900 = vld [vmem:[%s1416 + $0x102] sm:$0xff]
    %v1901 = vld [vmem:[%s1416 + $0x112] sm:$0xff]
    %1918 = vrot.lane.b32.xlu0 %v1886, 40
    %v1919 = vpop.permute.xlu0 %1918
    %1920 = vrot.lane.b32.xlu0 %v1887, 40
    %v1921 = vpop.permute.xlu0 %1920
    %1922 = vrot.lane.b32.xlu0 %v1888, 40
    %v1923 = vpop.permute.xlu0 %1922
    %1924 = vrot.lane.b32.xlu0 %v1889, 40
    %v1925 = vpop.permute.xlu0 %1924
    %1926 = vrot.lane.b32.xlu0 %v1890, 40
    %v1927 = vpop.permute.xlu0 %1926
    %1928 = vrot.lane.b32.xlu0 %v1891, 40
    %v1929 = vpop.permute.xlu0 %1928
    %1930 = vrot.lane.b32.xlu0 %v1892, 40
    %v1931 = vpop.permute.xlu0 %1930
    %1932 = vrot.lane.b32.xlu0 %v1893, 40
    %v1933 = vpop.permute.xlu0 %1932
    %1934 = vrot.lane.b32.xlu0 %v1894, 40
    %v1935 = vpop.permute.xlu0 %1934
    %1936 = vrot.lane.b32.xlu0 %v1895, 40
    %v1937 = vpop.permute.xlu0 %1936
    %1938 = vrot.lane.b32.xlu0 %v1896, 40
    %v1939 = vpop.permute.xlu0 %1938
    %1940 = vrot.lane.b32.xlu0 %v1897, 40
    %v1941 = vpop.permute.xlu0 %1940
    %1942 = vrot.lane.b32.xlu0 %v1898, 40
    %v1943 = vpop.permute.xlu0 %1942
    %1944 = vrot.lane.b32.xlu0 %v1899, 40
    %v1945 = vpop.permute.xlu0 %1944
    %1946 = vrot.lane.b32.xlu0 %v1900, 40
    %v1947 = vpop.permute.xlu0 %1946
    %1948 = vrot.lane.b32.xlu0 %v1901, 40
    %v1949 = vpop.permute.xlu0 %1948
    %vm1966 = vcmask 392512
    %1967 = vst.msk [vmem:[#allocation5] sm:$0xff] %vm1966, %v1919
    %1968 = vst.msk [vmem:[#allocation5 + $0x8] sm:$0xff] %vm1966, %v1921
    %1969 = vst.msk [vmem:[#allocation5 + $0x10] sm:$0xff] %vm1966, %v1923
    %1970 = vst.msk [vmem:[#allocation5 + $0x18] sm:$0xff] %vm1966, %v1925
    %1971 = vst.msk [vmem:[#allocation5 + $0x20] sm:$0xff] %vm1966, %v1927
    %1972 = vst.msk [vmem:[#allocation5 + $0x28] sm:$0xff] %vm1966, %v1929
    %1973 = vst.msk [vmem:[#allocation5 + $0x30] sm:$0xff] %vm1966, %v1931
    %1974 = vst.msk [vmem:[#allocation5 + $0x38] sm:$0xff] %vm1966, %v1933
    %1975 = vst.msk [vmem:[#allocation5 + $0x40] sm:$0xff] %vm1966, %v1935
    %1976 = vst.msk [vmem:[#allocation5 + $0x48] sm:$0xff] %vm1966, %v1937
    %1977 = vst.msk [vmem:[#allocation5 + $0x50] sm:$0xff] %vm1966, %v1939
    %1978 = vst.msk [vmem:[#allocation5 + $0x58] sm:$0xff] %vm1966, %v1941
    %1979 = vst.msk [vmem:[#allocation5 + $0x60] sm:$0xff] %vm1966, %v1943
    %1980 = vst.msk [vmem:[#allocation5 + $0x68] sm:$0xff] %vm1966, %v1945
    %1981 = vst.msk [vmem:[#allocation5 + $0x70] sm:$0xff] %vm1966, %v1947
    %1982 = vst.msk [vmem:[#allocation5 + $0x78] sm:$0xff] %vm1966, %v1949
    %s1983 = scalar_lea.vmem [#allocation4], 32
    %v1984 = vld [vmem:[%s1983] sm:$0xff]
    %v1985 = vld [vmem:[%s1983 + $0x10] sm:$0xff]
    %v1986 = vld [vmem:[%s1983 + $0x20] sm:$0xff]
    %v1987 = vld [vmem:[%s1983 + $0x30] sm:$0xff]
    %v1988 = vld [vmem:[%s1983 + $0x40] sm:$0xff]
    %v1989 = vld [vmem:[%s1983 + $0x50] sm:$0xff]
    %v1990 = vld [vmem:[%s1983 + $0x60] sm:$0xff]
    %v1991 = vld [vmem:[%s1983 + $0x70] sm:$0xff]
    %v1992 = vld [vmem:[%s1983 + $0xa0] sm:$0xff]
    %v1993 = vld [vmem:[%s1983 + $0xb0] sm:$0xff]
    %v1994 = vld [vmem:[%s1983 + $0xc0] sm:$0xff]
    %v1995 = vld [vmem:[%s1983 + $0xd0] sm:$0xff]
    %v1996 = vld [vmem:[%s1983 + $0xe0] sm:$0xff]
    %v1997 = vld [vmem:[%s1983 + $0xf0] sm:$0xff]
    %v1998 = vld [vmem:[%s1983 + $0x100] sm:$0xff]
    %v1999 = vld [vmem:[%s1983 + $0x110] sm:$0xff]
    %2016 = vrot.lane.b32.xlu0 %v1984, 48
    %v2017 = vpop.permute.xlu0 %2016
    %2018 = vrot.lane.b32.xlu0 %v1985, 48
    %v2019 = vpop.permute.xlu0 %2018
    %2020 = vrot.lane.b32.xlu0 %v1986, 48
    %v2021 = vpop.permute.xlu0 %2020
    %2022 = vrot.lane.b32.xlu0 %v1987, 48
    %v2023 = vpop.permute.xlu0 %2022
    %2024 = vrot.lane.b32.xlu0 %v1988, 48
    %v2025 = vpop.permute.xlu0 %2024
    %2026 = vrot.lane.b32.xlu0 %v1989, 48
    %v2027 = vpop.permute.xlu0 %2026
    %2028 = vrot.lane.b32.xlu0 %v1990, 48
    %v2029 = vpop.permute.xlu0 %2028
    %2030 = vrot.lane.b32.xlu0 %v1991, 48
    %v2031 = vpop.permute.xlu0 %2030
    %2032 = vrot.lane.b32.xlu0 %v1992, 48
    %v2033 = vpop.permute.xlu0 %2032
    %2034 = vrot.lane.b32.xlu0 %v1993, 48
    %v2035 = vpop.permute.xlu0 %2034
    %2036 = vrot.lane.b32.xlu0 %v1994, 48
    %v2037 = vpop.permute.xlu0 %2036
    %2038 = vrot.lane.b32.xlu0 %v1995, 48
    %v2039 = vpop.permute.xlu0 %2038
    %2040 = vrot.lane.b32.xlu0 %v1996, 48
    %v2041 = vpop.permute.xlu0 %2040
    %2042 = vrot.lane.b32.xlu0 %v1997, 48
    %v2043 = vpop.permute.xlu0 %2042
    %2044 = vrot.lane.b32.xlu0 %v1998, 48
    %v2045 = vpop.permute.xlu0 %2044
    %2046 = vrot.lane.b32.xlu0 %v1999, 48
    %v2047 = vpop.permute.xlu0 %2046
    %vm2064 = vcmask 458112
    %2065 = vst.msk [vmem:[#allocation5] sm:$0xff] %vm2064, %v2017
    %2066 = vst.msk [vmem:[#allocation5 + $0x8] sm:$0xff] %vm2064, %v2019
    %2067 = vst.msk [vmem:[#allocation5 + $0x10] sm:$0xff] %vm2064, %v2021
    %2068 = vst.msk [vmem:[#allocation5 + $0x18] sm:$0xff] %vm2064, %v2023
    %2069 = vst.msk [vmem:[#allocation5 + $0x20] sm:$0xff] %vm2064, %v2025
    %2070 = vst.msk [vmem:[#allocation5 + $0x28] sm:$0xff] %vm2064, %v2027
    %2071 = vst.msk [vmem:[#allocation5 + $0x30] sm:$0xff] %vm2064, %v2029
    %2072 = vst.msk [vmem:[#allocation5 + $0x38] sm:$0xff] %vm2064, %v2031
    %2073 = vst.msk [vmem:[#allocation5 + $0x40] sm:$0xff] %vm2064, %v2033
    %2074 = vst.msk [vmem:[#allocation5 + $0x48] sm:$0xff] %vm2064, %v2035
    %2075 = vst.msk [vmem:[#allocation5 + $0x50] sm:$0xff] %vm2064, %v2037
    %2076 = vst.msk [vmem:[#allocation5 + $0x58] sm:$0xff] %vm2064, %v2039
    %2077 = vst.msk [vmem:[#allocation5 + $0x60] sm:$0xff] %vm2064, %v2041
    %2078 = vst.msk [vmem:[#allocation5 + $0x68] sm:$0xff] %vm2064, %v2043
    %2079 = vst.msk [vmem:[#allocation5 + $0x70] sm:$0xff] %vm2064, %v2045
    %2080 = vst.msk [vmem:[#allocation5 + $0x78] sm:$0xff] %vm2064, %v2047
    %v2081 = vld [vmem:[%s1983 + $0x1] sm:$0xff]
    %v2082 = vld [vmem:[%s1983 + $0x11] sm:$0xff]
    %v2083 = vld [vmem:[%s1983 + $0x21] sm:$0xff]
    %v2084 = vld [vmem:[%s1983 + $0x31] sm:$0xff]
    %v2085 = vld [vmem:[%s1983 + $0x41] sm:$0xff]
    %v2086 = vld [vmem:[%s1983 + $0x51] sm:$0xff]
    %v2087 = vld [vmem:[%s1983 + $0x61] sm:$0xff]
    %v2088 = vld [vmem:[%s1983 + $0x71] sm:$0xff]
    %v2089 = vld [vmem:[%s1983 + $0xa1] sm:$0xff]
    %v2090 = vld [vmem:[%s1983 + $0xb1] sm:$0xff]
    %v2091 = vld [vmem:[%s1983 + $0xc1] sm:$0xff]
    %v2092 = vld [vmem:[%s1983 + $0xd1] sm:$0xff]
    %v2093 = vld [vmem:[%s1983 + $0xe1] sm:$0xff]
    %v2094 = vld [vmem:[%s1983 + $0xf1] sm:$0xff]
    %v2095 = vld [vmem:[%s1983 + $0x101] sm:$0xff]
    %v2096 = vld [vmem:[%s1983 + $0x111] sm:$0xff]
    %2113 = vrot.lane.b32.xlu0 %v2081, 56
    %v2114 = vpop.permute.xlu0 %2113
    %2115 = vrot.lane.b32.xlu0 %v2082, 56
    %v2116 = vpop.permute.xlu0 %2115
    %2117 = vrot.lane.b32.xlu0 %v2083, 56
    %v2118 = vpop.permute.xlu0 %2117
    %2119 = vrot.lane.b32.xlu0 %v2084, 56
    %v2120 = vpop.permute.xlu0 %2119
    %2121 = vrot.lane.b32.xlu0 %v2085, 56
    %v2122 = vpop.permute.xlu0 %2121
    %2123 = vrot.lane.b32.xlu0 %v2086, 56
    %v2124 = vpop.permute.xlu0 %2123
    %2125 = vrot.lane.b32.xlu0 %v2087, 56
    %v2126 = vpop.permute.xlu0 %2125
    %2127 = vrot.lane.b32.xlu0 %v2088, 56
    %v2128 = vpop.permute.xlu0 %2127
    %2129 = vrot.lane.b32.xlu0 %v2089, 56
    %v2130 = vpop.permute.xlu0 %2129
    %2131 = vrot.lane.b32.xlu0 %v2090, 56
    %v2132 = vpop.permute.xlu0 %2131
    %2133 = vrot.lane.b32.xlu0 %v2091, 56
    %v2134 = vpop.permute.xlu0 %2133
    %2135 = vrot.lane.b32.xlu0 %v2092, 56
    %v2136 = vpop.permute.xlu0 %2135
    %2137 = vrot.lane.b32.xlu0 %v2093, 56
    %v2138 = vpop.permute.xlu0 %2137
    %2139 = vrot.lane.b32.xlu0 %v2094, 56
    %v2140 = vpop.permute.xlu0 %2139
    %2141 = vrot.lane.b32.xlu0 %v2095, 56
    %v2142 = vpop.permute.xlu0 %2141
    %2143 = vrot.lane.b32.xlu0 %v2096, 56
    %v2144 = vpop.permute.xlu0 %2143
    %vm2161 = vcmask 523712
    %2162 = vst.msk [vmem:[#allocation5] sm:$0xff] %vm2161, %v2114
    %2163 = vst.msk [vmem:[#allocation5 + $0x8] sm:$0xff] %vm2161, %v2116
    %2164 = vst.msk [vmem:[#allocation5 + $0x10] sm:$0xff] %vm2161, %v2118
    %2165 = vst.msk [vmem:[#allocation5 + $0x18] sm:$0xff] %vm2161, %v2120
    %2166 = vst.msk [vmem:[#allocation5 + $0x20] sm:$0xff] %vm2161, %v2122
    %2167 = vst.msk [vmem:[#allocation5 + $0x28] sm:$0xff] %vm2161, %v2124
    %2168 = vst.msk [vmem:[#allocation5 + $0x30] sm:$0xff] %vm2161, %v2126
    %2169 = vst.msk [vmem:[#allocation5 + $0x38] sm:$0xff] %vm2161, %v2128
    %2170 = vst.msk [vmem:[#allocation5 + $0x40] sm:$0xff] %vm2161, %v2130
    %2171 = vst.msk [vmem:[#allocation5 + $0x48] sm:$0xff] %vm2161, %v2132
    %2172 = vst.msk [vmem:[#allocation5 + $0x50] sm:$0xff] %vm2161, %v2134
    %2173 = vst.msk [vmem:[#allocation5 + $0x58] sm:$0xff] %vm2161, %v2136
    %2174 = vst.msk [vmem:[#allocation5 + $0x60] sm:$0xff] %vm2161, %v2138
    %2175 = vst.msk [vmem:[#allocation5 + $0x68] sm:$0xff] %vm2161, %v2140
    %2176 = vst.msk [vmem:[#allocation5 + $0x70] sm:$0xff] %vm2161, %v2142
    %2177 = vst.msk [vmem:[#allocation5 + $0x78] sm:$0xff] %vm2161, %v2144
    %v2178 = vld [vmem:[%s1983 + $0x2] sm:$0xff]
    %v2179 = vld [vmem:[%s1983 + $0x12] sm:$0xff]
    %v2180 = vld [vmem:[%s1983 + $0x22] sm:$0xff]
    %v2181 = vld [vmem:[%s1983 + $0x32] sm:$0xff]
    %v2182 = vld [vmem:[%s1983 + $0x42] sm:$0xff]
    %v2183 = vld [vmem:[%s1983 + $0x52] sm:$0xff]
    %v2184 = vld [vmem:[%s1983 + $0x62] sm:$0xff]
    %v2185 = vld [vmem:[%s1983 + $0x72] sm:$0xff]
    %v2186 = vld [vmem:[%s1983 + $0xa2] sm:$0xff]
    %v2187 = vld [vmem:[%s1983 + $0xb2] sm:$0xff]
    %v2188 = vld [vmem:[%s1983 + $0xc2] sm:$0xff]
    %v2189 = vld [vmem:[%s1983 + $0xd2] sm:$0xff]
    %v2190 = vld [vmem:[%s1983 + $0xe2] sm:$0xff]
    %v2191 = vld [vmem:[%s1983 + $0xf2] sm:$0xff]
    %v2192 = vld [vmem:[%s1983 + $0x102] sm:$0xff]
    %v2193 = vld [vmem:[%s1983 + $0x112] sm:$0xff]
    %2210 = vrot.lane.b32.xlu0 %v2178, 64
    %v2211 = vpop.permute.xlu0 %2210
    %2212 = vrot.lane.b32.xlu0 %v2179, 64
    %v2213 = vpop.permute.xlu0 %2212
    %2214 = vrot.lane.b32.xlu0 %v2180, 64
    %v2215 = vpop.permute.xlu0 %2214
    %2216 = vrot.lane.b32.xlu0 %v2181, 64
    %v2217 = vpop.permute.xlu0 %2216
    %2218 = vrot.lane.b32.xlu0 %v2182, 64
    %v2219 = vpop.permute.xlu0 %2218
    %2220 = vrot.lane.b32.xlu0 %v2183, 64
    %v2221 = vpop.permute.xlu0 %2220
    %2222 = vrot.lane.b32.xlu0 %v2184, 64
    %v2223 = vpop.permute.xlu0 %2222
    %2224 = vrot.lane.b32.xlu0 %v2185, 64
    %v2225 = vpop.permute.xlu0 %2224
    %2226 = vrot.lane.b32.xlu0 %v2186, 64
    %v2227 = vpop.permute.xlu0 %2226
    %2228 = vrot.lane.b32.xlu0 %v2187, 64
    %v2229 = vpop.permute.xlu0 %2228
    %2230 = vrot.lane.b32.xlu0 %v2188, 64
    %v2231 = vpop.permute.xlu0 %2230
    %2232 = vrot.lane.b32.xlu0 %v2189, 64
    %v2233 = vpop.permute.xlu0 %2232
    %2234 = vrot.lane.b32.xlu0 %v2190, 64
    %v2235 = vpop.permute.xlu0 %2234
    %2236 = vrot.lane.b32.xlu0 %v2191, 64
    %v2237 = vpop.permute.xlu0 %2236
    %2238 = vrot.lane.b32.xlu0 %v2192, 64
    %v2239 = vpop.permute.xlu0 %2238
    %2240 = vrot.lane.b32.xlu0 %v2193, 64
    %v2241 = vpop.permute.xlu0 %2240
    %vm2258 = vcmask 589312
    %2259 = vst.msk [vmem:[#allocation5] sm:$0xff] %vm2258, %v2211
    %2260 = vst.msk [vmem:[#allocation5 + $0x8] sm:$0xff] %vm2258, %v2213
    %2261 = vst.msk [vmem:[#allocation5 + $0x10] sm:$0xff] %vm2258, %v2215
    %2262 = vst.msk [vmem:[#allocation5 + $0x18] sm:$0xff] %vm2258, %v2217
    %2263 = vst.msk [vmem:[#allocation5 + $0x20] sm:$0xff] %vm2258, %v2219
    %2264 = vst.msk [vmem:[#allocation5 + $0x28] sm:$0xff] %vm2258, %v2221
    %2265 = vst.msk [vmem:[#allocation5 + $0x30] sm:$0xff] %vm2258, %v2223
    %2266 = vst.msk [vmem:[#allocation5 + $0x38] sm:$0xff] %vm2258, %v2225
    %2267 = vst.msk [vmem:[#allocation5 + $0x40] sm:$0xff] %vm2258, %v2227
    %2268 = vst.msk [vmem:[#allocation5 + $0x48] sm:$0xff] %vm2258, %v2229
    %2269 = vst.msk [vmem:[#allocation5 + $0x50] sm:$0xff] %vm2258, %v2231
    %2270 = vst.msk [vmem:[#allocation5 + $0x58] sm:$0xff] %vm2258, %v2233
    %2271 = vst.msk [vmem:[#allocation5 + $0x60] sm:$0xff] %vm2258, %v2235
    %2272 = vst.msk [vmem:[#allocation5 + $0x68] sm:$0xff] %vm2258, %v2237
    %2273 = vst.msk [vmem:[#allocation5 + $0x70] sm:$0xff] %vm2258, %v2239
    %2274 = vst.msk [vmem:[#allocation5 + $0x78] sm:$0xff] %vm2258, %v2241
    %v2275 = vld [vmem:[#allocation5] sm:$0xff]
    %v2276 = vld [vmem:[#allocation5 + $0x8] sm:$0xff]
    %v2277 = vld [vmem:[#allocation5 + $0x10] sm:$0xff]
    %v2278 = vld [vmem:[#allocation5 + $0x18] sm:$0xff]
    %v2279 = vld [vmem:[#allocation5 + $0x20] sm:$0xff]
    %v2280 = vld [vmem:[#allocation5 + $0x28] sm:$0xff]
    %v2281 = vld [vmem:[#allocation5 + $0x30] sm:$0xff]
    %v2282 = vld [vmem:[#allocation5 + $0x38] sm:$0xff]
    %v2283 = vld [vmem:[#allocation5 + $0x40] sm:$0xff]
    %v2284 = vld [vmem:[#allocation5 + $0x48] sm:$0xff]
    %v2285 = vld [vmem:[#allocation5 + $0x50] sm:$0xff]
    %v2286 = vld [vmem:[#allocation5 + $0x58] sm:$0xff]
    %v2287 = vld [vmem:[#allocation5 + $0x60] sm:$0xff]
    %v2288 = vld [vmem:[#allocation5 + $0x68] sm:$0xff]
    %v2289 = vld [vmem:[#allocation5 + $0x70] sm:$0xff]
    %v2290 = vld [vmem:[#allocation5 + $0x78] sm:$0xff]
    %v2291 = vpack.c.bf16 %v2276, %v2275
    %v2292 = vpack.c.bf16 %v2278, %v2277
    %v2293 = vpack.c.bf16 %v2280, %v2279
    %v2294 = vpack.c.bf16 %v2282, %v2281
    %v2295 = vpack.c.bf16 %v2284, %v2283
    %v2296 = vpack.c.bf16 %v2286, %v2285
    %v2297 = vpack.c.bf16 %v2288, %v2287
    %v2298 = vpack.c.bf16 %v2290, %v2289
    %v2299 = vld [vmem:[%s4] sm:$0xf]
    %v2300 = vld [vmem:[%s4 + $0x4] sm:$0xf]
    %v2301 = vld [vmem:[%s4 + $0x8] sm:$0xf]
    %v2302 = vld [vmem:[%s4 + $0xc] sm:$0xf]
    %v2303 = vld [vmem:[%s4 + $0x10] sm:$0xf]
    %v2304 = vld [vmem:[%s4 + $0x14] sm:$0xf]
    %v2305 = vld [vmem:[%s4 + $0x18] sm:$0xf]
    %v2306 = vld [vmem:[%s4 + $0x1c] sm:$0xf]
    %v2307 = vld [vmem:[%s4 + $0x20] sm:$0xf]
    %v2317 = vunpack.c.l.b16 %v2299
    %v2318 = vunpack.c.l.b16 %v2300
    %v2319 = vunpack.c.l.b16 %v2301
    %v2320 = vunpack.c.l.b16 %v2302
    %v2321 = vunpack.c.l.b16 %v2303
    %v2322 = vunpack.c.l.b16 %v2304
    %v2323 = vunpack.c.l.b16 %v2305
    %v2324 = vunpack.c.l.b16 %v2306
    %v2325 = vunpack.c.l.b16 %v2307
    %v2326 = vpack.c.b16 %v2318, %v2317
    %v2327 = vpack.c.b16 %v2320, %v2319
    %v2328 = vpack.c.b16 %v2322, %v2321
    %v2329 = vpack.c.b16 %v2324, %v2323
    %v2330 = vpack.c.b16 %v2325, %v2325
    %vm2335 = vcmask 588800
    %v2337 = vsel %vm2335, %v2291, 0
    %v2340 = vsel %vm2335, %v2292, 0
    %v2343 = vsel %vm2335, %v2293, 0
    %v2346 = vsel %vm2335, %v2294, 0
    %v2349 = vsel %vm2335, %v2295, 0
    %v2352 = vsel %vm2335, %v2296, 0
    %v2355 = vsel %vm2335, %v2297, 0
    %v2358 = vsel %vm2335, %v2298, 0
    %vm2360 = vcmask 1043456
    %v2362 = vsel %vm2360, %v2330, 0
    %2364 = vmatprep.subr.bf16.mxu0 0
    %2365 = vmatpush1.bf16.msra.mxu0 0
    %2366 = vmatprep.subr.bf16.mxu0 0
    %2367 = vmatpush1.bf16.msra.mxu0 0
    %2368 = vmatprep.subr.bf16.mxu0 0
    %2369 = vmatpush1.bf16.msra.mxu0 0
    %2370 = vmatprep.subr.bf16.mxu0 0
    %2371 = vmatpush1.bf16.msra.mxu0 %v2362
    %2372 = vmatprep.subr.bf16.mxu0 0
    %2373 = vmatpush1.bf16.msra.mxu0 %v2329
    %2374 = vmatprep.subr.bf16.mxu0 0
    %2375 = vmatpush1.bf16.msra.mxu0 %v2328
    %2376 = vmatprep.subr.bf16.mxu0 0
    %2377 = vmatpush1.bf16.msra.mxu0 %v2327
    %2378 = vmatprep.subr.bf16.mxu0 0
    %2379 = vmatpush1.bf16.msra.mxu0 %v2326
    %2380 = vmatprep.subr.bf16.mxu0 0
    %2381 = vmatpush2.bf16.msra.mxu0 0
    %2382 = vmatprep.subr.bf16.mxu0 0
    %2383 = vmatpush2.bf16.msra.mxu0 0
    %2384 = vmatprep.subr.bf16.mxu0 0
    %2385 = vmatpush2.bf16.msra.mxu0 0
    %2386 = vmatprep.subr.bf16.mxu0 0
    %2387 = vmatpush2.bf16.msra.mxu0 0
    %2388 = vmatprep.subr.bf16.mxu0 0
    %2389 = vmatpush2.bf16.msra.mxu0 0
    %2390 = vmatprep.subr.bf16.mxu0 0
    %2391 = vmatpush2.bf16.msra.mxu0 0
    %2392 = vmatprep.subr.bf16.mxu0 0
    %2393 = vmatpush2.bf16.msra.mxu0 0
    %2394 = vmatprep.subr.bf16.mxu0 0
    %2395 = vmatpush2.bf16.msra.mxu0 0
    %2396 = vmatprep.mubr.bf16.mxu0 0
    %2397 = vmatmul.mubr.bf16.gmra.mxu0 %v2337
    %v2398 = vpop.f32.mrf.mxu0
    %v2399 = vadd.f32 0.0, %v2398
    %v2400 = vpop.f32.mrf.mxu0
    %v2401 = vpop.f32.mrf.mxu0
    %v2402 = vadd.f32 0.0, %v2401
    %v2403 = vpop.f32.mrf.mxu0
    %2404 = vmatprep.mubr.bf16.mxu0 0
    %2405 = vmatmul.mubr.bf16.gmra.mxu0 %v2340
    %v2406 = vpop.f32.mrf.mxu0
    %v2407 = vadd.f32 0.0, %v2406
    %v2408 = vpop.f32.mrf.mxu0
    %v2409 = vpop.f32.mrf.mxu0
    %v2410 = vadd.f32 0.0, %v2409
    %v2411 = vpop.f32.mrf.mxu0
    %2412 = vmatprep.mubr.bf16.mxu0 0
    %2413 = vmatmul.mubr.bf16.gmra.mxu0 %v2343
    %v2414 = vpop.f32.mrf.mxu0
    %v2415 = vadd.f32 0.0, %v2414
    %v2416 = vpop.f32.mrf.mxu0
    %v2417 = vpop.f32.mrf.mxu0
    %v2418 = vadd.f32 0.0, %v2417
    %v2419 = vpop.f32.mrf.mxu0
    %2420 = vmatprep.mubr.bf16.mxu0 0
    %2421 = vmatmul.mubr.bf16.gmra.mxu0 %v2346
    %v2422 = vpop.f32.mrf.mxu0
    %v2423 = vadd.f32 0.0, %v2422
    %v2424 = vpop.f32.mrf.mxu0
    %v2425 = vpop.f32.mrf.mxu0
    %v2426 = vadd.f32 0.0, %v2425
    %v2427 = vpop.f32.mrf.mxu0
    %2428 = vmatprep.mubr.bf16.mxu0 0
    %2429 = vmatmul.mubr.bf16.gmra.mxu0 %v2349
    %v2430 = vpop.f32.mrf.mxu0
    %v2431 = vadd.f32 0.0, %v2430
    %v2432 = vpop.f32.mrf.mxu0
    %v2433 = vpop.f32.mrf.mxu0
    %v2434 = vadd.f32 0.0, %v2433
    %v2435 = vpop.f32.mrf.mxu0
    %2436 = vmatprep.mubr.bf16.mxu0 0
    %2437 = vmatmul.mubr.bf16.gmra.mxu0 %v2352
    %v2438 = vpop.f32.mrf.mxu0
    %v2439 = vadd.f32 0.0, %v2438
    %v2440 = vpop.f32.mrf.mxu0
    %v2441 = vpop.f32.mrf.mxu0
    %v2442 = vadd.f32 0.0, %v2441
    %v2443 = vpop.f32.mrf.mxu0
    %2444 = vmatprep.mubr.bf16.mxu0 0
    %2445 = vmatmul.mubr.bf16.gmra.mxu0 %v2355
    %v2446 = vpop.f32.mrf.mxu0
    %v2447 = vadd.f32 0.0, %v2446
    %v2448 = vpop.f32.mrf.mxu0
    %v2449 = vpop.f32.mrf.mxu0
    %v2450 = vadd.f32 0.0, %v2449
    %v2451 = vpop.f32.mrf.mxu0
    %2452 = vmatprep.mubr.bf16.mxu0 0
    %2453 = vmatmul.mubr.bf16.gmra.mxu0 %v2358
    %v2454 = vpop.f32.mrf.mxu0
    %v2455 = vadd.f32 0.0, %v2454
    %v2456 = vpop.f32.mrf.mxu0
    %v2457 = vpop.f32.mrf.mxu0
    %v2458 = vadd.f32 0.0, %v2457
    %v2459 = vpop.f32.mrf.mxu0
    %2460 = vdwg.mxu0
    %v2461 = vld [vmem:[%s5] sm:$0x1]
    %v2462 = vld [vmem:[%s6] sm:$0x1]
    %v2463 = vsel %vm1246, %v2399, 0.0
    %v2464 = vsel %vm1246, %v2402, 0.0
    %v2465 = vadd.f32 %v2463, %v2464
    %v2466 = vsel %vm1246, %v2407, 0.0
    %v2467 = vadd.f32 %v2465, %v2466
    %v2468 = vsel %vm1246, %v2410, 0.0
    %v2469 = vadd.f32 %v2467, %v2468
    %v2470 = vsel %vm1246, %v2415, 0.0
    %v2471 = vadd.f32 %v2469, %v2470
    %v2472 = vsel %vm1246, %v2418, 0.0
    %v2473 = vadd.f32 %v2471, %v2472
    %v2474 = vsel %vm1246, %v2423, 0.0
    %v2475 = vadd.f32 %v2473, %v2474
    %v2476 = vsel %vm1246, %v2426, 0.0
    %v2477 = vadd.f32 %v2475, %v2476
    %v2478 = vsel %vm1246, %v2431, 0.0
    %v2479 = vadd.f32 %v2477, %v2478
    %v2480 = vsel %vm1246, %v2434, 0.0
    %v2481 = vadd.f32 %v2479, %v2480
    %v2482 = vsel %vm1246, %v2439, 0.0
    %v2483 = vadd.f32 %v2481, %v2482
    %v2484 = vsel %vm1246, %v2442, 0.0
    %v2485 = vadd.f32 %v2483, %v2484
    %v2486 = vsel %vm1246, %v2447, 0.0
    %v2487 = vadd.f32 %v2485, %v2486
    %v2488 = vsel %vm1246, %v2450, 0.0
    %v2489 = vadd.f32 %v2487, %v2488
    %v2490 = vsel %vm1246, %v2455, 0.0
    %v2491 = vadd.f32 %v2489, %v2490
    %v2492 = vsel %vm1246, %v2458, 0.0
    %v2493 = vadd.f32 %v2491, %v2492
    %v2494 = vrot.slane %v2493, 4
    %v2495 = vadd.f32 %v2493, %v2494
    %v2496 = vrot.slane %v2495, 2
    %v2497 = vadd.f32 %v2495, %v2496
    %v2498 = vrot.slane %v2497, 1
    %v2499 = vadd.f32 %v2497, %v2498
    %v2500 = vmul.f32 %v2499, 0.0078125
    %v2501 = vmul.f32 %v2399, %v2399
    %v2502 = vmul.f32 %v2402, %v2402
    %v2503 = vmul.f32 %v2407, %v2407
    %v2504 = vmul.f32 %v2410, %v2410
    %v2505 = vmul.f32 %v2415, %v2415
    %v2506 = vmul.f32 %v2418, %v2418
    %v2507 = vmul.f32 %v2423, %v2423
    %v2508 = vmul.f32 %v2426, %v2426
    %v2509 = vmul.f32 %v2431, %v2431
    %v2510 = vmul.f32 %v2434, %v2434
    %v2511 = vmul.f32 %v2439, %v2439
    %v2512 = vmul.f32 %v2442, %v2442
    %v2513 = vmul.f32 %v2447, %v2447
    %v2514 = vmul.f32 %v2450, %v2450
    %v2515 = vmul.f32 %v2455, %v2455
    %v2516 = vmul.f32 %v2458, %v2458
    %v2517 = vsel %vm1246, %v2501, 0.0
    %v2518 = vsel %vm1246, %v2502, 0.0
    %v2519 = vadd.f32 %v2517, %v2518
    %v2520 = vsel %vm1246, %v2503, 0.0
    %v2521 = vadd.f32 %v2519, %v2520
    %v2522 = vsel %vm1246, %v2504, 0.0
    %v2523 = vadd.f32 %v2521, %v2522
    %v2524 = vsel %vm1246, %v2505, 0.0
    %v2525 = vadd.f32 %v2523, %v2524
    %v2526 = vsel %vm1246, %v2506, 0.0
    %v2527 = vadd.f32 %v2525, %v2526
    %v2528 = vsel %vm1246, %v2507, 0.0
    %v2529 = vadd.f32 %v2527, %v2528
    %v2530 = vsel %vm1246, %v2508, 0.0
    %v2531 = vadd.f32 %v2529, %v2530
    %v2532 = vsel %vm1246, %v2509, 0.0
    %v2533 = vadd.f32 %v2531, %v2532
    %v2534 = vsel %vm1246, %v2510, 0.0
    %v2535 = vadd.f32 %v2533, %v2534
    %v2536 = vsel %vm1246, %v2511, 0.0
    %v2537 = vadd.f32 %v2535, %v2536
    %v2538 = vsel %vm1246, %v2512, 0.0
    %v2539 = vadd.f32 %v2537, %v2538
    %v2540 = vsel %vm1246, %v2513, 0.0
    %v2541 = vadd.f32 %v2539, %v2540
    %v2542 = vsel %vm1246, %v2514, 0.0
    %v2543 = vadd.f32 %v2541, %v2542
    %v2544 = vsel %vm1246, %v2515, 0.0
    %v2545 = vadd.f32 %v2543, %v2544
    %v2546 = vsel %vm1246, %v2516, 0.0
    %v2547 = vadd.f32 %v2545, %v2546
    %v2548 = vrot.slane %v2547, 4
    %v2549 = vadd.f32 %v2547, %v2548
    %v2550 = vrot.slane %v2549, 2
    %v2551 = vadd.f32 %v2549, %v2550
    %v2552 = vrot.slane %v2551, 1
    %v2553 = vadd.f32 %v2551, %v2552
    %v2554 = vmul.f32 %v2553, 0.0078125
    %v2555 = vmul.f32 %v2500, %v2500
    %v2556 = vsub.f32 %v2554, %v2555
    %v2557 = vadd.f32 %v2556, 1e-05
    %v2558 = vrsqrt.pop %v2557
    %v2559 = vmul.f32 %v2461, %v2558
    %v2560 = vmul.f32 %v2500, %v2559
    %v2561 = vsub.f32 %v2462, %v2560
    %v2563 = vlaneseq
    %v2564 = vshrl.u32 %v2563, 7
    %v2565 = vsub.s32 0, %v2564
    %v2566 = vrot.slane %v2559, %v2565
    %v2568 = vmul.f32 %v2399, %v2566
    %v2569 = vmul.f32 %v2402, %v2566
    %v2570 = vmul.f32 %v2407, %v2566
    %v2571 = vmul.f32 %v2410, %v2566
    %v2572 = vmul.f32 %v2415, %v2566
    %v2573 = vmul.f32 %v2418, %v2566
    %v2574 = vmul.f32 %v2423, %v2566
    %v2575 = vmul.f32 %v2426, %v2566
    %v2576 = vmul.f32 %v2431, %v2566
    %v2577 = vmul.f32 %v2434, %v2566
    %v2578 = vmul.f32 %v2439, %v2566
    %v2579 = vmul.f32 %v2442, %v2566
    %v2580 = vmul.f32 %v2447, %v2566
    %v2581 = vmul.f32 %v2450, %v2566
    %v2582 = vmul.f32 %v2455, %v2566
    %v2583 = vmul.f32 %v2458, %v2566
    %v2585 = vlaneseq
    %v2586 = vshrl.u32 %v2585, 7
    %v2587 = vsub.s32 0, %v2586
    %v2588 = vrot.slane %v2561, %v2587
    %v2590 = vadd.f32 %v2568, %v2588
    %v2591 = vadd.f32 %v2569, %v2588
    %v2592 = vadd.f32 %v2570, %v2588
    %v2593 = vadd.f32 %v2571, %v2588
    %v2594 = vadd.f32 %v2572, %v2588
    %v2595 = vadd.f32 %v2573, %v2588
    %v2596 = vadd.f32 %v2574, %v2588
    %v2597 = vadd.f32 %v2575, %v2588
    %v2598 = vadd.f32 %v2576, %v2588
    %v2599 = vadd.f32 %v2577, %v2588
    %v2600 = vadd.f32 %v2578, %v2588
    %v2601 = vadd.f32 %v2579, %v2588
    %v2602 = vadd.f32 %v2580, %v2588
    %v2603 = vadd.f32 %v2581, %v2588
    %v2604 = vadd.f32 %v2582, %v2588
    %v2605 = vadd.f32 %v2583, %v2588
    %v2606 = vmax.f32 %v2590, 0.0
    %v2607 = vmax.f32 %v2591, 0.0
    %v2608 = vmax.f32 %v2592, 0.0
    %v2609 = vmax.f32 %v2593, 0.0
    %v2610 = vmax.f32 %v2594, 0.0
    %v2611 = vmax.f32 %v2595, 0.0
    %v2612 = vmax.f32 %v2596, 0.0
    %v2613 = vmax.f32 %v2597, 0.0
    %v2614 = vmax.f32 %v2598, 0.0
    %v2615 = vmax.f32 %v2599, 0.0
    %v2616 = vmax.f32 %v2600, 0.0
    %v2617 = vmax.f32 %v2601, 0.0
    %v2618 = vmax.f32 %v2602, 0.0
    %v2619 = vmax.f32 %v2603, 0.0
    %v2620 = vmax.f32 %v2604, 0.0
    %v2621 = vmax.f32 %v2605, 0.0
    %2622 = vxpose.xlu0.b32.start [1/16] %v2606, 128
    %2623 = vxpose.xlu0.b32.cont [2/16] %v2607, 128
    %2624 = vxpose.xlu0.b32.cont [3/16] %v2608, 128
    %2625 = vxpose.xlu0.b32.cont [4/16] %v2609, 128
    %2626 = vxpose.xlu0.b32.cont [5/16] %v2610, 128
    %2627 = vxpose.xlu0.b32.cont [6/16] %v2611, 128
    %2628 = vxpose.xlu0.b32.cont [7/16] %v2612, 128
    %2629 = vxpose.xlu0.b32.cont [8/16] %v2613, 128
    %2630 = vxpose.xlu0.b32.cont [9/16] %v2614, 128
    %2631 = vxpose.xlu0.b32.cont [10/16] %v2615, 128
    %2632 = vxpose.xlu0.b32.cont [11/16] %v2616, 128
    %2633 = vxpose.xlu0.b32.cont [12/16] %v2617, 128
    %2634 = vxpose.xlu0.b32.cont [13/16] %v2618, 128
    %2635 = vxpose.xlu0.b32.cont [14/16] %v2619, 128
    %2636 = vxpose.xlu0.b32.cont [15/16] %v2620, 128
    %2637 = vxpose.xlu0.b32.end [16/16] %v2621, 128
    %v2638 = vpop.trf.xlu0
    %v2639 = vpop.trf.xlu0
    %v2640 = vpop.trf.xlu0
    %v2641 = vpop.trf.xlu0
    %v2642 = vpop.trf.xlu0
    %v2643 = vpop.trf.xlu0
    %v2644 = vpop.trf.xlu0
    %v2645 = vpop.trf.xlu0
    %v2646 = vpop.trf.xlu0
    %v2647 = vpop.trf.xlu0
    %v2648 = vpop.trf.xlu0
    %v2649 = vpop.trf.xlu0
    %v2650 = vpop.trf.xlu0
    %v2651 = vpop.trf.xlu0
    %v2652 = vpop.trf.xlu0
    %v2653 = vpop.trf.xlu0
    %2654 = vst [vmem:[#allocation6] sm:$0xff] %v2638
    // Predicated region
    $region30: #{tpu_custom_call.1} parent=1 // pred_check
      _
    $region31: #{tpu_custom_call.1} parent=1 // pred_check_branch
      %2656 = sbr.rel (0) target = $region33
    $region32: #{tpu_custom_call.1} parent=1 // pred_region
      %s2658 = ssub.s32 128, 128
      %2659 = vsyncadd [#allocation7], %s2658
      %s2661 = sshll.u32 [#allocation6], 4
      %s2662 = int_to_ptr.vmem [resolvable:$true] %s2661
      %2664 = dma.vmem_to_hbm [thread:$0]  %s2662, 128, %s7, [#allocation7]
    $region33: #{tpu_custom_call.1} parent=1 // pred_fallthru
      _
    // Predicated region
    $region34: #{tpu_custom_call.1} parent=1 // pred_check
      _
    $region35: #{tpu_custom_call.1} parent=1 // pred_check_branch
      %2666 = sbr.rel (0) target = $region37
    $region36: #{tpu_custom_call.1} parent=1 // pred_region
      %2667 = dma.done [#allocation7], 128
    $region37: #{tpu_custom_call.1} parent=1 // pred_fallthru
      _
    %2668 = vsyncpa [#allocation7], 1

</llo_original>
